<compile_context>
chip_gen: v6e
topology: v6e:2x2x1
jax: 0.10.0
libtpu: 0.0.40
codegen_flags: <defaults>
</compile_context>

<pallas_src>
import math
import numpy as np
import jax
import jax.numpy as jnp
from jax import lax
from jax.experimental import pallas as pl
from jax.experimental.pallas import tpu as pltpu

# ---- configuration (small shapes consistent with the module defaults) ------
NUM_OBJ = 5
NUM_ATTR = 5
INPUT_DIM = 1            # use_answers=True  ->  input_dim = 1
HIDDEN = 32              # hidden_dim
LATENT = 16              # latent_dim
BATCH = 2
EPS = 1e-5               # GroupNorm eps (PyTorch default)
NSP = NUM_ATTR           # spatial positions left after conv_2 (W collapsed to 1)
H2 = HIDDEN // 2


# ----------------------------- in-kernel math --------------------------------
def _gelu(x):
    # tanh-approximate GELU: transcendental work goes to the EUP slot instead
    # of ~15 VALU ops of the erf polynomial. Deviates <~1e-3 from exact GELU.
    c0 = 0.7978845608028654   # sqrt(2/pi)
    c1 = 0.044715
    return 0.5 * x * (1.0 + jnp.tanh(c0 * (x + c1 * x * x * x)))


def _gn(x, g_ref, b_ref):
    # GroupNorm(1, C): per-sample normalization over all (flattened) features.
    # One-pass variance: the two cross-lane reductions are independent.
    mu = jnp.mean(x, axis=-1, keepdims=True)
    ex2 = jnp.mean(x * x, axis=-1, keepdims=True)
    var = jnp.maximum(ex2 - mu * mu, 0.0)
    return (x - mu) * lax.rsqrt(var + EPS) * g_ref[...] + b_ref[...]


def _mm(a, w_ref):
    # bf16 x bf16 MXU matmul with f32 accumulation (weights stored bf16).
    return jnp.dot(a.astype(jnp.bfloat16), w_ref[...],
                   preferred_element_type=jnp.float32)


# ----------------------------- the Pallas kernel ------------------------------
def s_convae_kernel(
        ans_ref,
        m_i1, g_i1, b_i1, m_i2, g_i2, b_i2,
        m_1a, g_1a, b_1a, m_1b, g_1b, b_1b,
        m_2, g_2, b_2,
        m_3a, g_3a, b_3a, m_3b, g_3b, b_3b,
        m_4a, g_4a, b_4a, m_4b, g_4b, b_4b,
        m_out, bias_out,
        w1, bb1, g_d1, be_d1,
        w2, bb2, g_d2, be_d2,
        w3, bb3, g_d3, be_d3,
        w4, bb4,
        out_ref):

    def double_conv(x, ma, ga, ba, mb, gb, bb):
        # DoubleConv_wK body: Conv -> GN -> GELU -> Conv -> GN (no bias convs)
        h = _gelu(_gn(_mm(x, ma), ga, ba))
        return _gn(_mm(h, mb), gb, bb)

    # x = x_pos + x_neg + x_unasked; flattened x_in (NCHW with C=1) -> (TB, 25)
    x = ans_ref[0] + ans_ref[1] + ans_ref[2]

    # inc: DoubleConv(1 -> H/2, k=(1,5), p=(0,2)), residual.
    # The residual input is the single channel broadcast over H/2 channels:
    # a lane concatenation instead of a matmul against a tiled identity.
    h = double_conv(x, m_i1, g_i1, b_i1, m_i2, g_i2, b_i2)
    x_bcast = jnp.concatenate([x] * H2, axis=-1)          # (TB, H2*25)
    x1 = _gelu(x_bcast + h)

    # conv_1: DoubleConv(H/2 -> H/2, k=(1,3), p=(0,1)), residual
    x2 = _gelu(x1 + double_conv(x1, m_1a, g_1a, b_1a, m_1b, g_1b, b_1b))

    # conv_2: Conv(H/2 -> H, k=(1,num_obj), p=0) + GroupNorm + GELU (W: 5 -> 1)
    x3 = _gelu(_gn(_mm(x2, m_2), g_2, b_2))

    # conv_3: DoubleConv(H -> H, k=(5,1), p=(2,0)), residual
    x4 = _gelu(x3 + double_conv(x3, m_3a, g_3a, b_3a, m_3b, g_3b, b_3b))

    # conv_4: DoubleConv(H -> H, k=(5,1), p=(2,0)), no residual
    x5 = double_conv(x4, m_4a, g_4a, b_4a, m_4b, g_4b, b_4b)

    # conv_out (1x1 conv with bias) fused with AdaptiveMaxPool2d((1,1)):
    # ONE matmul producing all 5 positions side-by-side (TB, 5*LATENT), then an
    # elementwise max over the 5 static LATENT-wide column groups (cheap VPU).
    zall = _mm(x5, m_out) + bias_out[...]
    z = zall[:, 0:LATENT]
    for pos in range(1, NSP):
        z = jnp.maximum(z, zall[:, pos * LATENT:(pos + 1) * LATENT])

    # decoder MLP: (Linear + GroupNorm(1,.) + GELU) x3, then final Linear
    d = _gelu(_gn(_mm(z, w1) + bb1[...], g_d1, be_d1))
    d = _gelu(_gn(_mm(d, w2) + bb2[...], g_d2, be_d2))
    d = _gelu(_gn(_mm(d, w3) + bb3[...], g_d3, be_d3))
    dec = _mm(d, w4) + bb4[...]

    # pack the three narrow results into one lane-contiguous output buffer
    out_ref[...] = jnp.concatenate([x, dec, z], axis=-1)   # (TB, 25+25+16)


# ------------------------- host-side glue (params) ----------------------------
def _conv_operator(w, in_chw, padding):
    """Exact dense operator of a stride-1 Conv2d (no bias): maps the NCHW-
    flattened input (Cin*Hin*Win) to the NCHW-flattened output."""
    w = np.asarray(w, np.float32)
    cout, cin, kh, kw = w.shape
    cin_, hin, win = in_chw
    assert cin == cin_
    ph, pw = padding
    hout = hin + 2 * ph - kh + 1
    wout = win + 2 * pw - kw + 1
    m = np.zeros((cin * hin * win, cout * hout * wout), np.float32)
    for co in range(cout):
        for ci in range(cin):
            for ho in range(hout):
                for wo in range(wout):
                    for dkh in range(kh):
                        hi = ho + dkh - ph
                        if not (0 <= hi < hin):
                            continue
                        for dkw in range(kw):
                            wi = wo + dkw - pw
                            if not (0 <= wi < win):
                                continue
                            m[ci * hin * win + hi * win + wi,
                              co * hout * wout + ho * wout + wo] += w[co, ci, dkh, dkw]
    return m, (cout, hout, wout)


def init_params(key):
    H = HIDDEN
    ki = iter(jax.random.split(key, 64))

    def w(shape):
        fan_in = int(np.prod(shape[1:]))
        return jax.random.normal(next(ki), shape, jnp.float32) / np.sqrt(fan_in)

    def gnp(c):
        g = 1.0 + 0.1 * jax.random.normal(next(ki), (c,), jnp.float32)
        b = 0.1 * jax.random.normal(next(ki), (c,), jnp.float32)
        return g, b

    def bias(c):
        return 0.1 * jax.random.normal(next(ki), (c,), jnp.float32)

    p = {}
    p['w_inc1'] = w((H2, INPUT_DIM, 1, 5)); p['g_inc1'], p['be_inc1'] = gnp(H2)
    p['w_inc2'] = w((H2, H2, 1, 5));        p['g_inc2'], p['be_inc2'] = gnp(H2)
    p['w_c1a'] = w((H2, H2, 1, 3));         p['g_c1a'], p['be_c1a'] = gnp(H2)
    p['w_c1b'] = w((H2, H2, 1, 3));         p['g_c1b'], p['be_c1b'] = gnp(H2)
    p['w_c2'] = w((H, H2, 1, NUM_OBJ));     p['g_c2'], p['be_c2'] = gnp(H)
    p['w_c3a'] = w((H, H, 5, 1));           p['g_c3a'], p['be_c3a'] = gnp(H)
    p['w_c3b'] = w((H, H, 5, 1));           p['g_c3b'], p['be_c3b'] = gnp(H)
    p['w_c4a'] = w((H, H, 5, 1));           p['g_c4a'], p['be_c4a'] = gnp(H)
    p['w_c4b'] = w((H, H, 5, 1));           p['g_c4b'], p['be_c4b'] = gnp(H)
    p['w_out'] = w((LATENT, H, 1, 1));      p['b_out'] = bias(LATENT)
    p['W1'] = w((H, LATENT)); p['b1'] = bias(H); p['g_d1'], p['be_d1'] = gnp(H)
    p['W2'] = w((H, H));      p['b2'] = bias(H); p['g_d2'], p['be_d2'] = gnp(H)
    p['W3'] = w((H, H));      p['b3'] = bias(H); p['g_d3'], p['be_d3'] = gnp(H)
    p['W4'] = w((NUM_ATTR * NUM_OBJ * INPUT_DIM, H))
    p['b4'] = bias(NUM_ATTR * NUM_OBJ * INPUT_DIM)
    return p


def build_kernel_inputs(p):
    A, O, H = NUM_ATTR, NUM_OBJ, HIDDEN
    hw1 = A * O

    def rep(v, n):  # flatten a per-channel GN affine over a spatial extent n
        return np.repeat(np.asarray(v, np.float32), n)[None, :]

    m_i1, s = _conv_operator(p['w_inc1'], (INPUT_DIM, A, O), (0, 2))
    m_i2, s = _conv_operator(p['w_inc2'], s, (0, 2))
    m_1a, s = _conv_operator(p['w_c1a'], s, (0, 1))
    m_1b, s = _conv_operator(p['w_c1b'], s, (0, 1))
    m_2, s2 = _conv_operator(p['w_c2'], s, (0, 0))
    m_3a, s2 = _conv_operator(p['w_c3a'], s2, (2, 0))
    m_3b, s2 = _conv_operator(p['w_c3b'], s2, (2, 0))
    m_4a, s2 = _conv_operator(p['w_c4a'], s2, (2, 0))
    m_4b, s2 = _conv_operator(p['w_c4b'], s2, (2, 0))
    nsp = s2[1] * s2[2]                     # 5 spatial positions after conv_2
    assert nsp == NSP

    # conv_out (1x1) fused with the max-pool: one (H*nsp, nsp*LATENT) operator.
    w_out = np.asarray(p['w_out'], np.float32)          # (LATENT, H, 1, 1)
    m_out = np.zeros((H * nsp, nsp * LATENT), np.float32)
    for pos in range(nsp):
        for co in range(LATENT):
            for ci in range(H):
                m_out[ci * nsp + pos, pos * LATENT + co] = w_out[co, ci, 0, 0]
    b_out = np.tile(np.asarray(p['b_out'], np.float32), nsp)[None, :]

    def v(x):
        return np.asarray(x, np.float32)[None, :]

    bf16c = lambda m: jnp.asarray(m, jnp.bfloat16)   # matmul operators -> bf16
    f32c = lambda m: jnp.asarray(m, jnp.float32)     # affine / bias -> f32

    inputs = [
        bf16c(m_i1), f32c(rep(p['g_inc1'], hw1)), f32c(rep(p['be_inc1'], hw1)),
        bf16c(m_i2), f32c(rep(p['g_inc2'], hw1)), f32c(rep(p['be_inc2'], hw1)),
        bf16c(m_1a), f32c(rep(p['g_c1a'], hw1)), f32c(rep(p['be_c1a'], hw1)),
        bf16c(m_1b), f32c(rep(p['g_c1b'], hw1)), f32c(rep(p['be_c1b'], hw1)),
        bf16c(m_2),  f32c(rep(p['g_c2'], nsp)),  f32c(rep(p['be_c2'], nsp)),
        bf16c(m_3a), f32c(rep(p['g_c3a'], nsp)), f32c(rep(p['be_c3a'], nsp)),
        bf16c(m_3b), f32c(rep(p['g_c3b'], nsp)), f32c(rep(p['be_c3b'], nsp)),
        bf16c(m_4a), f32c(rep(p['g_c4a'], nsp)), f32c(rep(p['be_c4a'], nsp)),
        bf16c(m_4b), f32c(rep(p['g_c4b'], nsp)), f32c(rep(p['be_c4b'], nsp)),
        bf16c(m_out), f32c(b_out),
        bf16c(np.asarray(p['W1'], np.float32).T), f32c(v(p['b1'])),
        f32c(v(p['g_d1'])), f32c(v(p['be_d1'])),
        bf16c(np.asarray(p['W2'], np.float32).T), f32c(v(p['b2'])),
        f32c(v(p['g_d2'])), f32c(v(p['be_d2'])),
        bf16c(np.asarray(p['W3'], np.float32).T), f32c(v(p['b3'])),
        f32c(v(p['g_d3'])), f32c(v(p['be_d3'])),
        bf16c(np.asarray(p['W4'], np.float32).T), f32c(v(p['b4'])),
    ]
    return inputs


def s_convae_forward(ans, kernel_inputs):
    """ans: (3, B, num_attr*num_obj*input_dim).  Returns (x_in, decoded, z)."""
    B = ans.shape[1]
    hw = NUM_ATTR * NUM_OBJ * INPUT_DIM
    out_w = 2 * hw + LATENT                        # packed: x_in | dec | z

    # Batch-tiled grid: weights stay resident (constant index_map), the batch
    # axis is "parallel" (sharded across TensorCores on v7x).  TB <= 128 keeps
    # double-buffered activation tiles + ~1.3 MB of bf16 operators well under
    # v7x's 32 MiB default scoped VMEM.
    TB = B if B <= 128 else 128
    if B % TB != 0:
        TB = B
    nb = B // TB

    def const_spec(a):
        nd = a.ndim
        return pl.BlockSpec(a.shape, lambda i, _nd=nd: (0,) * _nd)

    in_specs = ([pl.BlockSpec((3, TB, hw), lambda i: (0, i, 0))]
                + [const_spec(a) for a in kernel_inputs])
    out_spec = pl.BlockSpec((TB, out_w), lambda i: (i, 0))

    packed = pl.pallas_call(
        s_convae_kernel,
        out_shape=jax.ShapeDtypeStruct((B, out_w), jnp.float32),
        grid_spec=pltpu.PrefetchScalarGridSpec(
            num_scalar_prefetch=0,
            grid=(nb,),
            in_specs=in_specs,
            out_specs=out_spec),
        compiler_params=pltpu.CompilerParams(
            dimension_semantics=("parallel",)),
    )(ans, *kernel_inputs)

    x_in = packed[:, :hw].reshape(B, INPUT_DIM, NUM_ATTR, NUM_OBJ)
    dec = packed[:, hw:2 * hw].reshape(B, -1, NUM_ATTR, NUM_OBJ)
    z = packed[:, 2 * hw:]
    return x_in, dec, z


# --------------------- pure-JAX reference of the torch forward ----------------
def reference_forward(ans, p):
    PH = lax.Precision.HIGHEST
    B = ans.shape[1]
    x = ans[0] + ans[1] + ans[2]
    x_in = x.reshape(B, NUM_ATTR, NUM_OBJ, INPUT_DIM).transpose(0, 3, 1, 2)

    def conv(a, w, pad):
        return lax.conv_general_dilated(
            a, jnp.asarray(w), (1, 1), [(pad[0], pad[0]), (pad[1], pad[1])],
            dimension_numbers=('NCHW', 'OIHW', 'NCHW'), precision=PH)

    def gn4(a, g, b):
        mu = a.mean(axis=(1, 2, 3), keepdims=True)
        var = ((a - mu) ** 2).mean(axis=(1, 2, 3), keepdims=True)
        return (a - mu) / jnp.sqrt(var + EPS) * g[None, :, None, None] + b[None, :, None, None]

    def gn2(a, g, b):
        mu = a.mean(axis=1, keepdims=True)
        var = ((a - mu) ** 2).mean(axis=1, keepdims=True)
        return (a - mu) / jnp.sqrt(var + EPS) * g[None, :] + b[None, :]

    gelu = lambda v: 0.5 * v * (1.0 + jax.scipy.special.erf(v / np.sqrt(2.0)))
    dot = lambda a, b: jnp.dot(a, b, precision=PH)

    h = gelu(gn4(conv(x_in, p['w_inc1'], (0, 2)), p['g_inc1'], p['be_inc1']))
    h = gn4(conv(h, p['w_inc2'], (0, 2)), p['g_inc2'], p['be_inc2'])
    x1 = gelu(x_in + h)
    h = gelu(gn4(conv(x1, p['w_c1a'], (0, 1)), p['g_c1a'], p['be_c1a']))
    h = gn4(conv(h, p['w_c1b'], (0, 1)), p['g_c1b'], p['be_c1b'])
    x2 = gelu(x1 + h)
    x3 = gelu(gn4(conv(x2, p['w_c2'], (0, 0)), p['g_c2'], p['be_c2']))
    h = gelu(gn4(conv(x3, p['w_c3a'], (2, 0)), p['g_c3a'], p['be_c3a']))
    h = gn4(conv(h, p['w_c3b'], (2, 0)), p['g_c3b'], p['be_c3b'])
    x4 = gelu(x3 + h)
    h = gelu(gn4(conv(x4, p['w_c4a'], (2, 0)), p['g_c4a'], p['be_c4a']))
    x5 = gn4(conv(h, p['w_c4b'], (2, 0)), p['g_c4b'], p['be_c4b'])
    y = conv(x5, p['w_out'], (0, 0)) + jnp.asarray(p['b_out'])[None, :, None, None]
    z = jnp.max(y, axis=(2, 3))
    d = gelu(gn2(dot(z, p['W1'].T) + p['b1'][None], p['g_d1'], p['be_d1']))
    d = gelu(gn2(dot(d, p['W2'].T) + p['b2'][None], p['g_d2'], p['be_d2']))
    d = gelu(gn2(dot(d, p['W3'].T) + p['b3'][None], p['g_d3'], p['be_d3']))
    dec = (dot(d, p['W4'].T) + p['b4'][None]).reshape(B, -1, NUM_ATTR, NUM_OBJ)
    return x_in, dec, z


# ------------------------------------ main ------------------------------------
if __name__ == "__main__":
    key = jax.random.PRNGKey(0)
    kp, kx = jax.random.split(key)
    params = init_params(kp)
    ans = jax.random.normal(
        kx, (3, BATCH, NUM_ATTR * NUM_OBJ * INPUT_DIM), jnp.float32)

    kernel_inputs = build_kernel_inputs(params)
    x_in, dec, z = s_convae_forward(ans, kernel_inputs)
    jax.block_until_ready((x_in, dec, z))

    # Verify against a pure-JAX (f32, exact-erf GELU) re-implementation of the
    # PyTorch forward.  Tolerance is 2e-2 because the kernel stores the matmul
    # operators in bf16 (f32 accumulation) and uses tanh-approximate GELU.
    x_in_r, dec_r, z_r = reference_forward(ans, params)
    for got, want in ((x_in, x_in_r), (dec, dec_r), (z, z_r)):
        assert got.shape == want.shape
        assert np.allclose(np.asarray(got), np.asarray(want),
                           rtol=2e-2, atol=2e-2)

    print("KERNEL_OK")
</pallas_src>

<mosaic_0001>
module attributes {stable_mosaic.version = 11 : i64} {
  func.func @s_convae_kernel(%arg0: i32, %arg1: memref<3x2x25xf32, #tpu.memory_space<vmem>>, %arg2: memref<25x400xbf16, #tpu.memory_space<vmem>>, %arg3: memref<1x400xf32, #tpu.memory_space<vmem>>, %arg4: memref<1x400xf32, #tpu.memory_space<vmem>>, %arg5: memref<400x400xbf16, #tpu.memory_space<vmem>>, %arg6: memref<1x400xf32, #tpu.memory_space<vmem>>, %arg7: memref<1x400xf32, #tpu.memory_space<vmem>>, %arg8: memref<400x400xbf16, #tpu.memory_space<vmem>>, %arg9: memref<1x400xf32, #tpu.memory_space<vmem>>, %arg10: memref<1x400xf32, #tpu.memory_space<vmem>>, %arg11: memref<400x400xbf16, #tpu.memory_space<vmem>>, %arg12: memref<1x400xf32, #tpu.memory_space<vmem>>, %arg13: memref<1x400xf32, #tpu.memory_space<vmem>>, %arg14: memref<400x160xbf16, #tpu.memory_space<vmem>>, %arg15: memref<1x160xf32, #tpu.memory_space<vmem>>, %arg16: memref<1x160xf32, #tpu.memory_space<vmem>>, %arg17: memref<160x160xbf16, #tpu.memory_space<vmem>>, %arg18: memref<1x160xf32, #tpu.memory_space<vmem>>, %arg19: memref<1x160xf32, #tpu.memory_space<vmem>>, %arg20: memref<160x160xbf16, #tpu.memory_space<vmem>>, %arg21: memref<1x160xf32, #tpu.memory_space<vmem>>, %arg22: memref<1x160xf32, #tpu.memory_space<vmem>>, %arg23: memref<160x160xbf16, #tpu.memory_space<vmem>>, %arg24: memref<1x160xf32, #tpu.memory_space<vmem>>, %arg25: memref<1x160xf32, #tpu.memory_space<vmem>>, %arg26: memref<160x160xbf16, #tpu.memory_space<vmem>>, %arg27: memref<1x160xf32, #tpu.memory_space<vmem>>, %arg28: memref<1x160xf32, #tpu.memory_space<vmem>>, %arg29: memref<160x80xbf16, #tpu.memory_space<vmem>>, %arg30: memref<1x80xf32, #tpu.memory_space<vmem>>, %arg31: memref<16x32xbf16, #tpu.memory_space<vmem>>, %arg32: memref<1x32xf32, #tpu.memory_space<vmem>>, %arg33: memref<1x32xf32, #tpu.memory_space<vmem>>, %arg34: memref<1x32xf32, #tpu.memory_space<vmem>>, %arg35: memref<32x32xbf16, #tpu.memory_space<vmem>>, %arg36: memref<1x32xf32, #tpu.memory_space<vmem>>, %arg37: memref<1x32xf32, #tpu.memory_space<vmem>>, %arg38: memref<1x32xf32, #tpu.memory_space<vmem>>, %arg39: memref<32x32xbf16, #tpu.memory_space<vmem>>, %arg40: memref<1x32xf32, #tpu.memory_space<vmem>>, %arg41: memref<1x32xf32, #tpu.memory_space<vmem>>, %arg42: memref<1x32xf32, #tpu.memory_space<vmem>>, %arg43: memref<32x25xbf16, #tpu.memory_space<vmem>>, %arg44: memref<1x25xf32, #tpu.memory_space<vmem>>, %arg45: memref<2x66xf32, #tpu.memory_space<vmem>>) attributes {dimension_semantics = [#tpu.dimension_semantics<parallel>], iteration_bounds = array<i64: 1>, scalar_prefetch = 0 : i64, scratch_operands = 0 : i64, tpu.core_type = #tpu.core_type<tc>, window_params = [{transform_indices = @transform_0, window_bounds = array<i64: 3, 2, 25>}, {pipeline_mode = #tpu.pipeline_mode<synchronous>, transform_indices = @transform_1, window_bounds = array<i64: 25, 400>}, {pipeline_mode = #tpu.pipeline_mode<synchronous>, transform_indices = @transform_2, window_bounds = array<i64: 1, 400>}, {pipeline_mode = #tpu.pipeline_mode<synchronous>, transform_indices = @transform_3, window_bounds = array<i64: 1, 400>}, {pipeline_mode = #tpu.pipeline_mode<synchronous>, transform_indices = @transform_4, window_bounds = array<i64: 400, 400>}, {pipeline_mode = #tpu.pipeline_mode<synchronous>, transform_indices = @transform_5, window_bounds = array<i64: 1, 400>}, {pipeline_mode = #tpu.pipeline_mode<synchronous>, transform_indices = @transform_6, window_bounds = array<i64: 1, 400>}, {pipeline_mode = #tpu.pipeline_mode<synchronous>, transform_indices = @transform_7, window_bounds = array<i64: 400, 400>}, {pipeline_mode = #tpu.pipeline_mode<synchronous>, transform_indices = @transform_8, window_bounds = array<i64: 1, 400>}, {pipeline_mode = #tpu.pipeline_mode<synchronous>, transform_indices = @transform_9, window_bounds = array<i64: 1, 400>}, {pipeline_mode = #tpu.pipeline_mode<synchronous>, transform_indices = @transform_10, window_bounds = array<i64: 400, 400>}, {pipeline_mode = #tpu.pipeline_mode<synchronous>, transform_indices = @transform_11, window_bounds = array<i64: 1, 400>}, {pipeline_mode = #tpu.pipeline_mode<synchronous>, transform_indices = @transform_12, window_bounds = array<i64: 1, 400>}, {pipeline_mode = #tpu.pipeline_mode<synchronous>, transform_indices = @transform_13, window_bounds = array<i64: 400, 160>}, {pipeline_mode = #tpu.pipeline_mode<synchronous>, transform_indices = @transform_14, window_bounds = array<i64: 1, 160>}, {pipeline_mode = #tpu.pipeline_mode<synchronous>, transform_indices = @transform_15, window_bounds = array<i64: 1, 160>}, {pipeline_mode = #tpu.pipeline_mode<synchronous>, transform_indices = @transform_16, window_bounds = array<i64: 160, 160>}, {pipeline_mode = #tpu.pipeline_mode<synchronous>, transform_indices = @transform_17, window_bounds = array<i64: 1, 160>}, {pipeline_mode = #tpu.pipeline_mode<synchronous>, transform_indices = @transform_18, window_bounds = array<i64: 1, 160>}, {pipeline_mode = #tpu.pipeline_mode<synchronous>, transform_indices = @transform_19, window_bounds = array<i64: 160, 160>}, {pipeline_mode = #tpu.pipeline_mode<synchronous>, transform_indices = @transform_20, window_bounds = array<i64: 1, 160>}, {pipeline_mode = #tpu.pipeline_mode<synchronous>, transform_indices = @transform_21, window_bounds = array<i64: 1, 160>}, {pipeline_mode = #tpu.pipeline_mode<synchronous>, transform_indices = @transform_22, window_bounds = array<i64: 160, 160>}, {pipeline_mode = #tpu.pipeline_mode<synchronous>, transform_indices = @transform_23, window_bounds = array<i64: 1, 160>}, {pipeline_mode = #tpu.pipeline_mode<synchronous>, transform_indices = @transform_24, window_bounds = array<i64: 1, 160>}, {pipeline_mode = #tpu.pipeline_mode<synchronous>, transform_indices = @transform_25, window_bounds = array<i64: 160, 160>}, {pipeline_mode = #tpu.pipeline_mode<synchronous>, transform_indices = @transform_26, window_bounds = array<i64: 1, 160>}, {pipeline_mode = #tpu.pipeline_mode<synchronous>, transform_indices = @transform_27, window_bounds = array<i64: 1, 160>}, {pipeline_mode = #tpu.pipeline_mode<synchronous>, transform_indices = @transform_28, window_bounds = array<i64: 160, 80>}, {pipeline_mode = #tpu.pipeline_mode<synchronous>, transform_indices = @transform_29, window_bounds = array<i64: 1, 80>}, {pipeline_mode = #tpu.pipeline_mode<synchronous>, transform_indices = @transform_30, window_bounds = array<i64: 16, 32>}, {pipeline_mode = #tpu.pipeline_mode<synchronous>, transform_indices = @transform_31, window_bounds = array<i64: 1, 32>}, {pipeline_mode = #tpu.pipeline_mode<synchronous>, transform_indices = @transform_32, window_bounds = array<i64: 1, 32>}, {pipeline_mode = #tpu.pipeline_mode<synchronous>, transform_indices = @transform_33, window_bounds = array<i64: 1, 32>}, {pipeline_mode = #tpu.pipeline_mode<synchronous>, transform_indices = @transform_34, window_bounds = array<i64: 32, 32>}, {pipeline_mode = #tpu.pipeline_mode<synchronous>, transform_indices = @transform_35, window_bounds = array<i64: 1, 32>}, {pipeline_mode = #tpu.pipeline_mode<synchronous>, transform_indices = @transform_36, window_bounds = array<i64: 1, 32>}, {pipeline_mode = #tpu.pipeline_mode<synchronous>, transform_indices = @transform_37, window_bounds = array<i64: 1, 32>}, {pipeline_mode = #tpu.pipeline_mode<synchronous>, transform_indices = @transform_38, window_bounds = array<i64: 32, 32>}, {pipeline_mode = #tpu.pipeline_mode<synchronous>, transform_indices = @transform_39, window_bounds = array<i64: 1, 32>}, {pipeline_mode = #tpu.pipeline_mode<synchronous>, transform_indices = @transform_40, window_bounds = array<i64: 1, 32>}, {pipeline_mode = #tpu.pipeline_mode<synchronous>, transform_indices = @transform_41, window_bounds = array<i64: 1, 32>}, {pipeline_mode = #tpu.pipeline_mode<synchronous>, transform_indices = @transform_42, window_bounds = array<i64: 32, 25>}, {pipeline_mode = #tpu.pipeline_mode<synchronous>, transform_indices = @transform_43, window_bounds = array<i64: 1, 25>}, {transform_indices = @transform_44, window_bounds = array<i64: 2, 66>}]} {
    %c0 = arith.constant 0 : index
    %c0_0 = arith.constant 0 : index
    %c0_1 = arith.constant 0 : index
    %0 = vector.load %arg1[%c0, %c0_0, %c0_1] : memref<3x2x25xf32, #tpu.memory_space<vmem>>, vector<1x2x25xf32>
    %1 = vector.shape_cast %0 : vector<1x2x25xf32> to vector<2x25xf32>
    %c1 = arith.constant 1 : index
    %c0_2 = arith.constant 0 : index
    %c0_3 = arith.constant 0 : index
    %2 = vector.load %arg1[%c1, %c0_2, %c0_3] : memref<3x2x25xf32, #tpu.memory_space<vmem>>, vector<1x2x25xf32>
    %3 = vector.shape_cast %2 : vector<1x2x25xf32> to vector<2x25xf32>
    %4 = arith.addf %1, %3 : vector<2x25xf32>
    %c2 = arith.constant 2 : index
    %c0_4 = arith.constant 0 : index
    %c0_5 = arith.constant 0 : index
    %5 = vector.load %arg1[%c2, %c0_4, %c0_5] : memref<3x2x25xf32, #tpu.memory_space<vmem>>, vector<1x2x25xf32>
    %6 = vector.shape_cast %5 : vector<1x2x25xf32> to vector<2x25xf32>
    %7 = arith.addf %4, %6 : vector<2x25xf32>
    %8 = arith.truncf %7 : vector<2x25xf32> to vector<2x25xbf16>
    %c0_6 = arith.constant 0 : index
    %c0_7 = arith.constant 0 : index
    %9 = vector.load %arg2[%c0_6, %c0_7] : memref<25x400xbf16, #tpu.memory_space<vmem>>, vector<25x400xbf16>
    %cst = arith.constant dense<0.000000e+00> : vector<2x400xf32>
    %10 = tpu.matmul %8, %9, %cst {dimension_numbers = #tpu.dot_dimension_numbers<[1], [0], [0], [1], [0, 0, 1, 1], [], []>} : vector<2x25xbf16>, vector<25x400xbf16>, vector<2x400xf32> -> vector<2x400xf32>
    %cst_8 = arith.constant dense<0.000000e+00> : vector<2xf32>
    %11 = vector.multi_reduction <add>, %10, %cst_8 [1] : vector<2x400xf32> to vector<2xf32>
    %12 = vector.shape_cast %11 : vector<2xf32> to vector<2x1xf32>
    %cst_9 = arith.constant 4.000000e+02 : f32
    %13 = vector.broadcast %cst_9 : f32 to vector<2x1xf32>
    %14 = arith.divf %12, %13 : vector<2x1xf32>
    %15 = arith.mulf %10, %10 : vector<2x400xf32>
    %cst_10 = arith.constant dense<0.000000e+00> : vector<2xf32>
    %16 = vector.multi_reduction <add>, %15, %cst_10 [1] : vector<2x400xf32> to vector<2xf32>
    %17 = vector.shape_cast %16 : vector<2xf32> to vector<2x1xf32>
    %cst_11 = arith.constant 4.000000e+02 : f32
    %18 = vector.broadcast %cst_11 : f32 to vector<2x1xf32>
    %19 = arith.divf %17, %18 : vector<2x1xf32>
    %20 = arith.mulf %14, %14 : vector<2x1xf32>
    %21 = arith.subf %19, %20 : vector<2x1xf32>
    %cst_12 = arith.constant 0.000000e+00 : f32
    %22 = vector.broadcast %cst_12 : f32 to vector<2x1xf32>
    %23 = arith.maximumf %21, %22 : vector<2x1xf32>
    %24 = vector.broadcast %14 : vector<2x1xf32> to vector<2x400xf32>
    %25 = arith.subf %10, %24 : vector<2x400xf32>
    %cst_13 = arith.constant 9.99999974E-6 : f32
    %26 = vector.broadcast %cst_13 : f32 to vector<2x1xf32>
    %27 = arith.addf %23, %26 : vector<2x1xf32>
    %28 = math.rsqrt %27 : vector<2x1xf32>
    %29 = vector.broadcast %28 : vector<2x1xf32> to vector<2x400xf32>
    %30 = arith.mulf %25, %29 : vector<2x400xf32>
    %c0_14 = arith.constant 0 : index
    %c0_15 = arith.constant 0 : index
    %31 = vector.load %arg3[%c0_14, %c0_15] : memref<1x400xf32, #tpu.memory_space<vmem>>, vector<1x400xf32>
    %32 = vector.broadcast %31 : vector<1x400xf32> to vector<2x400xf32>
    %33 = arith.mulf %30, %32 : vector<2x400xf32>
    %c0_16 = arith.constant 0 : index
    %c0_17 = arith.constant 0 : index
    %34 = vector.load %arg4[%c0_16, %c0_17] : memref<1x400xf32, #tpu.memory_space<vmem>>, vector<1x400xf32>
    %35 = vector.broadcast %34 : vector<1x400xf32> to vector<2x400xf32>
    %36 = arith.addf %33, %35 : vector<2x400xf32>
    %cst_18 = arith.constant 5.000000e-01 : f32
    %37 = vector.broadcast %cst_18 : f32 to vector<2x400xf32>
    %38 = arith.mulf %37, %36 : vector<2x400xf32>
    %cst_19 = arith.constant 4.471500e-02 : f32
    %39 = vector.broadcast %cst_19 : f32 to vector<2x400xf32>
    %40 = arith.mulf %39, %36 : vector<2x400xf32>
    %41 = arith.mulf %40, %36 : vector<2x400xf32>
    %42 = arith.mulf %41, %36 : vector<2x400xf32>
    %43 = arith.addf %36, %42 : vector<2x400xf32>
    %cst_20 = arith.constant 0.797884583 : f32
    %44 = vector.broadcast %cst_20 : f32 to vector<2x400xf32>
    %45 = arith.mulf %44, %43 : vector<2x400xf32>
    %46 = math.tanh %45 : vector<2x400xf32>
    %cst_21 = arith.constant 1.000000e+00 : f32
    %47 = vector.broadcast %cst_21 : f32 to vector<2x400xf32>
    %48 = arith.addf %47, %46 : vector<2x400xf32>
    %49 = arith.mulf %38, %48 : vector<2x400xf32>
    %50 = arith.truncf %49 : vector<2x400xf32> to vector<2x400xbf16>
    %c0_22 = arith.constant 0 : index
    %c0_23 = arith.constant 0 : index
    %51 = vector.load %arg5[%c0_22, %c0_23] : memref<400x400xbf16, #tpu.memory_space<vmem>>, vector<400x400xbf16>
    %cst_24 = arith.constant dense<0.000000e+00> : vector<2x400xf32>
    %52 = tpu.matmul %50, %51, %cst_24 {dimension_numbers = #tpu.dot_dimension_numbers<[1], [0], [0], [1], [0, 0, 1, 1], [], []>} : vector<2x400xbf16>, vector<400x400xbf16>, vector<2x400xf32> -> vector<2x400xf32>
    %cst_25 = arith.constant dense<0.000000e+00> : vector<2xf32>
    %53 = vector.multi_reduction <add>, %52, %cst_25 [1] : vector<2x400xf32> to vector<2xf32>
    %54 = vector.shape_cast %53 : vector<2xf32> to vector<2x1xf32>
    %cst_26 = arith.constant 4.000000e+02 : f32
    %55 = vector.broadcast %cst_26 : f32 to vector<2x1xf32>
    %56 = arith.divf %54, %55 : vector<2x1xf32>
    %57 = arith.mulf %52, %52 : vector<2x400xf32>
    %cst_27 = arith.constant dense<0.000000e+00> : vector<2xf32>
    %58 = vector.multi_reduction <add>, %57, %cst_27 [1] : vector<2x400xf32> to vector<2xf32>
    %59 = vector.shape_cast %58 : vector<2xf32> to vector<2x1xf32>
    %cst_28 = arith.constant 4.000000e+02 : f32
    %60 = vector.broadcast %cst_28 : f32 to vector<2x1xf32>
    %61 = arith.divf %59, %60 : vector<2x1xf32>
    %62 = arith.mulf %56, %56 : vector<2x1xf32>
    %63 = arith.subf %61, %62 : vector<2x1xf32>
    %cst_29 = arith.constant 0.000000e+00 : f32
    %64 = vector.broadcast %cst_29 : f32 to vector<2x1xf32>
    %65 = arith.maximumf %63, %64 : vector<2x1xf32>
    %66 = vector.broadcast %56 : vector<2x1xf32> to vector<2x400xf32>
    %67 = arith.subf %52, %66 : vector<2x400xf32>
    %cst_30 = arith.constant 9.99999974E-6 : f32
    %68 = vector.broadcast %cst_30 : f32 to vector<2x1xf32>
    %69 = arith.addf %65, %68 : vector<2x1xf32>
    %70 = math.rsqrt %69 : vector<2x1xf32>
    %71 = vector.broadcast %70 : vector<2x1xf32> to vector<2x400xf32>
    %72 = arith.mulf %67, %71 : vector<2x400xf32>
    %c0_31 = arith.constant 0 : index
    %c0_32 = arith.constant 0 : index
    %73 = vector.load %arg6[%c0_31, %c0_32] : memref<1x400xf32, #tpu.memory_space<vmem>>, vector<1x400xf32>
    %74 = vector.broadcast %73 : vector<1x400xf32> to vector<2x400xf32>
    %75 = arith.mulf %72, %74 : vector<2x400xf32>
    %c0_33 = arith.constant 0 : index
    %c0_34 = arith.constant 0 : index
    %76 = vector.load %arg7[%c0_33, %c0_34] : memref<1x400xf32, #tpu.memory_space<vmem>>, vector<1x400xf32>
    %77 = vector.broadcast %76 : vector<1x400xf32> to vector<2x400xf32>
    %78 = arith.addf %75, %77 : vector<2x400xf32>
    %79 = tpu.concatenate %7, %7, %7, %7, %7, %7, %7, %7, %7, %7, %7, %7, %7, %7, %7, %7 in 1 : vector<2x25xf32>, vector<2x25xf32>, vector<2x25xf32>, vector<2x25xf32>, vector<2x25xf32>, vector<2x25xf32>, vector<2x25xf32>, vector<2x25xf32>, vector<2x25xf32>, vector<2x25xf32>, vector<2x25xf32>, vector<2x25xf32>, vector<2x25xf32>, vector<2x25xf32>, vector<2x25xf32>, vector<2x25xf32> -> vector<2x400xf32>
    %80 = arith.addf %79, %78 : vector<2x400xf32>
    %cst_35 = arith.constant 5.000000e-01 : f32
    %81 = vector.broadcast %cst_35 : f32 to vector<2x400xf32>
    %82 = arith.mulf %81, %80 : vector<2x400xf32>
    %cst_36 = arith.constant 4.471500e-02 : f32
    %83 = vector.broadcast %cst_36 : f32 to vector<2x400xf32>
    %84 = arith.mulf %83, %80 : vector<2x400xf32>
    %85 = arith.mulf %84, %80 : vector<2x400xf32>
    %86 = arith.mulf %85, %80 : vector<2x400xf32>
    %87 = arith.addf %80, %86 : vector<2x400xf32>
    %cst_37 = arith.constant 0.797884583 : f32
    %88 = vector.broadcast %cst_37 : f32 to vector<2x400xf32>
    %89 = arith.mulf %88, %87 : vector<2x400xf32>
    %90 = math.tanh %89 : vector<2x400xf32>
    %cst_38 = arith.constant 1.000000e+00 : f32
    %91 = vector.broadcast %cst_38 : f32 to vector<2x400xf32>
    %92 = arith.addf %91, %90 : vector<2x400xf32>
    %93 = arith.mulf %82, %92 : vector<2x400xf32>
    %94 = arith.truncf %93 : vector<2x400xf32> to vector<2x400xbf16>
    %c0_39 = arith.constant 0 : index
    %c0_40 = arith.constant 0 : index
    %95 = vector.load %arg8[%c0_39, %c0_40] : memref<400x400xbf16, #tpu.memory_space<vmem>>, vector<400x400xbf16>
    %cst_41 = arith.constant dense<0.000000e+00> : vector<2x400xf32>
    %96 = tpu.matmul %94, %95, %cst_41 {dimension_numbers = #tpu.dot_dimension_numbers<[1], [0], [0], [1], [0, 0, 1, 1], [], []>} : vector<2x400xbf16>, vector<400x400xbf16>, vector<2x400xf32> -> vector<2x400xf32>
    %cst_42 = arith.constant dense<0.000000e+00> : vector<2xf32>
    %97 = vector.multi_reduction <add>, %96, %cst_42 [1] : vector<2x400xf32> to vector<2xf32>
    %98 = vector.shape_cast %97 : vector<2xf32> to vector<2x1xf32>
    %cst_43 = arith.constant 4.000000e+02 : f32
    %99 = vector.broadcast %cst_43 : f32 to vector<2x1xf32>
    %100 = arith.divf %98, %99 : vector<2x1xf32>
    %101 = arith.mulf %96, %96 : vector<2x400xf32>
    %cst_44 = arith.constant dense<0.000000e+00> : vector<2xf32>
    %102 = vector.multi_reduction <add>, %101, %cst_44 [1] : vector<2x400xf32> to vector<2xf32>
    %103 = vector.shape_cast %102 : vector<2xf32> to vector<2x1xf32>
    %cst_45 = arith.constant 4.000000e+02 : f32
    %104 = vector.broadcast %cst_45 : f32 to vector<2x1xf32>
    %105 = arith.divf %103, %104 : vector<2x1xf32>
    %106 = arith.mulf %100, %100 : vector<2x1xf32>
    %107 = arith.subf %105, %106 : vector<2x1xf32>
    %cst_46 = arith.constant 0.000000e+00 : f32
    %108 = vector.broadcast %cst_46 : f32 to vector<2x1xf32>
    %109 = arith.maximumf %107, %108 : vector<2x1xf32>
    %110 = vector.broadcast %100 : vector<2x1xf32> to vector<2x400xf32>
    %111 = arith.subf %96, %110 : vector<2x400xf32>
    %cst_47 = arith.constant 9.99999974E-6 : f32
    %112 = vector.broadcast %cst_47 : f32 to vector<2x1xf32>
    %113 = arith.addf %109, %112 : vector<2x1xf32>
    %114 = math.rsqrt %113 : vector<2x1xf32>
    %115 = vector.broadcast %114 : vector<2x1xf32> to vector<2x400xf32>
    %116 = arith.mulf %111, %115 : vector<2x400xf32>
    %c0_48 = arith.constant 0 : index
    %c0_49 = arith.constant 0 : index
    %117 = vector.load %arg9[%c0_48, %c0_49] : memref<1x400xf32, #tpu.memory_space<vmem>>, vector<1x400xf32>
    %118 = vector.broadcast %117 : vector<1x400xf32> to vector<2x400xf32>
    %119 = arith.mulf %116, %118 : vector<2x400xf32>
    %c0_50 = arith.constant 0 : index
    %c0_51 = arith.constant 0 : index
    %120 = vector.load %arg10[%c0_50, %c0_51] : memref<1x400xf32, #tpu.memory_space<vmem>>, vector<1x400xf32>
    %121 = vector.broadcast %120 : vector<1x400xf32> to vector<2x400xf32>
    %122 = arith.addf %119, %121 : vector<2x400xf32>
    %cst_52 = arith.constant 5.000000e-01 : f32
    %123 = vector.broadcast %cst_52 : f32 to vector<2x400xf32>
    %124 = arith.mulf %123, %122 : vector<2x400xf32>
    %cst_53 = arith.constant 4.471500e-02 : f32
    %125 = vector.broadcast %cst_53 : f32 to vector<2x400xf32>
    %126 = arith.mulf %125, %122 : vector<2x400xf32>
    %127 = arith.mulf %126, %122 : vector<2x400xf32>
    %128 = arith.mulf %127, %122 : vector<2x400xf32>
    %129 = arith.addf %122, %128 : vector<2x400xf32>
    %cst_54 = arith.constant 0.797884583 : f32
    %130 = vector.broadcast %cst_54 : f32 to vector<2x400xf32>
    %131 = arith.mulf %130, %129 : vector<2x400xf32>
    %132 = math.tanh %131 : vector<2x400xf32>
    %cst_55 = arith.constant 1.000000e+00 : f32
    %133 = vector.broadcast %cst_55 : f32 to vector<2x400xf32>
    %134 = arith.addf %133, %132 : vector<2x400xf32>
    %135 = arith.mulf %124, %134 : vector<2x400xf32>
    %136 = arith.truncf %135 : vector<2x400xf32> to vector<2x400xbf16>
    %c0_56 = arith.constant 0 : index
    %c0_57 = arith.constant 0 : index
    %137 = vector.load %arg11[%c0_56, %c0_57] : memref<400x400xbf16, #tpu.memory_space<vmem>>, vector<400x400xbf16>
    %cst_58 = arith.constant dense<0.000000e+00> : vector<2x400xf32>
    %138 = tpu.matmul %136, %137, %cst_58 {dimension_numbers = #tpu.dot_dimension_numbers<[1], [0], [0], [1], [0, 0, 1, 1], [], []>} : vector<2x400xbf16>, vector<400x400xbf16>, vector<2x400xf32> -> vector<2x400xf32>
    %cst_59 = arith.constant dense<0.000000e+00> : vector<2xf32>
    %139 = vector.multi_reduction <add>, %138, %cst_59 [1] : vector<2x400xf32> to vector<2xf32>
    %140 = vector.shape_cast %139 : vector<2xf32> to vector<2x1xf32>
    %cst_60 = arith.constant 4.000000e+02 : f32
    %141 = vector.broadcast %cst_60 : f32 to vector<2x1xf32>
    %142 = arith.divf %140, %141 : vector<2x1xf32>
    %143 = arith.mulf %138, %138 : vector<2x400xf32>
    %cst_61 = arith.constant dense<0.000000e+00> : vector<2xf32>
    %144 = vector.multi_reduction <add>, %143, %cst_61 [1] : vector<2x400xf32> to vector<2xf32>
    %145 = vector.shape_cast %144 : vector<2xf32> to vector<2x1xf32>
    %cst_62 = arith.constant 4.000000e+02 : f32
    %146 = vector.broadcast %cst_62 : f32 to vector<2x1xf32>
    %147 = arith.divf %145, %146 : vector<2x1xf32>
    %148 = arith.mulf %142, %142 : vector<2x1xf32>
    %149 = arith.subf %147, %148 : vector<2x1xf32>
    %cst_63 = arith.constant 0.000000e+00 : f32
    %150 = vector.broadcast %cst_63 : f32 to vector<2x1xf32>
    %151 = arith.maximumf %149, %150 : vector<2x1xf32>
    %152 = vector.broadcast %142 : vector<2x1xf32> to vector<2x400xf32>
    %153 = arith.subf %138, %152 : vector<2x400xf32>
    %cst_64 = arith.constant 9.99999974E-6 : f32
    %154 = vector.broadcast %cst_64 : f32 to vector<2x1xf32>
    %155 = arith.addf %151, %154 : vector<2x1xf32>
    %156 = math.rsqrt %155 : vector<2x1xf32>
    %157 = vector.broadcast %156 : vector<2x1xf32> to vector<2x400xf32>
    %158 = arith.mulf %153, %157 : vector<2x400xf32>
    %c0_65 = arith.constant 0 : index
    %c0_66 = arith.constant 0 : index
    %159 = vector.load %arg12[%c0_65, %c0_66] : memref<1x400xf32, #tpu.memory_space<vmem>>, vector<1x400xf32>
    %160 = vector.broadcast %159 : vector<1x400xf32> to vector<2x400xf32>
    %161 = arith.mulf %158, %160 : vector<2x400xf32>
    %c0_67 = arith.constant 0 : index
    %c0_68 = arith.constant 0 : index
    %162 = vector.load %arg13[%c0_67, %c0_68] : memref<1x400xf32, #tpu.memory_space<vmem>>, vector<1x400xf32>
    %163 = vector.broadcast %162 : vector<1x400xf32> to vector<2x400xf32>
    %164 = arith.addf %161, %163 : vector<2x400xf32>
    %165 = arith.addf %93, %164 : vector<2x400xf32>
    %cst_69 = arith.constant 5.000000e-01 : f32
    %166 = vector.broadcast %cst_69 : f32 to vector<2x400xf32>
    %167 = arith.mulf %166, %165 : vector<2x400xf32>
    %cst_70 = arith.constant 4.471500e-02 : f32
    %168 = vector.broadcast %cst_70 : f32 to vector<2x400xf32>
    %169 = arith.mulf %168, %165 : vector<2x400xf32>
    %170 = arith.mulf %169, %165 : vector<2x400xf32>
    %171 = arith.mulf %170, %165 : vector<2x400xf32>
    %172 = arith.addf %165, %171 : vector<2x400xf32>
    %cst_71 = arith.constant 0.797884583 : f32
    %173 = vector.broadcast %cst_71 : f32 to vector<2x400xf32>
    %174 = arith.mulf %173, %172 : vector<2x400xf32>
    %175 = math.tanh %174 : vector<2x400xf32>
    %cst_72 = arith.constant 1.000000e+00 : f32
    %176 = vector.broadcast %cst_72 : f32 to vector<2x400xf32>
    %177 = arith.addf %176, %175 : vector<2x400xf32>
    %178 = arith.mulf %167, %177 : vector<2x400xf32>
    %179 = arith.truncf %178 : vector<2x400xf32> to vector<2x400xbf16>
    %c0_73 = arith.constant 0 : index
    %c0_74 = arith.constant 0 : index
    %180 = vector.load %arg14[%c0_73, %c0_74] : memref<400x160xbf16, #tpu.memory_space<vmem>>, vector<400x160xbf16>
    %cst_75 = arith.constant dense<0.000000e+00> : vector<2x160xf32>
    %181 = tpu.matmul %179, %180, %cst_75 {dimension_numbers = #tpu.dot_dimension_numbers<[1], [0], [0], [1], [0, 0, 1, 1], [], []>} : vector<2x400xbf16>, vector<400x160xbf16>, vector<2x160xf32> -> vector<2x160xf32>
    %cst_76 = arith.constant dense<0.000000e+00> : vector<2xf32>
    %182 = vector.multi_reduction <add>, %181, %cst_76 [1] : vector<2x160xf32> to vector<2xf32>
    %183 = vector.shape_cast %182 : vector<2xf32> to vector<2x1xf32>
    %cst_77 = arith.constant 1.600000e+02 : f32
    %184 = vector.broadcast %cst_77 : f32 to vector<2x1xf32>
    %185 = arith.divf %183, %184 : vector<2x1xf32>
    %186 = arith.mulf %181, %181 : vector<2x160xf32>
    %cst_78 = arith.constant dense<0.000000e+00> : vector<2xf32>
    %187 = vector.multi_reduction <add>, %186, %cst_78 [1] : vector<2x160xf32> to vector<2xf32>
    %188 = vector.shape_cast %187 : vector<2xf32> to vector<2x1xf32>
    %cst_79 = arith.constant 1.600000e+02 : f32
    %189 = vector.broadcast %cst_79 : f32 to vector<2x1xf32>
    %190 = arith.divf %188, %189 : vector<2x1xf32>
    %191 = arith.mulf %185, %185 : vector<2x1xf32>
    %192 = arith.subf %190, %191 : vector<2x1xf32>
    %cst_80 = arith.constant 0.000000e+00 : f32
    %193 = vector.broadcast %cst_80 : f32 to vector<2x1xf32>
    %194 = arith.maximumf %192, %193 : vector<2x1xf32>
    %195 = vector.broadcast %185 : vector<2x1xf32> to vector<2x160xf32>
    %196 = arith.subf %181, %195 : vector<2x160xf32>
    %cst_81 = arith.constant 9.99999974E-6 : f32
    %197 = vector.broadcast %cst_81 : f32 to vector<2x1xf32>
    %198 = arith.addf %194, %197 : vector<2x1xf32>
    %199 = math.rsqrt %198 : vector<2x1xf32>
    %200 = vector.broadcast %199 : vector<2x1xf32> to vector<2x160xf32>
    %201 = arith.mulf %196, %200 : vector<2x160xf32>
    %c0_82 = arith.constant 0 : index
    %c0_83 = arith.constant 0 : index
    %202 = vector.load %arg15[%c0_82, %c0_83] : memref<1x160xf32, #tpu.memory_space<vmem>>, vector<1x160xf32>
    %203 = vector.broadcast %202 : vector<1x160xf32> to vector<2x160xf32>
    %204 = arith.mulf %201, %203 : vector<2x160xf32>
    %c0_84 = arith.constant 0 : index
    %c0_85 = arith.constant 0 : index
    %205 = vector.load %arg16[%c0_84, %c0_85] : memref<1x160xf32, #tpu.memory_space<vmem>>, vector<1x160xf32>
    %206 = vector.broadcast %205 : vector<1x160xf32> to vector<2x160xf32>
    %207 = arith.addf %204, %206 : vector<2x160xf32>
    %cst_86 = arith.constant 5.000000e-01 : f32
    %208 = vector.broadcast %cst_86 : f32 to vector<2x160xf32>
    %209 = arith.mulf %208, %207 : vector<2x160xf32>
    %cst_87 = arith.constant 4.471500e-02 : f32
    %210 = vector.broadcast %cst_87 : f32 to vector<2x160xf32>
    %211 = arith.mulf %210, %207 : vector<2x160xf32>
    %212 = arith.mulf %211, %207 : vector<2x160xf32>
    %213 = arith.mulf %212, %207 : vector<2x160xf32>
    %214 = arith.addf %207, %213 : vector<2x160xf32>
    %cst_88 = arith.constant 0.797884583 : f32
    %215 = vector.broadcast %cst_88 : f32 to vector<2x160xf32>
    %216 = arith.mulf %215, %214 : vector<2x160xf32>
    %217 = math.tanh %216 : vector<2x160xf32>
    %cst_89 = arith.constant 1.000000e+00 : f32
    %218 = vector.broadcast %cst_89 : f32 to vector<2x160xf32>
    %219 = arith.addf %218, %217 : vector<2x160xf32>
    %220 = arith.mulf %209, %219 : vector<2x160xf32>
    %221 = arith.truncf %220 : vector<2x160xf32> to vector<2x160xbf16>
    %c0_90 = arith.constant 0 : index
    %c0_91 = arith.constant 0 : index
    %222 = vector.load %arg17[%c0_90, %c0_91] : memref<160x160xbf16, #tpu.memory_space<vmem>>, vector<160x160xbf16>
    %cst_92 = arith.constant dense<0.000000e+00> : vector<2x160xf32>
    %223 = tpu.matmul %221, %222, %cst_92 {dimension_numbers = #tpu.dot_dimension_numbers<[1], [0], [0], [1], [0, 0, 1, 1], [], []>} : vector<2x160xbf16>, vector<160x160xbf16>, vector<2x160xf32> -> vector<2x160xf32>
    %cst_93 = arith.constant dense<0.000000e+00> : vector<2xf32>
    %224 = vector.multi_reduction <add>, %223, %cst_93 [1] : vector<2x160xf32> to vector<2xf32>
    %225 = vector.shape_cast %224 : vector<2xf32> to vector<2x1xf32>
    %cst_94 = arith.constant 1.600000e+02 : f32
    %226 = vector.broadcast %cst_94 : f32 to vector<2x1xf32>
    %227 = arith.divf %225, %226 : vector<2x1xf32>
    %228 = arith.mulf %223, %223 : vector<2x160xf32>
    %cst_95 = arith.constant dense<0.000000e+00> : vector<2xf32>
    %229 = vector.multi_reduction <add>, %228, %cst_95 [1] : vector<2x160xf32> to vector<2xf32>
    %230 = vector.shape_cast %229 : vector<2xf32> to vector<2x1xf32>
    %cst_96 = arith.constant 1.600000e+02 : f32
    %231 = vector.broadcast %cst_96 : f32 to vector<2x1xf32>
    %232 = arith.divf %230, %231 : vector<2x1xf32>
    %233 = arith.mulf %227, %227 : vector<2x1xf32>
    %234 = arith.subf %232, %233 : vector<2x1xf32>
    %cst_97 = arith.constant 0.000000e+00 : f32
    %235 = vector.broadcast %cst_97 : f32 to vector<2x1xf32>
    %236 = arith.maximumf %234, %235 : vector<2x1xf32>
    %237 = vector.broadcast %227 : vector<2x1xf32> to vector<2x160xf32>
    %238 = arith.subf %223, %237 : vector<2x160xf32>
    %cst_98 = arith.constant 9.99999974E-6 : f32
    %239 = vector.broadcast %cst_98 : f32 to vector<2x1xf32>
    %240 = arith.addf %236, %239 : vector<2x1xf32>
    %241 = math.rsqrt %240 : vector<2x1xf32>
    %242 = vector.broadcast %241 : vector<2x1xf32> to vector<2x160xf32>
    %243 = arith.mulf %238, %242 : vector<2x160xf32>
    %c0_99 = arith.constant 0 : index
    %c0_100 = arith.constant 0 : index
    %244 = vector.load %arg18[%c0_99, %c0_100] : memref<1x160xf32, #tpu.memory_space<vmem>>, vector<1x160xf32>
    %245 = vector.broadcast %244 : vector<1x160xf32> to vector<2x160xf32>
    %246 = arith.mulf %243, %245 : vector<2x160xf32>
    %c0_101 = arith.constant 0 : index
    %c0_102 = arith.constant 0 : index
    %247 = vector.load %arg19[%c0_101, %c0_102] : memref<1x160xf32, #tpu.memory_space<vmem>>, vector<1x160xf32>
    %248 = vector.broadcast %247 : vector<1x160xf32> to vector<2x160xf32>
    %249 = arith.addf %246, %248 : vector<2x160xf32>
    %cst_103 = arith.constant 5.000000e-01 : f32
    %250 = vector.broadcast %cst_103 : f32 to vector<2x160xf32>
    %251 = arith.mulf %250, %249 : vector<2x160xf32>
    %cst_104 = arith.constant 4.471500e-02 : f32
    %252 = vector.broadcast %cst_104 : f32 to vector<2x160xf32>
    %253 = arith.mulf %252, %249 : vector<2x160xf32>
    %254 = arith.mulf %253, %249 : vector<2x160xf32>
    %255 = arith.mulf %254, %249 : vector<2x160xf32>
    %256 = arith.addf %249, %255 : vector<2x160xf32>
    %cst_105 = arith.constant 0.797884583 : f32
    %257 = vector.broadcast %cst_105 : f32 to vector<2x160xf32>
    %258 = arith.mulf %257, %256 : vector<2x160xf32>
    %259 = math.tanh %258 : vector<2x160xf32>
    %cst_106 = arith.constant 1.000000e+00 : f32
    %260 = vector.broadcast %cst_106 : f32 to vector<2x160xf32>
    %261 = arith.addf %260, %259 : vector<2x160xf32>
    %262 = arith.mulf %251, %261 : vector<2x160xf32>
    %263 = arith.truncf %262 : vector<2x160xf32> to vector<2x160xbf16>
    %c0_107 = arith.constant 0 : index
    %c0_108 = arith.constant 0 : index
    %264 = vector.load %arg20[%c0_107, %c0_108] : memref<160x160xbf16, #tpu.memory_space<vmem>>, vector<160x160xbf16>
    %cst_109 = arith.constant dense<0.000000e+00> : vector<2x160xf32>
    %265 = tpu.matmul %263, %264, %cst_109 {dimension_numbers = #tpu.dot_dimension_numbers<[1], [0], [0], [1], [0, 0, 1, 1], [], []>} : vector<2x160xbf16>, vector<160x160xbf16>, vector<2x160xf32> -> vector<2x160xf32>
    %cst_110 = arith.constant dense<0.000000e+00> : vector<2xf32>
    %266 = vector.multi_reduction <add>, %265, %cst_110 [1] : vector<2x160xf32> to vector<2xf32>
    %267 = vector.shape_cast %266 : vector<2xf32> to vector<2x1xf32>
    %cst_111 = arith.constant 1.600000e+02 : f32
    %268 = vector.broadcast %cst_111 : f32 to vector<2x1xf32>
    %269 = arith.divf %267, %268 : vector<2x1xf32>
    %270 = arith.mulf %265, %265 : vector<2x160xf32>
    %cst_112 = arith.constant dense<0.000000e+00> : vector<2xf32>
    %271 = vector.multi_reduction <add>, %270, %cst_112 [1] : vector<2x160xf32> to vector<2xf32>
    %272 = vector.shape_cast %271 : vector<2xf32> to vector<2x1xf32>
    %cst_113 = arith.constant 1.600000e+02 : f32
    %273 = vector.broadcast %cst_113 : f32 to vector<2x1xf32>
    %274 = arith.divf %272, %273 : vector<2x1xf32>
    %275 = arith.mulf %269, %269 : vector<2x1xf32>
    %276 = arith.subf %274, %275 : vector<2x1xf32>
    %cst_114 = arith.constant 0.000000e+00 : f32
    %277 = vector.broadcast %cst_114 : f32 to vector<2x1xf32>
    %278 = arith.maximumf %276, %277 : vector<2x1xf32>
    %279 = vector.broadcast %269 : vector<2x1xf32> to vector<2x160xf32>
    %280 = arith.subf %265, %279 : vector<2x160xf32>
    %cst_115 = arith.constant 9.99999974E-6 : f32
    %281 = vector.broadcast %cst_115 : f32 to vector<2x1xf32>
    %282 = arith.addf %278, %281 : vector<2x1xf32>
    %283 = math.rsqrt %282 : vector<2x1xf32>
    %284 = vector.broadcast %283 : vector<2x1xf32> to vector<2x160xf32>
    %285 = arith.mulf %280, %284 : vector<2x160xf32>
    %c0_116 = arith.constant 0 : index
    %c0_117 = arith.constant 0 : index
    %286 = vector.load %arg21[%c0_116, %c0_117] : memref<1x160xf32, #tpu.memory_space<vmem>>, vector<1x160xf32>
    %287 = vector.broadcast %286 : vector<1x160xf32> to vector<2x160xf32>
    %288 = arith.mulf %285, %287 : vector<2x160xf32>
    %c0_118 = arith.constant 0 : index
    %c0_119 = arith.constant 0 : index
    %289 = vector.load %arg22[%c0_118, %c0_119] : memref<1x160xf32, #tpu.memory_space<vmem>>, vector<1x160xf32>
    %290 = vector.broadcast %289 : vector<1x160xf32> to vector<2x160xf32>
    %291 = arith.addf %288, %290 : vector<2x160xf32>
    %292 = arith.addf %220, %291 : vector<2x160xf32>
    %cst_120 = arith.constant 5.000000e-01 : f32
    %293 = vector.broadcast %cst_120 : f32 to vector<2x160xf32>
    %294 = arith.mulf %293, %292 : vector<2x160xf32>
    %cst_121 = arith.constant 4.471500e-02 : f32
    %295 = vector.broadcast %cst_121 : f32 to vector<2x160xf32>
    %296 = arith.mulf %295, %292 : vector<2x160xf32>
    %297 = arith.mulf %296, %292 : vector<2x160xf32>
    %298 = arith.mulf %297, %292 : vector<2x160xf32>
    %299 = arith.addf %292, %298 : vector<2x160xf32>
    %cst_122 = arith.constant 0.797884583 : f32
    %300 = vector.broadcast %cst_122 : f32 to vector<2x160xf32>
    %301 = arith.mulf %300, %299 : vector<2x160xf32>
    %302 = math.tanh %301 : vector<2x160xf32>
    %cst_123 = arith.constant 1.000000e+00 : f32
    %303 = vector.broadcast %cst_123 : f32 to vector<2x160xf32>
    %304 = arith.addf %303, %302 : vector<2x160xf32>
    %305 = arith.mulf %294, %304 : vector<2x160xf32>
    %306 = arith.truncf %305 : vector<2x160xf32> to vector<2x160xbf16>
    %c0_124 = arith.constant 0 : index
    %c0_125 = arith.constant 0 : index
    %307 = vector.load %arg23[%c0_124, %c0_125] : memref<160x160xbf16, #tpu.memory_space<vmem>>, vector<160x160xbf16>
    %cst_126 = arith.constant dense<0.000000e+00> : vector<2x160xf32>
    %308 = tpu.matmul %306, %307, %cst_126 {dimension_numbers = #tpu.dot_dimension_numbers<[1], [0], [0], [1], [0, 0, 1, 1], [], []>} : vector<2x160xbf16>, vector<160x160xbf16>, vector<2x160xf32> -> vector<2x160xf32>
    %cst_127 = arith.constant dense<0.000000e+00> : vector<2xf32>
    %309 = vector.multi_reduction <add>, %308, %cst_127 [1] : vector<2x160xf32> to vector<2xf32>
    %310 = vector.shape_cast %309 : vector<2xf32> to vector<2x1xf32>
    %cst_128 = arith.constant 1.600000e+02 : f32
    %311 = vector.broadcast %cst_128 : f32 to vector<2x1xf32>
    %312 = arith.divf %310, %311 : vector<2x1xf32>
    %313 = arith.mulf %308, %308 : vector<2x160xf32>
    %cst_129 = arith.constant dense<0.000000e+00> : vector<2xf32>
    %314 = vector.multi_reduction <add>, %313, %cst_129 [1] : vector<2x160xf32> to vector<2xf32>
    %315 = vector.shape_cast %314 : vector<2xf32> to vector<2x1xf32>
    %cst_130 = arith.constant 1.600000e+02 : f32
    %316 = vector.broadcast %cst_130 : f32 to vector<2x1xf32>
    %317 = arith.divf %315, %316 : vector<2x1xf32>
    %318 = arith.mulf %312, %312 : vector<2x1xf32>
    %319 = arith.subf %317, %318 : vector<2x1xf32>
    %cst_131 = arith.constant 0.000000e+00 : f32
    %320 = vector.broadcast %cst_131 : f32 to vector<2x1xf32>
    %321 = arith.maximumf %319, %320 : vector<2x1xf32>
    %322 = vector.broadcast %312 : vector<2x1xf32> to vector<2x160xf32>
    %323 = arith.subf %308, %322 : vector<2x160xf32>
    %cst_132 = arith.constant 9.99999974E-6 : f32
    %324 = vector.broadcast %cst_132 : f32 to vector<2x1xf32>
    %325 = arith.addf %321, %324 : vector<2x1xf32>
    %326 = math.rsqrt %325 : vector<2x1xf32>
    %327 = vector.broadcast %326 : vector<2x1xf32> to vector<2x160xf32>
    %328 = arith.mulf %323, %327 : vector<2x160xf32>
    %c0_133 = arith.constant 0 : index
    %c0_134 = arith.constant 0 : index
    %329 = vector.load %arg24[%c0_133, %c0_134] : memref<1x160xf32, #tpu.memory_space<vmem>>, vector<1x160xf32>
    %330 = vector.broadcast %329 : vector<1x160xf32> to vector<2x160xf32>
    %331 = arith.mulf %328, %330 : vector<2x160xf32>
    %c0_135 = arith.constant 0 : index
    %c0_136 = arith.constant 0 : index
    %332 = vector.load %arg25[%c0_135, %c0_136] : memref<1x160xf32, #tpu.memory_space<vmem>>, vector<1x160xf32>
    %333 = vector.broadcast %332 : vector<1x160xf32> to vector<2x160xf32>
    %334 = arith.addf %331, %333 : vector<2x160xf32>
    %cst_137 = arith.constant 5.000000e-01 : f32
    %335 = vector.broadcast %cst_137 : f32 to vector<2x160xf32>
    %336 = arith.mulf %335, %334 : vector<2x160xf32>
    %cst_138 = arith.constant 4.471500e-02 : f32
    %337 = vector.broadcast %cst_138 : f32 to vector<2x160xf32>
    %338 = arith.mulf %337, %334 : vector<2x160xf32>
    %339 = arith.mulf %338, %334 : vector<2x160xf32>
    %340 = arith.mulf %339, %334 : vector<2x160xf32>
    %341 = arith.addf %334, %340 : vector<2x160xf32>
    %cst_139 = arith.constant 0.797884583 : f32
    %342 = vector.broadcast %cst_139 : f32 to vector<2x160xf32>
    %343 = arith.mulf %342, %341 : vector<2x160xf32>
    %344 = math.tanh %343 : vector<2x160xf32>
    %cst_140 = arith.constant 1.000000e+00 : f32
    %345 = vector.broadcast %cst_140 : f32 to vector<2x160xf32>
    %346 = arith.addf %345, %344 : vector<2x160xf32>
    %347 = arith.mulf %336, %346 : vector<2x160xf32>
    %348 = arith.truncf %347 : vector<2x160xf32> to vector<2x160xbf16>
    %c0_141 = arith.constant 0 : index
    %c0_142 = arith.constant 0 : index
    %349 = vector.load %arg26[%c0_141, %c0_142] : memref<160x160xbf16, #tpu.memory_space<vmem>>, vector<160x160xbf16>
    %cst_143 = arith.constant dense<0.000000e+00> : vector<2x160xf32>
    %350 = tpu.matmul %348, %349, %cst_143 {dimension_numbers = #tpu.dot_dimension_numbers<[1], [0], [0], [1], [0, 0, 1, 1], [], []>} : vector<2x160xbf16>, vector<160x160xbf16>, vector<2x160xf32> -> vector<2x160xf32>
    %cst_144 = arith.constant dense<0.000000e+00> : vector<2xf32>
    %351 = vector.multi_reduction <add>, %350, %cst_144 [1] : vector<2x160xf32> to vector<2xf32>
    %352 = vector.shape_cast %351 : vector<2xf32> to vector<2x1xf32>
    %cst_145 = arith.constant 1.600000e+02 : f32
    %353 = vector.broadcast %cst_145 : f32 to vector<2x1xf32>
    %354 = arith.divf %352, %353 : vector<2x1xf32>
    %355 = arith.mulf %350, %350 : vector<2x160xf32>
    %cst_146 = arith.constant dense<0.000000e+00> : vector<2xf32>
    %356 = vector.multi_reduction <add>, %355, %cst_146 [1] : vector<2x160xf32> to vector<2xf32>
    %357 = vector.shape_cast %356 : vector<2xf32> to vector<2x1xf32>
    %cst_147 = arith.constant 1.600000e+02 : f32
    %358 = vector.broadcast %cst_147 : f32 to vector<2x1xf32>
    %359 = arith.divf %357, %358 : vector<2x1xf32>
    %360 = arith.mulf %354, %354 : vector<2x1xf32>
    %361 = arith.subf %359, %360 : vector<2x1xf32>
    %cst_148 = arith.constant 0.000000e+00 : f32
    %362 = vector.broadcast %cst_148 : f32 to vector<2x1xf32>
    %363 = arith.maximumf %361, %362 : vector<2x1xf32>
    %364 = vector.broadcast %354 : vector<2x1xf32> to vector<2x160xf32>
    %365 = arith.subf %350, %364 : vector<2x160xf32>
    %cst_149 = arith.constant 9.99999974E-6 : f32
    %366 = vector.broadcast %cst_149 : f32 to vector<2x1xf32>
    %367 = arith.addf %363, %366 : vector<2x1xf32>
    %368 = math.rsqrt %367 : vector<2x1xf32>
    %369 = vector.broadcast %368 : vector<2x1xf32> to vector<2x160xf32>
    %370 = arith.mulf %365, %369 : vector<2x160xf32>
    %c0_150 = arith.constant 0 : index
    %c0_151 = arith.constant 0 : index
    %371 = vector.load %arg27[%c0_150, %c0_151] : memref<1x160xf32, #tpu.memory_space<vmem>>, vector<1x160xf32>
    %372 = vector.broadcast %371 : vector<1x160xf32> to vector<2x160xf32>
    %373 = arith.mulf %370, %372 : vector<2x160xf32>
    %c0_152 = arith.constant 0 : index
    %c0_153 = arith.constant 0 : index
    %374 = vector.load %arg28[%c0_152, %c0_153] : memref<1x160xf32, #tpu.memory_space<vmem>>, vector<1x160xf32>
    %375 = vector.broadcast %374 : vector<1x160xf32> to vector<2x160xf32>
    %376 = arith.addf %373, %375 : vector<2x160xf32>
    %377 = arith.truncf %376 : vector<2x160xf32> to vector<2x160xbf16>
    %c0_154 = arith.constant 0 : index
    %c0_155 = arith.constant 0 : index
    %378 = vector.load %arg29[%c0_154, %c0_155] : memref<160x80xbf16, #tpu.memory_space<vmem>>, vector<160x80xbf16>
    %cst_156 = arith.constant dense<0.000000e+00> : vector<2x80xf32>
    %379 = tpu.matmul %377, %378, %cst_156 {dimension_numbers = #tpu.dot_dimension_numbers<[1], [0], [0], [1], [0, 0, 1, 1], [], []>} : vector<2x160xbf16>, vector<160x80xbf16>, vector<2x80xf32> -> vector<2x80xf32>
    %c0_157 = arith.constant 0 : index
    %c0_158 = arith.constant 0 : index
    %380 = vector.load %arg30[%c0_157, %c0_158] : memref<1x80xf32, #tpu.memory_space<vmem>>, vector<1x80xf32>
    %381 = vector.broadcast %380 : vector<1x80xf32> to vector<2x80xf32>
    %382 = arith.addf %379, %381 : vector<2x80xf32>
    %383 = vector.extract_strided_slice %382 {offsets = [0, 0], sizes = [2, 16], strides = [1, 1]} : vector<2x80xf32> to vector<2x16xf32>
    %384 = vector.extract_strided_slice %382 {offsets = [0, 16], sizes = [2, 16], strides = [1, 1]} : vector<2x80xf32> to vector<2x16xf32>
    %385 = arith.maximumf %383, %384 : vector<2x16xf32>
    %386 = vector.extract_strided_slice %382 {offsets = [0, 32], sizes = [2, 16], strides = [1, 1]} : vector<2x80xf32> to vector<2x16xf32>
    %387 = arith.maximumf %385, %386 : vector<2x16xf32>
    %388 = vector.extract_strided_slice %382 {offsets = [0, 48], sizes = [2, 16], strides = [1, 1]} : vector<2x80xf32> to vector<2x16xf32>
    %389 = arith.maximumf %387, %388 : vector<2x16xf32>
    %390 = vector.extract_strided_slice %382 {offsets = [0, 64], sizes = [2, 16], strides = [1, 1]} : vector<2x80xf32> to vector<2x16xf32>
    %391 = arith.maximumf %389, %390 : vector<2x16xf32>
    %392 = arith.truncf %391 : vector<2x16xf32> to vector<2x16xbf16>
    %c0_159 = arith.constant 0 : index
    %c0_160 = arith.constant 0 : index
    %393 = vector.load %arg31[%c0_159, %c0_160] : memref<16x32xbf16, #tpu.memory_space<vmem>>, vector<16x32xbf16>
    %cst_161 = arith.constant dense<0.000000e+00> : vector<2x32xf32>
    %394 = tpu.matmul %392, %393, %cst_161 {dimension_numbers = #tpu.dot_dimension_numbers<[1], [0], [0], [1], [0, 0, 1, 1], [], []>} : vector<2x16xbf16>, vector<16x32xbf16>, vector<2x32xf32> -> vector<2x32xf32>
    %c0_162 = arith.constant 0 : index
    %c0_163 = arith.constant 0 : index
    %395 = vector.load %arg32[%c0_162, %c0_163] : memref<1x32xf32, #tpu.memory_space<vmem>>, vector<1x32xf32>
    %396 = vector.broadcast %395 : vector<1x32xf32> to vector<2x32xf32>
    %397 = arith.addf %394, %396 : vector<2x32xf32>
    %cst_164 = arith.constant dense<0.000000e+00> : vector<2xf32>
    %398 = vector.multi_reduction <add>, %397, %cst_164 [1] : vector<2x32xf32> to vector<2xf32>
    %399 = vector.shape_cast %398 : vector<2xf32> to vector<2x1xf32>
    %cst_165 = arith.constant 3.200000e+01 : f32
    %400 = vector.broadcast %cst_165 : f32 to vector<2x1xf32>
    %401 = arith.divf %399, %400 : vector<2x1xf32>
    %402 = arith.mulf %397, %397 : vector<2x32xf32>
    %cst_166 = arith.constant dense<0.000000e+00> : vector<2xf32>
    %403 = vector.multi_reduction <add>, %402, %cst_166 [1] : vector<2x32xf32> to vector<2xf32>
    %404 = vector.shape_cast %403 : vector<2xf32> to vector<2x1xf32>
    %cst_167 = arith.constant 3.200000e+01 : f32
    %405 = vector.broadcast %cst_167 : f32 to vector<2x1xf32>
    %406 = arith.divf %404, %405 : vector<2x1xf32>
    %407 = arith.mulf %401, %401 : vector<2x1xf32>
    %408 = arith.subf %406, %407 : vector<2x1xf32>
    %cst_168 = arith.constant 0.000000e+00 : f32
    %409 = vector.broadcast %cst_168 : f32 to vector<2x1xf32>
    %410 = arith.maximumf %408, %409 : vector<2x1xf32>
    %411 = vector.broadcast %401 : vector<2x1xf32> to vector<2x32xf32>
    %412 = arith.subf %397, %411 : vector<2x32xf32>
    %cst_169 = arith.constant 9.99999974E-6 : f32
    %413 = vector.broadcast %cst_169 : f32 to vector<2x1xf32>
    %414 = arith.addf %410, %413 : vector<2x1xf32>
    %415 = math.rsqrt %414 : vector<2x1xf32>
    %416 = vector.broadcast %415 : vector<2x1xf32> to vector<2x32xf32>
    %417 = arith.mulf %412, %416 : vector<2x32xf32>
    %c0_170 = arith.constant 0 : index
    %c0_171 = arith.constant 0 : index
    %418 = vector.load %arg33[%c0_170, %c0_171] : memref<1x32xf32, #tpu.memory_space<vmem>>, vector<1x32xf32>
    %419 = vector.broadcast %418 : vector<1x32xf32> to vector<2x32xf32>
    %420 = arith.mulf %417, %419 : vector<2x32xf32>
    %c0_172 = arith.constant 0 : index
    %c0_173 = arith.constant 0 : index
    %421 = vector.load %arg34[%c0_172, %c0_173] : memref<1x32xf32, #tpu.memory_space<vmem>>, vector<1x32xf32>
    %422 = vector.broadcast %421 : vector<1x32xf32> to vector<2x32xf32>
    %423 = arith.addf %420, %422 : vector<2x32xf32>
    %cst_174 = arith.constant 5.000000e-01 : f32
    %424 = vector.broadcast %cst_174 : f32 to vector<2x32xf32>
    %425 = arith.mulf %424, %423 : vector<2x32xf32>
    %cst_175 = arith.constant 4.471500e-02 : f32
    %426 = vector.broadcast %cst_175 : f32 to vector<2x32xf32>
    %427 = arith.mulf %426, %423 : vector<2x32xf32>
    %428 = arith.mulf %427, %423 : vector<2x32xf32>
    %429 = arith.mulf %428, %423 : vector<2x32xf32>
    %430 = arith.addf %423, %429 : vector<2x32xf32>
    %cst_176 = arith.constant 0.797884583 : f32
    %431 = vector.broadcast %cst_176 : f32 to vector<2x32xf32>
    %432 = arith.mulf %431, %430 : vector<2x32xf32>
    %433 = math.tanh %432 : vector<2x32xf32>
    %cst_177 = arith.constant 1.000000e+00 : f32
    %434 = vector.broadcast %cst_177 : f32 to vector<2x32xf32>
    %435 = arith.addf %434, %433 : vector<2x32xf32>
    %436 = arith.mulf %425, %435 : vector<2x32xf32>
    %437 = arith.truncf %436 : vector<2x32xf32> to vector<2x32xbf16>
    %c0_178 = arith.constant 0 : index
    %c0_179 = arith.constant 0 : index
    %438 = vector.load %arg35[%c0_178, %c0_179] : memref<32x32xbf16, #tpu.memory_space<vmem>>, vector<32x32xbf16>
    %cst_180 = arith.constant dense<0.000000e+00> : vector<2x32xf32>
    %439 = tpu.matmul %437, %438, %cst_180 {dimension_numbers = #tpu.dot_dimension_numbers<[1], [0], [0], [1], [0, 0, 1, 1], [], []>} : vector<2x32xbf16>, vector<32x32xbf16>, vector<2x32xf32> -> vector<2x32xf32>
    %c0_181 = arith.constant 0 : index
    %c0_182 = arith.constant 0 : index
    %440 = vector.load %arg36[%c0_181, %c0_182] : memref<1x32xf32, #tpu.memory_space<vmem>>, vector<1x32xf32>
    %441 = vector.broadcast %440 : vector<1x32xf32> to vector<2x32xf32>
    %442 = arith.addf %439, %441 : vector<2x32xf32>
    %cst_183 = arith.constant dense<0.000000e+00> : vector<2xf32>
    %443 = vector.multi_reduction <add>, %442, %cst_183 [1] : vector<2x32xf32> to vector<2xf32>
    %444 = vector.shape_cast %443 : vector<2xf32> to vector<2x1xf32>
    %cst_184 = arith.constant 3.200000e+01 : f32
    %445 = vector.broadcast %cst_184 : f32 to vector<2x1xf32>
    %446 = arith.divf %444, %445 : vector<2x1xf32>
    %447 = arith.mulf %442, %442 : vector<2x32xf32>
    %cst_185 = arith.constant dense<0.000000e+00> : vector<2xf32>
    %448 = vector.multi_reduction <add>, %447, %cst_185 [1] : vector<2x32xf32> to vector<2xf32>
    %449 = vector.shape_cast %448 : vector<2xf32> to vector<2x1xf32>
    %cst_186 = arith.constant 3.200000e+01 : f32
    %450 = vector.broadcast %cst_186 : f32 to vector<2x1xf32>
    %451 = arith.divf %449, %450 : vector<2x1xf32>
    %452 = arith.mulf %446, %446 : vector<2x1xf32>
    %453 = arith.subf %451, %452 : vector<2x1xf32>
    %cst_187 = arith.constant 0.000000e+00 : f32
    %454 = vector.broadcast %cst_187 : f32 to vector<2x1xf32>
    %455 = arith.maximumf %453, %454 : vector<2x1xf32>
    %456 = vector.broadcast %446 : vector<2x1xf32> to vector<2x32xf32>
    %457 = arith.subf %442, %456 : vector<2x32xf32>
    %cst_188 = arith.constant 9.99999974E-6 : f32
    %458 = vector.broadcast %cst_188 : f32 to vector<2x1xf32>
    %459 = arith.addf %455, %458 : vector<2x1xf32>
    %460 = math.rsqrt %459 : vector<2x1xf32>
    %461 = vector.broadcast %460 : vector<2x1xf32> to vector<2x32xf32>
    %462 = arith.mulf %457, %461 : vector<2x32xf32>
    %c0_189 = arith.constant 0 : index
    %c0_190 = arith.constant 0 : index
    %463 = vector.load %arg37[%c0_189, %c0_190] : memref<1x32xf32, #tpu.memory_space<vmem>>, vector<1x32xf32>
    %464 = vector.broadcast %463 : vector<1x32xf32> to vector<2x32xf32>
    %465 = arith.mulf %462, %464 : vector<2x32xf32>
    %c0_191 = arith.constant 0 : index
    %c0_192 = arith.constant 0 : index
    %466 = vector.load %arg38[%c0_191, %c0_192] : memref<1x32xf32, #tpu.memory_space<vmem>>, vector<1x32xf32>
    %467 = vector.broadcast %466 : vector<1x32xf32> to vector<2x32xf32>
    %468 = arith.addf %465, %467 : vector<2x32xf32>
    %cst_193 = arith.constant 5.000000e-01 : f32
    %469 = vector.broadcast %cst_193 : f32 to vector<2x32xf32>
    %470 = arith.mulf %469, %468 : vector<2x32xf32>
    %cst_194 = arith.constant 4.471500e-02 : f32
    %471 = vector.broadcast %cst_194 : f32 to vector<2x32xf32>
    %472 = arith.mulf %471, %468 : vector<2x32xf32>
    %473 = arith.mulf %472, %468 : vector<2x32xf32>
    %474 = arith.mulf %473, %468 : vector<2x32xf32>
    %475 = arith.addf %468, %474 : vector<2x32xf32>
    %cst_195 = arith.constant 0.797884583 : f32
    %476 = vector.broadcast %cst_195 : f32 to vector<2x32xf32>
    %477 = arith.mulf %476, %475 : vector<2x32xf32>
    %478 = math.tanh %477 : vector<2x32xf32>
    %cst_196 = arith.constant 1.000000e+00 : f32
    %479 = vector.broadcast %cst_196 : f32 to vector<2x32xf32>
    %480 = arith.addf %479, %478 : vector<2x32xf32>
    %481 = arith.mulf %470, %480 : vector<2x32xf32>
    %482 = arith.truncf %481 : vector<2x32xf32> to vector<2x32xbf16>
    %c0_197 = arith.constant 0 : index
    %c0_198 = arith.constant 0 : index
    %483 = vector.load %arg39[%c0_197, %c0_198] : memref<32x32xbf16, #tpu.memory_space<vmem>>, vector<32x32xbf16>
    %cst_199 = arith.constant dense<0.000000e+00> : vector<2x32xf32>
    %484 = tpu.matmul %482, %483, %cst_199 {dimension_numbers = #tpu.dot_dimension_numbers<[1], [0], [0], [1], [0, 0, 1, 1], [], []>} : vector<2x32xbf16>, vector<32x32xbf16>, vector<2x32xf32> -> vector<2x32xf32>
    %c0_200 = arith.constant 0 : index
    %c0_201 = arith.constant 0 : index
    %485 = vector.load %arg40[%c0_200, %c0_201] : memref<1x32xf32, #tpu.memory_space<vmem>>, vector<1x32xf32>
    %486 = vector.broadcast %485 : vector<1x32xf32> to vector<2x32xf32>
    %487 = arith.addf %484, %486 : vector<2x32xf32>
    %cst_202 = arith.constant dense<0.000000e+00> : vector<2xf32>
    %488 = vector.multi_reduction <add>, %487, %cst_202 [1] : vector<2x32xf32> to vector<2xf32>
    %489 = vector.shape_cast %488 : vector<2xf32> to vector<2x1xf32>
    %cst_203 = arith.constant 3.200000e+01 : f32
    %490 = vector.broadcast %cst_203 : f32 to vector<2x1xf32>
    %491 = arith.divf %489, %490 : vector<2x1xf32>
    %492 = arith.mulf %487, %487 : vector<2x32xf32>
    %cst_204 = arith.constant dense<0.000000e+00> : vector<2xf32>
    %493 = vector.multi_reduction <add>, %492, %cst_204 [1] : vector<2x32xf32> to vector<2xf32>
    %494 = vector.shape_cast %493 : vector<2xf32> to vector<2x1xf32>
    %cst_205 = arith.constant 3.200000e+01 : f32
    %495 = vector.broadcast %cst_205 : f32 to vector<2x1xf32>
    %496 = arith.divf %494, %495 : vector<2x1xf32>
    %497 = arith.mulf %491, %491 : vector<2x1xf32>
    %498 = arith.subf %496, %497 : vector<2x1xf32>
    %cst_206 = arith.constant 0.000000e+00 : f32
    %499 = vector.broadcast %cst_206 : f32 to vector<2x1xf32>
    %500 = arith.maximumf %498, %499 : vector<2x1xf32>
    %501 = vector.broadcast %491 : vector<2x1xf32> to vector<2x32xf32>
    %502 = arith.subf %487, %501 : vector<2x32xf32>
    %cst_207 = arith.constant 9.99999974E-6 : f32
    %503 = vector.broadcast %cst_207 : f32 to vector<2x1xf32>
    %504 = arith.addf %500, %503 : vector<2x1xf32>
    %505 = math.rsqrt %504 : vector<2x1xf32>
    %506 = vector.broadcast %505 : vector<2x1xf32> to vector<2x32xf32>
    %507 = arith.mulf %502, %506 : vector<2x32xf32>
    %c0_208 = arith.constant 0 : index
    %c0_209 = arith.constant 0 : index
    %508 = vector.load %arg41[%c0_208, %c0_209] : memref<1x32xf32, #tpu.memory_space<vmem>>, vector<1x32xf32>
    %509 = vector.broadcast %508 : vector<1x32xf32> to vector<2x32xf32>
    %510 = arith.mulf %507, %509 : vector<2x32xf32>
    %c0_210 = arith.constant 0 : index
    %c0_211 = arith.constant 0 : index
    %511 = vector.load %arg42[%c0_210, %c0_211] : memref<1x32xf32, #tpu.memory_space<vmem>>, vector<1x32xf32>
    %512 = vector.broadcast %511 : vector<1x32xf32> to vector<2x32xf32>
    %513 = arith.addf %510, %512 : vector<2x32xf32>
    %cst_212 = arith.constant 5.000000e-01 : f32
    %514 = vector.broadcast %cst_212 : f32 to vector<2x32xf32>
    %515 = arith.mulf %514, %513 : vector<2x32xf32>
    %cst_213 = arith.constant 4.471500e-02 : f32
    %516 = vector.broadcast %cst_213 : f32 to vector<2x32xf32>
    %517 = arith.mulf %516, %513 : vector<2x32xf32>
    %518 = arith.mulf %517, %513 : vector<2x32xf32>
    %519 = arith.mulf %518, %513 : vector<2x32xf32>
    %520 = arith.addf %513, %519 : vector<2x32xf32>
    %cst_214 = arith.constant 0.797884583 : f32
    %521 = vector.broadcast %cst_214 : f32 to vector<2x32xf32>
    %522 = arith.mulf %521, %520 : vector<2x32xf32>
    %523 = math.tanh %522 : vector<2x32xf32>
    %cst_215 = arith.constant 1.000000e+00 : f32
    %524 = vector.broadcast %cst_215 : f32 to vector<2x32xf32>
    %525 = arith.addf %524, %523 : vector<2x32xf32>
    %526 = arith.mulf %515, %525 : vector<2x32xf32>
    %527 = arith.truncf %526 : vector<2x32xf32> to vector<2x32xbf16>
    %c0_216 = arith.constant 0 : index
    %c0_217 = arith.constant 0 : index
    %528 = vector.load %arg43[%c0_216, %c0_217] : memref<32x25xbf16, #tpu.memory_space<vmem>>, vector<32x25xbf16>
    %cst_218 = arith.constant dense<0.000000e+00> : vector<2x25xf32>
    %529 = tpu.matmul %527, %528, %cst_218 {dimension_numbers = #tpu.dot_dimension_numbers<[1], [0], [0], [1], [0, 0, 1, 1], [], []>} : vector<2x32xbf16>, vector<32x25xbf16>, vector<2x25xf32> -> vector<2x25xf32>
    %c0_219 = arith.constant 0 : index
    %c0_220 = arith.constant 0 : index
    %530 = vector.load %arg44[%c0_219, %c0_220] : memref<1x25xf32, #tpu.memory_space<vmem>>, vector<1x25xf32>
    %531 = vector.broadcast %530 : vector<1x25xf32> to vector<2x25xf32>
    %532 = arith.addf %529, %531 : vector<2x25xf32>
    %533 = tpu.concatenate %7, %532, %391 in 1 : vector<2x25xf32>, vector<2x25xf32>, vector<2x16xf32> -> vector<2x66xf32>
    %c0_221 = arith.constant 0 : index
    %c0_222 = arith.constant 0 : index
    %534 = vector.load %arg45[%c0_221, %c0_222] : memref<2x66xf32, #tpu.memory_space<vmem>>, vector<2x66xf32>
    tpu.vector_store %arg45[%c0_221, %c0_222], %533 {strides = array<i32>} : memref<2x66xf32, #tpu.memory_space<vmem>>, vector<2x66xf32>,
    return
  }
  func.func @transform_0(%arg0: i32) -> (i32, i32, i32) {
    %c0_i32 = arith.constant 0 : i32
    %c0_i32_0 = arith.constant 0 : i32
    %c0_i32_1 = arith.constant 0 : i32
    return %c0_i32, %arg0, %c0_i32_0 : i32, i32, i32
  }
  func.func @transform_1(%arg0: i32) -> (i32, i32) {
    %c0_i32 = arith.constant 0 : i32
    %c0_i32_0 = arith.constant 0 : i32
    %c0_i32_1 = arith.constant 0 : i32
    return %c0_i32, %c0_i32_0 : i32, i32
  }
  func.func @transform_2(%arg0: i32) -> (i32, i32) {
    %c0_i32 = arith.constant 0 : i32
    %c0_i32_0 = arith.constant 0 : i32
    %c0_i32_1 = arith.constant 0 : i32
    return %c0_i32, %c0_i32_0 : i32, i32
  }
  func.func @transform_3(%arg0: i32) -> (i32, i32) {
    %c0_i32 = arith.constant 0 : i32
    %c0_i32_0 = arith.constant 0 : i32
    %c0_i32_1 = arith.constant 0 : i32
    return %c0_i32, %c0_i32_0 : i32, i32
  }
  func.func @transform_4(%arg0: i32) -> (i32, i32) {
    %c0_i32 = arith.constant 0 : i32
    %c0_i32_0 = arith.constant 0 : i32
    %c0_i32_1 = arith.constant 0 : i32
    return %c0_i32, %c0_i32_0 : i32, i32
  }
  func.func @transform_5(%arg0: i32) -> (i32, i32) {
    %c0_i32 = arith.constant 0 : i32
    %c0_i32_0 = arith.constant 0 : i32
    %c0_i32_1 = arith.constant 0 : i32
    return %c0_i32, %c0_i32_0 : i32, i32
  }
  func.func @transform_6(%arg0: i32) -> (i32, i32) {
    %c0_i32 = arith.constant 0 : i32
    %c0_i32_0 = arith.constant 0 : i32
    %c0_i32_1 = arith.constant 0 : i32
    return %c0_i32, %c0_i32_0 : i32, i32
  }
  func.func @transform_7(%arg0: i32) -> (i32, i32) {
    %c0_i32 = arith.constant 0 : i32
    %c0_i32_0 = arith.constant 0 : i32
    %c0_i32_1 = arith.constant 0 : i32
    return %c0_i32, %c0_i32_0 : i32, i32
  }
  func.func @transform_8(%arg0: i32) -> (i32, i32) {
    %c0_i32 = arith.constant 0 : i32
    %c0_i32_0 = arith.constant 0 : i32
    %c0_i32_1 = arith.constant 0 : i32
    return %c0_i32, %c0_i32_0 : i32, i32
  }
  func.func @transform_9(%arg0: i32) -> (i32, i32) {
    %c0_i32 = arith.constant 0 : i32
    %c0_i32_0 = arith.constant 0 : i32
    %c0_i32_1 = arith.constant 0 : i32
    return %c0_i32, %c0_i32_0 : i32, i32
  }
  func.func @transform_10(%arg0: i32) -> (i32, i32) {
    %c0_i32 = arith.constant 0 : i32
    %c0_i32_0 = arith.constant 0 : i32
    %c0_i32_1 = arith.constant 0 : i32
    return %c0_i32, %c0_i32_0 : i32, i32
  }
  func.func @transform_11(%arg0: i32) -> (i32, i32) {
    %c0_i32 = arith.constant 0 : i32
    %c0_i32_0 = arith.constant 0 : i32
    %c0_i32_1 = arith.constant 0 : i32
    return %c0_i32, %c0_i32_0 : i32, i32
  }
  func.func @transform_12(%arg0: i32) -> (i32, i32) {
    %c0_i32 = arith.constant 0 : i32
    %c0_i32_0 = arith.constant 0 : i32
    %c0_i32_1 = arith.constant 0 : i32
    return %c0_i32, %c0_i32_0 : i32, i32
  }
  func.func @transform_13(%arg0: i32) -> (i32, i32) {
    %c0_i32 = arith.constant 0 : i32
    %c0_i32_0 = arith.constant 0 : i32
    %c0_i32_1 = arith.constant 0 : i32
    return %c0_i32, %c0_i32_0 : i32, i32
  }
  func.func @transform_14(%arg0: i32) -> (i32, i32) {
    %c0_i32 = arith.constant 0 : i32
    %c0_i32_0 = arith.constant 0 : i32
    %c0_i32_1 = arith.constant 0 : i32
    return %c0_i32, %c0_i32_0 : i32, i32
  }
  func.func @transform_15(%arg0: i32) -> (i32, i32) {
    %c0_i32 = arith.constant 0 : i32
    %c0_i32_0 = arith.constant 0 : i32
    %c0_i32_1 = arith.constant 0 : i32
    return %c0_i32, %c0_i32_0 : i32, i32
  }
  func.func @transform_16(%arg0: i32) -> (i32, i32) {
    %c0_i32 = arith.constant 0 : i32
    %c0_i32_0 = arith.constant 0 : i32
    %c0_i32_1 = arith.constant 0 : i32
    return %c0_i32, %c0_i32_0 : i32, i32
  }
  func.func @transform_17(%arg0: i32) -> (i32, i32) {
    %c0_i32 = arith.constant 0 : i32
    %c0_i32_0 = arith.constant 0 : i32
    %c0_i32_1 = arith.constant 0 : i32
    return %c0_i32, %c0_i32_0 : i32, i32
  }
  func.func @transform_18(%arg0: i32) -> (i32, i32) {
    %c0_i32 = arith.constant 0 : i32
    %c0_i32_0 = arith.constant 0 : i32
    %c0_i32_1 = arith.constant 0 : i32
    return %c0_i32, %c0_i32_0 : i32, i32
  }
  func.func @transform_19(%arg0: i32) -> (i32, i32) {
    %c0_i32 = arith.constant 0 : i32
    %c0_i32_0 = arith.constant 0 : i32
    %c0_i32_1 = arith.constant 0 : i32
    return %c0_i32, %c0_i32_0 : i32, i32
  }
  func.func @transform_20(%arg0: i32) -> (i32, i32) {
    %c0_i32 = arith.constant 0 : i32
    %c0_i32_0 = arith.constant 0 : i32
    %c0_i32_1 = arith.constant 0 : i32
    return %c0_i32, %c0_i32_0 : i32, i32
  }
  func.func @transform_21(%arg0: i32) -> (i32, i32) {
    %c0_i32 = arith.constant 0 : i32
    %c0_i32_0 = arith.constant 0 : i32
    %c0_i32_1 = arith.constant 0 : i32
    return %c0_i32, %c0_i32_0 : i32, i32
  }
  func.func @transform_22(%arg0: i32) -> (i32, i32) {
    %c0_i32 = arith.constant 0 : i32
    %c0_i32_0 = arith.constant 0 : i32
    %c0_i32_1 = arith.constant 0 : i32
    return %c0_i32, %c0_i32_0 : i32, i32
  }
  func.func @transform_23(%arg0: i32) -> (i32, i32) {
    %c0_i32 = arith.constant 0 : i32
    %c0_i32_0 = arith.constant 0 : i32
    %c0_i32_1 = arith.constant 0 : i32
    return %c0_i32, %c0_i32_0 : i32, i32
  }
  func.func @transform_24(%arg0: i32) -> (i32, i32) {
    %c0_i32 = arith.constant 0 : i32
    %c0_i32_0 = arith.constant 0 : i32
    %c0_i32_1 = arith.constant 0 : i32
    return %c0_i32, %c0_i32_0 : i32, i32
  }
  func.func @transform_25(%arg0: i32) -> (i32, i32) {
    %c0_i32 = arith.constant 0 : i32
    %c0_i32_0 = arith.constant 0 : i32
    %c0_i32_1 = arith.constant 0 : i32
    return %c0_i32, %c0_i32_0 : i32, i32
  }
  func.func @transform_26(%arg0: i32) -> (i32, i32) {
    %c0_i32 = arith.constant 0 : i32
    %c0_i32_0 = arith.constant 0 : i32
    %c0_i32_1 = arith.constant 0 : i32
    return %c0_i32, %c0_i32_0 : i32, i32
  }
  func.func @transform_27(%arg0: i32) -> (i32, i32) {
    %c0_i32 = arith.constant 0 : i32
    %c0_i32_0 = arith.constant 0 : i32
    %c0_i32_1 = arith.constant 0 : i32
    return %c0_i32, %c0_i32_0 : i32, i32
  }
  func.func @transform_28(%arg0: i32) -> (i32, i32) {
    %c0_i32 = arith.constant 0 : i32
    %c0_i32_0 = arith.constant 0 : i32
    %c0_i32_1 = arith.constant 0 : i32
    return %c0_i32, %c0_i32_0 : i32, i32
  }
  func.func @transform_29(%arg0: i32) -> (i32, i32) {
    %c0_i32 = arith.constant 0 : i32
    %c0_i32_0 = arith.constant 0 : i32
    %c0_i32_1 = arith.constant 0 : i32
    return %c0_i32, %c0_i32_0 : i32, i32
  }
  func.func @transform_30(%arg0: i32) -> (i32, i32) {
    %c0_i32 = arith.constant 0 : i32
    %c0_i32_0 = arith.constant 0 : i32
    %c0_i32_1 = arith.constant 0 : i32
    return %c0_i32, %c0_i32_0 : i32, i32
  }
  func.func @transform_31(%arg0: i32) -> (i32, i32) {
    %c0_i32 = arith.constant 0 : i32
    %c0_i32_0 = arith.constant 0 : i32
    %c0_i32_1 = arith.constant 0 : i32
    return %c0_i32, %c0_i32_0 : i32, i32
  }
  func.func @transform_32(%arg0: i32) -> (i32, i32) {
    %c0_i32 = arith.constant 0 : i32
    %c0_i32_0 = arith.constant 0 : i32
    %c0_i32_1 = arith.constant 0 : i32
    return %c0_i32, %c0_i32_0 : i32, i32
  }
  func.func @transform_33(%arg0: i32) -> (i32, i32) {
    %c0_i32 = arith.constant 0 : i32
    %c0_i32_0 = arith.constant 0 : i32
    %c0_i32_1 = arith.constant 0 : i32
    return %c0_i32, %c0_i32_0 : i32, i32
  }
  func.func @transform_34(%arg0: i32) -> (i32, i32) {
    %c0_i32 = arith.constant 0 : i32
    %c0_i32_0 = arith.constant 0 : i32
    %c0_i32_1 = arith.constant 0 : i32
    return %c0_i32, %c0_i32_0 : i32, i32
  }
  func.func @transform_35(%arg0: i32) -> (i32, i32) {
    %c0_i32 = arith.constant 0 : i32
    %c0_i32_0 = arith.constant 0 : i32
    %c0_i32_1 = arith.constant 0 : i32
    return %c0_i32, %c0_i32_0 : i32, i32
  }
  func.func @transform_36(%arg0: i32) -> (i32, i32) {
    %c0_i32 = arith.constant 0 : i32
    %c0_i32_0 = arith.constant 0 : i32
    %c0_i32_1 = arith.constant 0 : i32
    return %c0_i32, %c0_i32_0 : i32, i32
  }
  func.func @transform_37(%arg0: i32) -> (i32, i32) {
    %c0_i32 = arith.constant 0 : i32
    %c0_i32_0 = arith.constant 0 : i32
    %c0_i32_1 = arith.constant 0 : i32
    return %c0_i32, %c0_i32_0 : i32, i32
  }
  func.func @transform_38(%arg0: i32) -> (i32, i32) {
    %c0_i32 = arith.constant 0 : i32
    %c0_i32_0 = arith.constant 0 : i32
    %c0_i32_1 = arith.constant 0 : i32
    return %c0_i32, %c0_i32_0 : i32, i32
  }
  func.func @transform_39(%arg0: i32) -> (i32, i32) {
    %c0_i32 = arith.constant 0 : i32
    %c0_i32_0 = arith.constant 0 : i32
    %c0_i32_1 = arith.constant 0 : i32
    return %c0_i32, %c0_i32_0 : i32, i32
  }
  func.func @transform_40(%arg0: i32) -> (i32, i32) {
    %c0_i32 = arith.constant 0 : i32
    %c0_i32_0 = arith.constant 0 : i32
    %c0_i32_1 = arith.constant 0 : i32
    return %c0_i32, %c0_i32_0 : i32, i32
  }
  func.func @transform_41(%arg0: i32) -> (i32, i32) {
    %c0_i32 = arith.constant 0 : i32
    %c0_i32_0 = arith.constant 0 : i32
    %c0_i32_1 = arith.constant 0 : i32
    return %c0_i32, %c0_i32_0 : i32, i32
  }
  func.func @transform_42(%arg0: i32) -> (i32, i32) {
    %c0_i32 = arith.constant 0 : i32
    %c0_i32_0 = arith.constant 0 : i32
    %c0_i32_1 = arith.constant 0 : i32
    return %c0_i32, %c0_i32_0 : i32, i32
  }
  func.func @transform_43(%arg0: i32) -> (i32, i32) {
    %c0_i32 = arith.constant 0 : i32
    %c0_i32_0 = arith.constant 0 : i32
    %c0_i32_1 = arith.constant 0 : i32
    return %c0_i32, %c0_i32_0 : i32, i32
  }
  func.func @transform_44(%arg0: i32) -> (i32, i32) {
    %c0_i32 = arith.constant 0 : i32
    %c0_i32_0 = arith.constant 0 : i32
    return %arg0, %c0_i32 : i32, i32
  }
}

</mosaic_0001>

<llo_original>
// kernel: tpu_custom_call.1
$region0: #{tpu_custom_call.1}
  #allocation0 [shape = 'u32[]', space=smem, size = 0x4, offset = 0x4, fixed_abs, tag = 'smem constant byte address 0x4 - core index']
  #allocation1 [shape = 'u32[144,128]{1,0:T(1,128)}', space=vmem, size = 0x12000, scoped, tag = 'internal scratch']
  %s0 = inlined_call_operand.smem [shape: u32[45], index: -1, kind: input, shape index: {}]
  %s1 = sld [smem:[%s0]]
  %s2 = scalar_lea.smem %s0, 1
  %s3 = sld [smem:[%s2]]
  %s4 = scalar_lea.smem %s0, 2
  %s5 = sld [smem:[%s4]]
  %s6 = scalar_lea.smem %s0, 3
  %s7 = sld [smem:[%s6]]
  %s8 = scalar_lea.smem %s0, 4
  %s9 = sld [smem:[%s8]]
  %s10 = scalar_lea.smem %s0, 5
  %s11 = sld [smem:[%s10]]
  %s12 = scalar_lea.smem %s0, 6
  %s13 = sld [smem:[%s12]]
  %s14 = scalar_lea.smem %s0, 7
  %s15 = sld [smem:[%s14]]
  %s16 = scalar_lea.smem %s0, 8
  %s17 = sld [smem:[%s16]]
  %s18 = scalar_lea.smem %s0, 9
  %s19 = sld [smem:[%s18]]
  %s20 = scalar_lea.smem %s0, 10
  %s21 = sld [smem:[%s20]]
  %s22 = scalar_lea.smem %s0, 11
  %s23 = sld [smem:[%s22]]
  %s24 = scalar_lea.smem %s0, 12
  %s25 = sld [smem:[%s24]]
  %s26 = scalar_lea.smem %s0, 13
  %s27 = sld [smem:[%s26]]
  %s28 = scalar_lea.smem %s0, 14
  %s29 = sld [smem:[%s28]]
  %s30 = scalar_lea.smem %s0, 15
  %s31 = sld [smem:[%s30]]
  %s32 = scalar_lea.smem %s0, 16
  %s33 = sld [smem:[%s32]]
  %s34 = scalar_lea.smem %s0, 17
  %s35 = sld [smem:[%s34]]
  %s36 = scalar_lea.smem %s0, 18
  %s37 = sld [smem:[%s36]]
  %s38 = scalar_lea.smem %s0, 19
  %s39 = sld [smem:[%s38]]
  %s40 = scalar_lea.smem %s0, 20
  %s41 = sld [smem:[%s40]]
  %s42 = scalar_lea.smem %s0, 21
  %s43 = sld [smem:[%s42]]
  %s44 = scalar_lea.smem %s0, 22
  %s45 = sld [smem:[%s44]]
  %s46 = scalar_lea.smem %s0, 23
  %s47 = sld [smem:[%s46]]
  %s48 = scalar_lea.smem %s0, 24
  %s49 = sld [smem:[%s48]]
  %s50 = scalar_lea.smem %s0, 25
  %s51 = sld [smem:[%s50]]
  %s52 = scalar_lea.smem %s0, 26
  %s53 = sld [smem:[%s52]]
  %s54 = scalar_lea.smem %s0, 27
  %s55 = sld [smem:[%s54]]
  %s56 = scalar_lea.smem %s0, 28
  %s57 = sld [smem:[%s56]]
  %s58 = scalar_lea.smem %s0, 29
  %s59 = sld [smem:[%s58]]
  %s60 = scalar_lea.smem %s0, 30
  %s61 = sld [smem:[%s60]]
  %s62 = scalar_lea.smem %s0, 31
  %s63 = sld [smem:[%s62]]
  %s64 = scalar_lea.smem %s0, 32
  %s65 = sld [smem:[%s64]]
  %s66 = scalar_lea.smem %s0, 33
  %s67 = sld [smem:[%s66]]
  %s68 = scalar_lea.smem %s0, 34
  %s69 = sld [smem:[%s68]]
  %s70 = scalar_lea.smem %s0, 35
  %s71 = sld [smem:[%s70]]
  %s72 = scalar_lea.smem %s0, 36
  %s73 = sld [smem:[%s72]]
  %s74 = scalar_lea.smem %s0, 37
  %s75 = sld [smem:[%s74]]
  %s76 = scalar_lea.smem %s0, 38
  %s77 = sld [smem:[%s76]]
  %s78 = scalar_lea.smem %s0, 39
  %s79 = sld [smem:[%s78]]
  %s80 = scalar_lea.smem %s0, 40
  %s81 = sld [smem:[%s80]]
  %s82 = scalar_lea.smem %s0, 41
  %s83 = sld [smem:[%s82]]
  %s84 = scalar_lea.smem %s0, 42
  %s85 = sld [smem:[%s84]]
  %s86 = scalar_lea.smem %s0, 43
  %s87 = sld [smem:[%s86]]
  %s88 = scalar_lea.smem %s0, 44
  %s89 = sld [smem:[%s88]]
  %s90 = sld [smem:[#allocation0]]
  $region286: #{tpu_custom_call.1} parent=0
    _
  %s92 = ssub.s32 1, %s90
  %s93 = scalar_select 0, %s92, %s90
  $region1: #{tpu_custom_call.1} parent=0
    #allocation2 [shape = 'u8[3072]{0}', space=vmem, size = 0xc00, scoped, tag = 'input window, operand 0, single buffered']
    #allocation3 [shape = 's32[1]{0}', space=sflag, size = 0x4, scoped, tag = 'scoped memory for tpu_custom_call.1']
    #allocation4 [shape = 's32[1]{0}', space=sflag, size = 0x4, scoped, tag = 'scoped memory for tpu_custom_call.1']
    #allocation5 [shape = 'u8[32768]{0}', space=vmem, size = 0x8000, scoped, tag = 'input window, operand 1, single buffered']
    #allocation6 [shape = 's32[1]{0}', space=sflag, size = 0x4, scoped, tag = 'scoped memory for tpu_custom_call.1']
    #allocation7 [shape = 'u8[2048]{0}', space=vmem, size = 0x800, scoped, tag = 'input window, operand 2, single buffered']
    #allocation8 [shape = 'u8[2048]{0}', space=vmem, size = 0x800, scoped, tag = 'input window, operand 3, single buffered']
    #allocation9 [shape = 's32[1]{0}', space=sflag, size = 0x4, scoped, tag = 'scoped memory for tpu_custom_call.1']
    #allocation10 [shape = 'u8[409600]{0}', space=vmem, size = 0x64000, scoped, tag = 'input window, operand 4, single buffered']
    #allocation11 [shape = 'u8[2048]{0}', space=vmem, size = 0x800, scoped, tag = 'input window, operand 5, single buffered']
    #allocation12 [shape = 's32[1]{0}', space=sflag, size = 0x4, scoped, tag = 'scoped memory for tpu_custom_call.1']
    #allocation13 [shape = 'u8[2048]{0}', space=vmem, size = 0x800, scoped, tag = 'input window, operand 6, single buffered']
    #allocation14 [shape = 'u8[409600]{0}', space=vmem, size = 0x64000, scoped, tag = 'input window, operand 7, single buffered']
    #allocation15 [shape = 's32[1]{0}', space=sflag, size = 0x4, scoped, tag = 'scoped memory for tpu_custom_call.1']
    #allocation16 [shape = 'u8[2048]{0}', space=vmem, size = 0x800, scoped, tag = 'input window, operand 8, single buffered']
    #allocation17 [shape = 'u8[2048]{0}', space=vmem, size = 0x800, scoped, tag = 'input window, operand 9, single buffered']
    #allocation18 [shape = 's32[1]{0}', space=sflag, size = 0x4, scoped, tag = 'scoped memory for tpu_custom_call.1']
    #allocation19 [shape = 'u8[409600]{0}', space=vmem, size = 0x64000, scoped, tag = 'input window, operand 10, single buffered']
    #allocation20 [shape = 'u8[2048]{0}', space=vmem, size = 0x800, scoped, tag = 'input window, operand 11, single buffered']
    #allocation21 [shape = 's32[1]{0}', space=sflag, size = 0x4, scoped, tag = 'scoped memory for tpu_custom_call.1']
    #allocation22 [shape = 'u8[2048]{0}', space=vmem, size = 0x800, scoped, tag = 'input window, operand 12, single buffered']
    #allocation23 [shape = 'u8[1024]{0}', space=vmem, size = 0x400, scoped, tag = 'input window, operand 17, single buffered']
    #allocation24 [shape = 's32[1]{0}', space=sflag, size = 0x4, scoped, tag = 'scoped memory for tpu_custom_call.1']
    #allocation25 [shape = 'u8[1024]{0}', space=vmem, size = 0x400, scoped, tag = 'input window, operand 18, single buffered']
    #allocation26 [shape = 'u8[1024]{0}', space=vmem, size = 0x400, scoped, tag = 'input window, operand 20, single buffered']
    #allocation27 [shape = 's32[1]{0}', space=sflag, size = 0x4, scoped, tag = 'scoped memory for tpu_custom_call.1']
    #allocation28 [shape = 'u8[1024]{0}', space=vmem, size = 0x400, scoped, tag = 'input window, operand 21, single buffered']
    #allocation29 [shape = 'u8[1024]{0}', space=vmem, size = 0x400, scoped, tag = 'input window, operand 23, single buffered']
    #allocation30 [shape = 's32[1]{0}', space=sflag, size = 0x4, scoped, tag = 'scoped memory for tpu_custom_call.1']
    #allocation31 [shape = 'u8[1024]{0}', space=vmem, size = 0x400, scoped, tag = 'input window, operand 24, single buffered']
    #allocation32 [shape = 'u8[1024]{0}', space=vmem, size = 0x400, scoped, tag = 'input window, operand 27, single buffered']
    #allocation33 [shape = 's32[1]{0}', space=sflag, size = 0x4, scoped, tag = 'scoped memory for tpu_custom_call.1']
    #allocation34 [shape = 'u8[512]{0}', space=vmem, size = 0x400, scoped, tag = 'input window, operand 29, single buffered']
    #allocation35 [shape = 'u8[4096]{0}', space=vmem, size = 0x1000, scoped, tag = 'input window, operand 30, single buffered']
    #allocation36 [shape = 's32[1]{0}', space=sflag, size = 0x4, scoped, tag = 'scoped memory for tpu_custom_call.1']
    #allocation37 [shape = 'u8[512]{0}', space=vmem, size = 0x400, scoped, tag = 'input window, operand 31, single buffered']
    #allocation38 [shape = 'u8[512]{0}', space=vmem, size = 0x400, scoped, tag = 'input window, operand 32, single buffered']
    #allocation39 [shape = 's32[1]{0}', space=sflag, size = 0x4, scoped, tag = 'scoped memory for tpu_custom_call.1']
    #allocation40 [shape = 'u8[512]{0}', space=vmem, size = 0x400, scoped, tag = 'input window, operand 33, single buffered']
    #allocation41 [shape = 'u8[1024]{0}', space=vmem, size = 0x400, scoped, tag = 'output window, operand 0, single buffered']
    %94 = vsyncpa [#allocation3], 0
    %95 = vsyncpa [#allocation6], 0
    %96 = vsyncpa [#allocation9], 0
    %97 = vsyncpa [#allocation12], 0
    %98 = vsyncpa [#allocation15], 0
    %99 = vsyncpa [#allocation18], 0
    %100 = vsyncpa [#allocation21], 0
    %101 = vsyncpa [#allocation24], 0
    %102 = vsyncpa [#allocation27], 0
    %103 = vsyncpa [#allocation30], 0
    %104 = vsyncpa [#allocation33], 0
    %105 = vsyncpa [#allocation36], 0
    %106 = vsyncpa [#allocation39], 0
    %107 = vsyncpa [#allocation4], 0
    // Predicated region
    $region2: #{tpu_custom_call.1} parent=1 // pred_check
      _
    $region3: #{tpu_custom_call.1} parent=1 // pred_check_branch
      %109 = sbr.rel (0) target = $region5
    $region4: #{tpu_custom_call.1} parent=1 // pred_region
      %s111 = ssub.s32 96, 96
      %112 = vsyncadd [#allocation3], %s111
      %s113 = sshll.u32 [#allocation2], 4
      %s114 = int_to_ptr.vmem [resolvable:$true] %s113
      %119 = dma.hbm_to_vmem [thread:$0]  %s1, 96, %s114, [#allocation3], 32, 32, 2
    $region5: #{tpu_custom_call.1} parent=1 // pred_fallthru
      _
    // Predicated region
    $region6: #{tpu_custom_call.1} parent=1 // pred_check
      _
    $region7: #{tpu_custom_call.1} parent=1 // pred_check_branch
      %121 = sbr.rel (0) target = $region9
    $region8: #{tpu_custom_call.1} parent=1 // pred_region
      %s123 = ssub.s32 1024, 1024
      %124 = vsyncadd [#allocation6], %s123
      %s125 = sshll.u32 [#allocation5], 4
      %s126 = int_to_ptr.vmem [resolvable:$true] %s125
      %131 = dma.hbm_to_vmem [thread:$0]  %s3, 1024, %s126, [#allocation6], 256, 256, 16
    $region9: #{tpu_custom_call.1} parent=1 // pred_fallthru
      _
    // Predicated region
    $region10: #{tpu_custom_call.1} parent=1 // pred_check
      _
    $region11: #{tpu_custom_call.1} parent=1 // pred_check_branch
      %133 = sbr.rel (0) target = $region13
    $region12: #{tpu_custom_call.1} parent=1 // pred_region
      %s135 = ssub.s32 64, 64
      %136 = vsyncadd [#allocation6], %s135
      %s138 = sshll.u32 [#allocation7], 4
      %s139 = int_to_ptr.vmem [resolvable:$true] %s138
      %141 = dma.hbm_to_vmem [thread:$0]  %s5, 64, %s139, [#allocation6]
    $region13: #{tpu_custom_call.1} parent=1 // pred_fallthru
      _
    // Predicated region
    $region14: #{tpu_custom_call.1} parent=1 // pred_check
      _
    $region15: #{tpu_custom_call.1} parent=1 // pred_check_branch
      %143 = sbr.rel (0) target = $region17
    $region16: #{tpu_custom_call.1} parent=1 // pred_region
      %s145 = ssub.s32 64, 64
      %146 = vsyncadd [#allocation9], %s145
      %s148 = sshll.u32 [#allocation8], 4
      %s149 = int_to_ptr.vmem [resolvable:$true] %s148
      %151 = dma.hbm_to_vmem [thread:$0]  %s7, 64, %s149, [#allocation9]
    $region17: #{tpu_custom_call.1} parent=1 // pred_fallthru
      _
    // Predicated region
    $region18: #{tpu_custom_call.1} parent=1 // pred_check
      _
    $region19: #{tpu_custom_call.1} parent=1 // pred_check_branch
      %153 = sbr.rel (0) target = $region21
    $region20: #{tpu_custom_call.1} parent=1 // pred_region
      %s155 = ssub.s32 12800, 12800
      %156 = vsyncadd [#allocation9], %s155
      %s157 = sshll.u32 [#allocation10], 4
      %s158 = int_to_ptr.vmem [resolvable:$true] %s157
      %163 = dma.hbm_to_vmem [thread:$0]  %s9, 12800, %s158, [#allocation9], 256, 256, 16
    $region21: #{tpu_custom_call.1} parent=1 // pred_fallthru
      _
    // Predicated region
    $region22: #{tpu_custom_call.1} parent=1 // pred_check
      _
    $region23: #{tpu_custom_call.1} parent=1 // pred_check_branch
      %165 = sbr.rel (0) target = $region25
    $region24: #{tpu_custom_call.1} parent=1 // pred_region
      %s167 = ssub.s32 64, 64
      %168 = vsyncadd [#allocation12], %s167
      %s170 = sshll.u32 [#allocation11], 4
      %s171 = int_to_ptr.vmem [resolvable:$true] %s170
      %173 = dma.hbm_to_vmem [thread:$0]  %s11, 64, %s171, [#allocation12]
    $region25: #{tpu_custom_call.1} parent=1 // pred_fallthru
      _
    // Predicated region
    $region26: #{tpu_custom_call.1} parent=1 // pred_check
      _
    $region27: #{tpu_custom_call.1} parent=1 // pred_check_branch
      %175 = sbr.rel (0) target = $region29
    $region28: #{tpu_custom_call.1} parent=1 // pred_region
      %s177 = ssub.s32 64, 64
      %178 = vsyncadd [#allocation12], %s177
      %s180 = sshll.u32 [#allocation13], 4
      %s181 = int_to_ptr.vmem [resolvable:$true] %s180
      %183 = dma.hbm_to_vmem [thread:$0]  %s13, 64, %s181, [#allocation12]
    $region29: #{tpu_custom_call.1} parent=1 // pred_fallthru
      _
    // Predicated region
    $region30: #{tpu_custom_call.1} parent=1 // pred_check
      _
    $region31: #{tpu_custom_call.1} parent=1 // pred_check_branch
      %185 = sbr.rel (0) target = $region33
    $region32: #{tpu_custom_call.1} parent=1 // pred_region
      %s187 = ssub.s32 12800, 12800
      %188 = vsyncadd [#allocation15], %s187
      %s189 = sshll.u32 [#allocation14], 4
      %s190 = int_to_ptr.vmem [resolvable:$true] %s189
      %195 = dma.hbm_to_vmem [thread:$0]  %s15, 12800, %s190, [#allocation15], 256, 256, 16
    $region33: #{tpu_custom_call.1} parent=1 // pred_fallthru
      _
    // Predicated region
    $region34: #{tpu_custom_call.1} parent=1 // pred_check
      _
    $region35: #{tpu_custom_call.1} parent=1 // pred_check_branch
      %197 = sbr.rel (0) target = $region37
    $region36: #{tpu_custom_call.1} parent=1 // pred_region
      %s199 = ssub.s32 64, 64
      %200 = vsyncadd [#allocation15], %s199
      %s202 = sshll.u32 [#allocation16], 4
      %s203 = int_to_ptr.vmem [resolvable:$true] %s202
      %205 = dma.hbm_to_vmem [thread:$0]  %s17, 64, %s203, [#allocation15]
    $region37: #{tpu_custom_call.1} parent=1 // pred_fallthru
      _
    // Predicated region
    $region38: #{tpu_custom_call.1} parent=1 // pred_check
      _
    $region39: #{tpu_custom_call.1} parent=1 // pred_check_branch
      %207 = sbr.rel (0) target = $region41
    $region40: #{tpu_custom_call.1} parent=1 // pred_region
      %s209 = ssub.s32 64, 64
      %210 = vsyncadd [#allocation18], %s209
      %s212 = sshll.u32 [#allocation17], 4
      %s213 = int_to_ptr.vmem [resolvable:$true] %s212
      %215 = dma.hbm_to_vmem [thread:$0]  %s19, 64, %s213, [#allocation18]
    $region41: #{tpu_custom_call.1} parent=1 // pred_fallthru
      _
    // Predicated region
    $region42: #{tpu_custom_call.1} parent=1 // pred_check
      _
    $region43: #{tpu_custom_call.1} parent=1 // pred_check_branch
      %217 = sbr.rel (0) target = $region45
    $region44: #{tpu_custom_call.1} parent=1 // pred_region
      %s219 = ssub.s32 12800, 12800
      %220 = vsyncadd [#allocation18], %s219
      %s221 = sshll.u32 [#allocation19], 4
      %s222 = int_to_ptr.vmem [resolvable:$true] %s221
      %227 = dma.hbm_to_vmem [thread:$0]  %s21, 12800, %s222, [#allocation18], 256, 256, 16
    $region45: #{tpu_custom_call.1} parent=1 // pred_fallthru
      _
    // Predicated region
    $region46: #{tpu_custom_call.1} parent=1 // pred_check
      _
    $region47: #{tpu_custom_call.1} parent=1 // pred_check_branch
      %229 = sbr.rel (0) target = $region49
    $region48: #{tpu_custom_call.1} parent=1 // pred_region
      %s231 = ssub.s32 64, 64
      %232 = vsyncadd [#allocation21], %s231
      %s234 = sshll.u32 [#allocation20], 4
      %s235 = int_to_ptr.vmem [resolvable:$true] %s234
      %237 = dma.hbm_to_vmem [thread:$0]  %s23, 64, %s235, [#allocation21]
    $region49: #{tpu_custom_call.1} parent=1 // pred_fallthru
      _
    // Predicated region
    $region50: #{tpu_custom_call.1} parent=1 // pred_check
      _
    $region51: #{tpu_custom_call.1} parent=1 // pred_check_branch
      %239 = sbr.rel (0) target = $region53
    $region52: #{tpu_custom_call.1} parent=1 // pred_region
      %s241 = ssub.s32 64, 64
      %242 = vsyncadd [#allocation21], %s241
      %s244 = sshll.u32 [#allocation22], 4
      %s245 = int_to_ptr.vmem [resolvable:$true] %s244
      %247 = dma.hbm_to_vmem [thread:$0]  %s25, 64, %s245, [#allocation21]
    $region53: #{tpu_custom_call.1} parent=1 // pred_fallthru
      _
    // Predicated region
    $region54: #{tpu_custom_call.1} parent=1 // pred_check
      _
    $region55: #{tpu_custom_call.1} parent=1 // pred_check_branch
      %249 = sbr.rel (0) target = $region57
    $region56: #{tpu_custom_call.1} parent=1 // pred_region
      _
    $region57: #{tpu_custom_call.1} parent=1 // pred_fallthru
      _
    // Predicated region
    $region58: #{tpu_custom_call.1} parent=1 // pred_check
      _
    $region59: #{tpu_custom_call.1} parent=1 // pred_check_branch
      %251 = sbr.rel (0) target = $region61
    $region60: #{tpu_custom_call.1} parent=1 // pred_region
      _
    $region61: #{tpu_custom_call.1} parent=1 // pred_fallthru
      _
    // Predicated region
    $region62: #{tpu_custom_call.1} parent=1 // pred_check
      _
    $region63: #{tpu_custom_call.1} parent=1 // pred_check_branch
      %253 = sbr.rel (0) target = $region65
    $region64: #{tpu_custom_call.1} parent=1 // pred_region
      _
    $region65: #{tpu_custom_call.1} parent=1 // pred_fallthru
      _
    // Predicated region
    $region66: #{tpu_custom_call.1} parent=1 // pred_check
      _
    $region67: #{tpu_custom_call.1} parent=1 // pred_check_branch
      %255 = sbr.rel (0) target = $region69
    $region68: #{tpu_custom_call.1} parent=1 // pred_region
      _
    $region69: #{tpu_custom_call.1} parent=1 // pred_fallthru
      _
    // Predicated region
    $region70: #{tpu_custom_call.1} parent=1 // pred_check
      _
    $region71: #{tpu_custom_call.1} parent=1 // pred_check_branch
      %257 = sbr.rel (0) target = $region73
    $region72: #{tpu_custom_call.1} parent=1 // pred_region
      %s259 = ssub.s32 32, 32
      %260 = vsyncadd [#allocation24], %s259
      %s262 = sshll.u32 [#allocation23], 4
      %s263 = int_to_ptr.vmem [resolvable:$true] %s262
      %265 = dma.hbm_to_vmem [thread:$0]  %s35, 32, %s263, [#allocation24]
    $region73: #{tpu_custom_call.1} parent=1 // pred_fallthru
      _
    // Predicated region
    $region74: #{tpu_custom_call.1} parent=1 // pred_check
      _
    $region75: #{tpu_custom_call.1} parent=1 // pred_check_branch
      %267 = sbr.rel (0) target = $region77
    $region76: #{tpu_custom_call.1} parent=1 // pred_region
      %s269 = ssub.s32 32, 32
      %270 = vsyncadd [#allocation24], %s269
      %s272 = sshll.u32 [#allocation25], 4
      %s273 = int_to_ptr.vmem [resolvable:$true] %s272
      %275 = dma.hbm_to_vmem [thread:$0]  %s37, 32, %s273, [#allocation24]
    $region77: #{tpu_custom_call.1} parent=1 // pred_fallthru
      _
    // Predicated region
    $region78: #{tpu_custom_call.1} parent=1 // pred_check
      _
    $region79: #{tpu_custom_call.1} parent=1 // pred_check_branch
      %277 = sbr.rel (0) target = $region81
    $region80: #{tpu_custom_call.1} parent=1 // pred_region
      _
    $region81: #{tpu_custom_call.1} parent=1 // pred_fallthru
      _
    // Predicated region
    $region82: #{tpu_custom_call.1} parent=1 // pred_check
      _
    $region83: #{tpu_custom_call.1} parent=1 // pred_check_branch
      %279 = sbr.rel (0) target = $region85
    $region84: #{tpu_custom_call.1} parent=1 // pred_region
      %s281 = ssub.s32 32, 32
      %282 = vsyncadd [#allocation27], %s281
      %s284 = sshll.u32 [#allocation26], 4
      %s285 = int_to_ptr.vmem [resolvable:$true] %s284
      %287 = dma.hbm_to_vmem [thread:$0]  %s41, 32, %s285, [#allocation27]
    $region85: #{tpu_custom_call.1} parent=1 // pred_fallthru
      _
    // Predicated region
    $region86: #{tpu_custom_call.1} parent=1 // pred_check
      _
    $region87: #{tpu_custom_call.1} parent=1 // pred_check_branch
      %289 = sbr.rel (0) target = $region89
    $region88: #{tpu_custom_call.1} parent=1 // pred_region
      %s291 = ssub.s32 32, 32
      %292 = vsyncadd [#allocation27], %s291
      %s294 = sshll.u32 [#allocation28], 4
      %s295 = int_to_ptr.vmem [resolvable:$true] %s294
      %297 = dma.hbm_to_vmem [thread:$0]  %s43, 32, %s295, [#allocation27]
    $region89: #{tpu_custom_call.1} parent=1 // pred_fallthru
      _
    // Predicated region
    $region90: #{tpu_custom_call.1} parent=1 // pred_check
      _
    $region91: #{tpu_custom_call.1} parent=1 // pred_check_branch
      %299 = sbr.rel (0) target = $region93
    $region92: #{tpu_custom_call.1} parent=1 // pred_region
      _
    $region93: #{tpu_custom_call.1} parent=1 // pred_fallthru
      _
    // Predicated region
    $region94: #{tpu_custom_call.1} parent=1 // pred_check
      _
    $region95: #{tpu_custom_call.1} parent=1 // pred_check_branch
      %301 = sbr.rel (0) target = $region97
    $region96: #{tpu_custom_call.1} parent=1 // pred_region
      %s303 = ssub.s32 32, 32
      %304 = vsyncadd [#allocation30], %s303
      %s306 = sshll.u32 [#allocation29], 4
      %s307 = int_to_ptr.vmem [resolvable:$true] %s306
      %309 = dma.hbm_to_vmem [thread:$0]  %s47, 32, %s307, [#allocation30]
    $region97: #{tpu_custom_call.1} parent=1 // pred_fallthru
      _
    // Predicated region
    $region98: #{tpu_custom_call.1} parent=1 // pred_check
      _
    $region99: #{tpu_custom_call.1} parent=1 // pred_check_branch
      %311 = sbr.rel (0) target = $region101
    $region100: #{tpu_custom_call.1} parent=1 // pred_region
      %s313 = ssub.s32 32, 32
      %314 = vsyncadd [#allocation30], %s313
      %s316 = sshll.u32 [#allocation31], 4
      %s317 = int_to_ptr.vmem [resolvable:$true] %s316
      %319 = dma.hbm_to_vmem [thread:$0]  %s49, 32, %s317, [#allocation30]
    $region101: #{tpu_custom_call.1} parent=1 // pred_fallthru
      _
    // Predicated region
    $region102: #{tpu_custom_call.1} parent=1 // pred_check
      _
    $region103: #{tpu_custom_call.1} parent=1 // pred_check_branch
      %321 = sbr.rel (0) target = $region105
    $region104: #{tpu_custom_call.1} parent=1 // pred_region
      _
    $region105: #{tpu_custom_call.1} parent=1 // pred_fallthru
      _
    // Predicated region
    $region106: #{tpu_custom_call.1} parent=1 // pred_check
      _
    $region107: #{tpu_custom_call.1} parent=1 // pred_check_branch
      %323 = sbr.rel (0) target = $region109
    $region108: #{tpu_custom_call.1} parent=1 // pred_region
      _
    $region109: #{tpu_custom_call.1} parent=1 // pred_fallthru
      _
    // Predicated region
    $region110: #{tpu_custom_call.1} parent=1 // pred_check
      _
    $region111: #{tpu_custom_call.1} parent=1 // pred_check_branch
      %325 = sbr.rel (0) target = $region113
    $region112: #{tpu_custom_call.1} parent=1 // pred_region
      %s327 = ssub.s32 32, 32
      %328 = vsyncadd [#allocation33], %s327
      %s330 = sshll.u32 [#allocation32], 4
      %s331 = int_to_ptr.vmem [resolvable:$true] %s330
      %333 = dma.hbm_to_vmem [thread:$0]  %s55, 32, %s331, [#allocation33]
    $region113: #{tpu_custom_call.1} parent=1 // pred_fallthru
      _
    // Predicated region
    $region114: #{tpu_custom_call.1} parent=1 // pred_check
      _
    $region115: #{tpu_custom_call.1} parent=1 // pred_check_branch
      %335 = sbr.rel (0) target = $region117
    $region116: #{tpu_custom_call.1} parent=1 // pred_region
      _
    $region117: #{tpu_custom_call.1} parent=1 // pred_fallthru
      _
    // Predicated region
    $region118: #{tpu_custom_call.1} parent=1 // pred_check
      _
    $region119: #{tpu_custom_call.1} parent=1 // pred_check_branch
      %337 = sbr.rel (0) target = $region121
    $region120: #{tpu_custom_call.1} parent=1 // pred_region
      %s339 = ssub.s32 16, 16
      %340 = vsyncadd [#allocation33], %s339
      %s342 = sshll.u32 [#allocation34], 4
      %s343 = int_to_ptr.vmem [resolvable:$true] %s342
      %345 = dma.hbm_to_vmem [thread:$0]  %s59, 16, %s343, [#allocation33]
    $region121: #{tpu_custom_call.1} parent=1 // pred_fallthru
      _
    // Predicated region
    $region122: #{tpu_custom_call.1} parent=1 // pred_check
      _
    $region123: #{tpu_custom_call.1} parent=1 // pred_check_branch
      %347 = sbr.rel (0) target = $region125
    $region124: #{tpu_custom_call.1} parent=1 // pred_region
      %s349 = ssub.s32 128, 128
      %350 = vsyncadd [#allocation36], %s349
      %s351 = sshll.u32 [#allocation35], 4
      %s352 = int_to_ptr.vmem [resolvable:$true] %s351
      %357 = dma.hbm_to_vmem [thread:$0]  %s61, 128, %s352, [#allocation36], 64, 64, 4
    $region125: #{tpu_custom_call.1} parent=1 // pred_fallthru
      _
    // Predicated region
    $region126: #{tpu_custom_call.1} parent=1 // pred_check
      _
    $region127: #{tpu_custom_call.1} parent=1 // pred_check_branch
      %359 = sbr.rel (0) target = $region129
    $region128: #{tpu_custom_call.1} parent=1 // pred_region
      %s361 = ssub.s32 16, 16
      %362 = vsyncadd [#allocation36], %s361
      %s364 = sshll.u32 [#allocation37], 4
      %s365 = int_to_ptr.vmem [resolvable:$true] %s364
      %367 = dma.hbm_to_vmem [thread:$0]  %s63, 16, %s365, [#allocation36]
    $region129: #{tpu_custom_call.1} parent=1 // pred_fallthru
      _
    // Predicated region
    $region130: #{tpu_custom_call.1} parent=1 // pred_check
      _
    $region131: #{tpu_custom_call.1} parent=1 // pred_check_branch
      %369 = sbr.rel (0) target = $region133
    $region132: #{tpu_custom_call.1} parent=1 // pred_region
      %s371 = ssub.s32 16, 16
      %372 = vsyncadd [#allocation39], %s371
      %s374 = sshll.u32 [#allocation38], 4
      %s375 = int_to_ptr.vmem [resolvable:$true] %s374
      %377 = dma.hbm_to_vmem [thread:$0]  %s65, 16, %s375, [#allocation39]
    $region133: #{tpu_custom_call.1} parent=1 // pred_fallthru
      _
    // Predicated region
    $region134: #{tpu_custom_call.1} parent=1 // pred_check
      _
    $region135: #{tpu_custom_call.1} parent=1 // pred_check_branch
      %379 = sbr.rel (0) target = $region137
    $region136: #{tpu_custom_call.1} parent=1 // pred_region
      %s381 = ssub.s32 16, 16
      %382 = vsyncadd [#allocation39], %s381
      %s384 = sshll.u32 [#allocation40], 4
      %s385 = int_to_ptr.vmem [resolvable:$true] %s384
      %387 = dma.hbm_to_vmem [thread:$0]  %s67, 16, %s385, [#allocation39]
    $region137: #{tpu_custom_call.1} parent=1 // pred_fallthru
      _
    // Predicated region
    $region138: #{tpu_custom_call.1} parent=1 // pred_check
      _
    $region139: #{tpu_custom_call.1} parent=1 // pred_check_branch
      %389 = sbr.rel (0) target = $region141
    $region140: #{tpu_custom_call.1} parent=1 // pred_region
      _
    $region141: #{tpu_custom_call.1} parent=1 // pred_fallthru
      _
    // Predicated region
    $region142: #{tpu_custom_call.1} parent=1 // pred_check
      _
    $region143: #{tpu_custom_call.1} parent=1 // pred_check_branch
      %391 = sbr.rel (0) target = $region145
    $region144: #{tpu_custom_call.1} parent=1 // pred_region
      _
    $region145: #{tpu_custom_call.1} parent=1 // pred_fallthru
      _
    // Predicated region
    $region146: #{tpu_custom_call.1} parent=1 // pred_check
      _
    $region147: #{tpu_custom_call.1} parent=1 // pred_check_branch
      %393 = sbr.rel (0) target = $region149
    $region148: #{tpu_custom_call.1} parent=1 // pred_region
      _
    $region149: #{tpu_custom_call.1} parent=1 // pred_fallthru
      _
    // Predicated region
    $region150: #{tpu_custom_call.1} parent=1 // pred_check
      _
    $region151: #{tpu_custom_call.1} parent=1 // pred_check_branch
      %395 = sbr.rel (0) target = $region153
    $region152: #{tpu_custom_call.1} parent=1 // pred_region
      _
    $region153: #{tpu_custom_call.1} parent=1 // pred_fallthru
      _
    // Predicated region
    $region154: #{tpu_custom_call.1} parent=1 // pred_check
      _
    $region155: #{tpu_custom_call.1} parent=1 // pred_check_branch
      %397 = sbr.rel (0) target = $region157
    $region156: #{tpu_custom_call.1} parent=1 // pred_region
      _
    $region157: #{tpu_custom_call.1} parent=1 // pred_fallthru
      _
    // Predicated region
    $region158: #{tpu_custom_call.1} parent=1 // pred_check
      _
    $region159: #{tpu_custom_call.1} parent=1 // pred_check_branch
      %399 = sbr.rel (0) target = $region161
    $region160: #{tpu_custom_call.1} parent=1 // pred_region
      _
    $region161: #{tpu_custom_call.1} parent=1 // pred_fallthru
      _
    // Predicated region
    $region162: #{tpu_custom_call.1} parent=1 // pred_check
      _
    $region163: #{tpu_custom_call.1} parent=1 // pred_check_branch
      %401 = sbr.rel (0) target = $region165
    $region164: #{tpu_custom_call.1} parent=1 // pred_region
      _
    $region165: #{tpu_custom_call.1} parent=1 // pred_fallthru
      _
    // Predicated region
    $region166: #{tpu_custom_call.1} parent=1 // pred_check
      _
    $region167: #{tpu_custom_call.1} parent=1 // pred_check_branch
      %403 = sbr.rel (0) target = $region169
    $region168: #{tpu_custom_call.1} parent=1 // pred_region
      _
    $region169: #{tpu_custom_call.1} parent=1 // pred_fallthru
      _
    // Predicated region
    $region170: #{tpu_custom_call.1} parent=1 // pred_check
      _
    $region171: #{tpu_custom_call.1} parent=1 // pred_check_branch
      %405 = sbr.rel (0) target = $region173
    $region172: #{tpu_custom_call.1} parent=1 // pred_region
      _
    $region173: #{tpu_custom_call.1} parent=1 // pred_fallthru
      _
    // Predicated region
    $region174: #{tpu_custom_call.1} parent=1 // pred_check
      _
    $region175: #{tpu_custom_call.1} parent=1 // pred_check_branch
      %407 = sbr.rel (0) target = $region177
    $region176: #{tpu_custom_call.1} parent=1 // pred_region
      _
    $region177: #{tpu_custom_call.1} parent=1 // pred_fallthru
      _
    // Predicated region
    $region178: #{tpu_custom_call.1} parent=1 // pred_check
      _
    $region179: #{tpu_custom_call.1} parent=1 // pred_check_branch
      %409 = sbr.rel (0) target = $region181
    $region180: #{tpu_custom_call.1} parent=1 // pred_region
      %410 = dma.done [#allocation3], 96
    $region181: #{tpu_custom_call.1} parent=1 // pred_fallthru
      _
    // Predicated region
    $region182: #{tpu_custom_call.1} parent=1 // pred_check
      _
    $region183: #{tpu_custom_call.1} parent=1 // pred_check_branch
      %412 = sbr.rel (0) target = $region185
    $region184: #{tpu_custom_call.1} parent=1 // pred_region
      %413 = dma.done [#allocation6], 1024
    $region185: #{tpu_custom_call.1} parent=1 // pred_fallthru
      _
    // Predicated region
    $region186: #{tpu_custom_call.1} parent=1 // pred_check
      _
    $region187: #{tpu_custom_call.1} parent=1 // pred_check_branch
      %415 = sbr.rel (0) target = $region189
    $region188: #{tpu_custom_call.1} parent=1 // pred_region
      %416 = dma.done [#allocation6], 64
    $region189: #{tpu_custom_call.1} parent=1 // pred_fallthru
      _
    // Predicated region
    $region190: #{tpu_custom_call.1} parent=1 // pred_check
      _
    $region191: #{tpu_custom_call.1} parent=1 // pred_check_branch
      %418 = sbr.rel (0) target = $region193
    $region192: #{tpu_custom_call.1} parent=1 // pred_region
      %419 = dma.done [#allocation9], 64
    $region193: #{tpu_custom_call.1} parent=1 // pred_fallthru
      _
    // Predicated region
    $region194: #{tpu_custom_call.1} parent=1 // pred_check
      _
    $region195: #{tpu_custom_call.1} parent=1 // pred_check_branch
      %421 = sbr.rel (0) target = $region197
    $region196: #{tpu_custom_call.1} parent=1 // pred_region
      %422 = dma.done [#allocation9], 12800
    $region197: #{tpu_custom_call.1} parent=1 // pred_fallthru
      _
    // Predicated region
    $region198: #{tpu_custom_call.1} parent=1 // pred_check
      _
    $region199: #{tpu_custom_call.1} parent=1 // pred_check_branch
      %424 = sbr.rel (0) target = $region201
    $region200: #{tpu_custom_call.1} parent=1 // pred_region
      %425 = dma.done [#allocation12], 64
    $region201: #{tpu_custom_call.1} parent=1 // pred_fallthru
      _
    // Predicated region
    $region202: #{tpu_custom_call.1} parent=1 // pred_check
      _
    $region203: #{tpu_custom_call.1} parent=1 // pred_check_branch
      %427 = sbr.rel (0) target = $region205
    $region204: #{tpu_custom_call.1} parent=1 // pred_region
      %428 = dma.done [#allocation12], 64
    $region205: #{tpu_custom_call.1} parent=1 // pred_fallthru
      _
    // Predicated region
    $region206: #{tpu_custom_call.1} parent=1 // pred_check
      _
    $region207: #{tpu_custom_call.1} parent=1 // pred_check_branch
      %430 = sbr.rel (0) target = $region209
    $region208: #{tpu_custom_call.1} parent=1 // pred_region
      %431 = dma.done [#allocation15], 12800
    $region209: #{tpu_custom_call.1} parent=1 // pred_fallthru
      _
    // Predicated region
    $region210: #{tpu_custom_call.1} parent=1 // pred_check
      _
    $region211: #{tpu_custom_call.1} parent=1 // pred_check_branch
      %433 = sbr.rel (0) target = $region213
    $region212: #{tpu_custom_call.1} parent=1 // pred_region
      %434 = dma.done [#allocation15], 64
    $region213: #{tpu_custom_call.1} parent=1 // pred_fallthru
      _
    // Predicated region
    $region214: #{tpu_custom_call.1} parent=1 // pred_check
      _
    $region215: #{tpu_custom_call.1} parent=1 // pred_check_branch
      %436 = sbr.rel (0) target = $region217
    $region216: #{tpu_custom_call.1} parent=1 // pred_region
      %437 = dma.done [#allocation18], 64
    $region217: #{tpu_custom_call.1} parent=1 // pred_fallthru
      _
    // Predicated region
    $region218: #{tpu_custom_call.1} parent=1 // pred_check
      _
    $region219: #{tpu_custom_call.1} parent=1 // pred_check_branch
      %439 = sbr.rel (0) target = $region221
    $region220: #{tpu_custom_call.1} parent=1 // pred_region
      %440 = dma.done [#allocation18], 12800
    $region221: #{tpu_custom_call.1} parent=1 // pred_fallthru
      _
    // Predicated region
    $region222: #{tpu_custom_call.1} parent=1 // pred_check
      _
    $region223: #{tpu_custom_call.1} parent=1 // pred_check_branch
      %442 = sbr.rel (0) target = $region225
    $region224: #{tpu_custom_call.1} parent=1 // pred_region
      %443 = dma.done [#allocation21], 64
    $region225: #{tpu_custom_call.1} parent=1 // pred_fallthru
      _
    // Predicated region
    $region226: #{tpu_custom_call.1} parent=1 // pred_check
      _
    $region227: #{tpu_custom_call.1} parent=1 // pred_check_branch
      %445 = sbr.rel (0) target = $region229
    $region228: #{tpu_custom_call.1} parent=1 // pred_region
      %446 = dma.done [#allocation21], 64
    $region229: #{tpu_custom_call.1} parent=1 // pred_fallthru
      _
    // Predicated region
    $region230: #{tpu_custom_call.1} parent=1 // pred_check
      _
    $region231: #{tpu_custom_call.1} parent=1 // pred_check_branch
      %448 = sbr.rel (0) target = $region233
    $region232: #{tpu_custom_call.1} parent=1 // pred_region
      %449 = dma.done [#allocation24], 32
    $region233: #{tpu_custom_call.1} parent=1 // pred_fallthru
      _
    // Predicated region
    $region234: #{tpu_custom_call.1} parent=1 // pred_check
      _
    $region235: #{tpu_custom_call.1} parent=1 // pred_check_branch
      %451 = sbr.rel (0) target = $region237
    $region236: #{tpu_custom_call.1} parent=1 // pred_region
      %452 = dma.done [#allocation24], 32
    $region237: #{tpu_custom_call.1} parent=1 // pred_fallthru
      _
    // Predicated region
    $region238: #{tpu_custom_call.1} parent=1 // pred_check
      _
    $region239: #{tpu_custom_call.1} parent=1 // pred_check_branch
      %454 = sbr.rel (0) target = $region241
    $region240: #{tpu_custom_call.1} parent=1 // pred_region
      %455 = dma.done [#allocation27], 32
    $region241: #{tpu_custom_call.1} parent=1 // pred_fallthru
      _
    // Predicated region
    $region242: #{tpu_custom_call.1} parent=1 // pred_check
      _
    $region243: #{tpu_custom_call.1} parent=1 // pred_check_branch
      %457 = sbr.rel (0) target = $region245
    $region244: #{tpu_custom_call.1} parent=1 // pred_region
      %458 = dma.done [#allocation27], 32
    $region245: #{tpu_custom_call.1} parent=1 // pred_fallthru
      _
    // Predicated region
    $region246: #{tpu_custom_call.1} parent=1 // pred_check
      _
    $region247: #{tpu_custom_call.1} parent=1 // pred_check_branch
      %460 = sbr.rel (0) target = $region249
    $region248: #{tpu_custom_call.1} parent=1 // pred_region
      %461 = dma.done [#allocation30], 32
    $region249: #{tpu_custom_call.1} parent=1 // pred_fallthru
      _
    // Predicated region
    $region250: #{tpu_custom_call.1} parent=1 // pred_check
      _
    $region251: #{tpu_custom_call.1} parent=1 // pred_check_branch
      %463 = sbr.rel (0) target = $region253
    $region252: #{tpu_custom_call.1} parent=1 // pred_region
      %464 = dma.done [#allocation30], 32
    $region253: #{tpu_custom_call.1} parent=1 // pred_fallthru
      _
    // Predicated region
    $region254: #{tpu_custom_call.1} parent=1 // pred_check
      _
    $region255: #{tpu_custom_call.1} parent=1 // pred_check_branch
      %466 = sbr.rel (0) target = $region257
    $region256: #{tpu_custom_call.1} parent=1 // pred_region
      %467 = dma.done [#allocation33], 32
    $region257: #{tpu_custom_call.1} parent=1 // pred_fallthru
      _
    // Predicated region
    $region258: #{tpu_custom_call.1} parent=1 // pred_check
      _
    $region259: #{tpu_custom_call.1} parent=1 // pred_check_branch
      %469 = sbr.rel (0) target = $region261
    $region260: #{tpu_custom_call.1} parent=1 // pred_region
      %470 = dma.done [#allocation33], 16
    $region261: #{tpu_custom_call.1} parent=1 // pred_fallthru
      _
    // Predicated region
    $region262: #{tpu_custom_call.1} parent=1 // pred_check
      _
    $region263: #{tpu_custom_call.1} parent=1 // pred_check_branch
      %472 = sbr.rel (0) target = $region265
    $region264: #{tpu_custom_call.1} parent=1 // pred_region
      %473 = dma.done [#allocation36], 128
    $region265: #{tpu_custom_call.1} parent=1 // pred_fallthru
      _
    // Predicated region
    $region266: #{tpu_custom_call.1} parent=1 // pred_check
      _
    $region267: #{tpu_custom_call.1} parent=1 // pred_check_branch
      %475 = sbr.rel (0) target = $region269
    $region268: #{tpu_custom_call.1} parent=1 // pred_region
      %476 = dma.done [#allocation36], 16
    $region269: #{tpu_custom_call.1} parent=1 // pred_fallthru
      _
    // Predicated region
    $region270: #{tpu_custom_call.1} parent=1 // pred_check
      _
    $region271: #{tpu_custom_call.1} parent=1 // pred_check_branch
      %478 = sbr.rel (0) target = $region273
    $region272: #{tpu_custom_call.1} parent=1 // pred_region
      %479 = dma.done [#allocation39], 16
    $region273: #{tpu_custom_call.1} parent=1 // pred_fallthru
      _
    // Predicated region
    $region274: #{tpu_custom_call.1} parent=1 // pred_check
      _
    $region275: #{tpu_custom_call.1} parent=1 // pred_check_branch
      %481 = sbr.rel (0) target = $region277
    $region276: #{tpu_custom_call.1} parent=1 // pred_region
      %482 = dma.done [#allocation39], 16
    $region277: #{tpu_custom_call.1} parent=1 // pred_fallthru
      _
    %v484 = vld [vmem:[#allocation2] sm:$0x3]
    %s485 = scalar_lea.vmem [#allocation2], 2
    %v486 = vld [vmem:[%s485] sm:$0x3]
    %v487 = vadd.f32 %v484, %v486
    %s488 = scalar_lea.vmem [#allocation2], 4
    %v489 = vld [vmem:[%s488] sm:$0x3]
    %v490 = vadd.f32 %v487, %v489
    %v491 = vpack.c.bf16 %v490, %v490
    %v492 = vld [vmem:[#allocation5] sm:$0xff]
    %v493 = vld [vmem:[#allocation5 + $0x8] sm:$0xff]
    %v494 = vld [vmem:[#allocation5 + $0x10] sm:$0xff]
    %v495 = vld [vmem:[#allocation5 + $0x18] sm:$0xff]
    %v496 = vld [vmem:[#allocation5 + $0x20] sm:$0xff]
    %v497 = vld [vmem:[#allocation5 + $0x28] sm:$0xff]
    %v498 = vld [vmem:[#allocation5 + $0x30] sm:$0x11]
    %v499 = vld [vmem:[#allocation5 + $0x38] sm:$0x11]
    %v508 = vunpack.c.l.b16 %v492
    %v509 = vunpack.c.h.b16 %v492
    %v510 = vunpack.c.l.b16 %v493
    %v511 = vunpack.c.h.b16 %v493
    %v512 = vunpack.c.l.b16 %v494
    %v513 = vunpack.c.h.b16 %v494
    %v514 = vunpack.c.l.b16 %v495
    %v515 = vunpack.c.h.b16 %v495
    %v516 = vunpack.c.l.b16 %v496
    %v517 = vunpack.c.h.b16 %v496
    %v518 = vunpack.c.l.b16 %v497
    %v519 = vunpack.c.h.b16 %v497
    %v520 = vunpack.c.l.b16 %v498
    %v521 = vunpack.c.h.b16 %v498
    %v522 = vunpack.c.l.b16 %v499
    %v523 = vunpack.c.h.b16 %v499
    %v524 = vpack.c.b16 %v512, %v508
    %v525 = vpack.c.b16 %v513, %v509
    %v526 = vpack.c.b16 %v514, %v510
    %v527 = vpack.c.b16 %v515, %v511
    %v528 = vpack.c.b16 %v520, %v516
    %v529 = vpack.c.b16 %v521, %v517
    %v530 = vpack.c.b16 %v522, %v518
    %v531 = vpack.c.b16 %v523, %v519
    %vm536 = vcmask 203776
    %v538 = vsel %vm536, %v491, 0
    %vm540 = vcmask 1043456
    %vm541 = vcmask 1044480
    %v542 = vsel %vm540, 4294967295, 65535
    %v543 = vsel %vm541, %v542, 0
    %v545 = vand.u32 %v528, %v543
    %v548 = vand.u32 %v529, %v543
    %v551 = vand.u32 %v530, %v543
    %v554 = vand.u32 %v531, %v543
    %556 = vmatprep.subr.bf16.mxu0 0
    %557 = vmatpush1.bf16.msra.mxu0 0
    %558 = vmatprep.subr.bf16.mxu0 0
    %559 = vmatpush1.bf16.msra.mxu0 0
    %560 = vmatprep.subr.bf16.mxu0 0
    %561 = vmatpush1.bf16.msra.mxu0 0
    %562 = vmatprep.subr.bf16.mxu0 0
    %563 = vmatpush1.bf16.msra.mxu0 0
    %564 = vmatprep.subr.bf16.mxu0 0
    %565 = vmatpush1.bf16.msra.mxu0 0
    %566 = vmatprep.subr.bf16.mxu0 0
    %567 = vmatpush1.bf16.msra.mxu0 0
    %568 = vmatprep.subr.bf16.mxu0 %v548
    %569 = vmatpush1.bf16.msra.mxu0 %v545
    %570 = vmatprep.subr.bf16.mxu0 %v525
    %571 = vmatpush1.bf16.msra.mxu0 %v524
    %572 = vmatprep.subr.bf16.mxu0 0
    %573 = vmatpush2.bf16.msra.mxu0 0
    %574 = vmatprep.subr.bf16.mxu0 0
    %575 = vmatpush2.bf16.msra.mxu0 0
    %576 = vmatprep.subr.bf16.mxu0 0
    %577 = vmatpush2.bf16.msra.mxu0 0
    %578 = vmatprep.subr.bf16.mxu0 0
    %579 = vmatpush2.bf16.msra.mxu0 0
    %580 = vmatprep.subr.bf16.mxu0 0
    %581 = vmatpush2.bf16.msra.mxu0 0
    %582 = vmatprep.subr.bf16.mxu0 0
    %583 = vmatpush2.bf16.msra.mxu0 0
    %584 = vmatprep.subr.bf16.mxu0 0
    %585 = vmatpush2.bf16.msra.mxu0 0
    %586 = vmatprep.subr.bf16.mxu0 0
    %587 = vmatpush2.bf16.msra.mxu0 0
    %588 = vmatprep.mubr.bf16.mxu0 0
    %589 = vmatmul.mubr.bf16.gmra.mxu0 %v538
    %v590 = vpop.f32.mrf.mxu0
    %v591 = vadd.f32 0.0, %v590
    %v592 = vpop.f32.mrf.mxu0
    %v593 = vadd.f32 0.0, %v592
    %v594 = vpop.f32.mrf.mxu0
    %v595 = vpop.f32.mrf.mxu0
    %596 = vdwg.mxu0
    %597 = vmatprep.subr.bf16.mxu0 0
    %598 = vmatpush1.bf16.msra.mxu0 0
    %599 = vmatprep.subr.bf16.mxu0 0
    %600 = vmatpush1.bf16.msra.mxu0 0
    %601 = vmatprep.subr.bf16.mxu0 0
    %602 = vmatpush1.bf16.msra.mxu0 0
    %603 = vmatprep.subr.bf16.mxu0 0
    %604 = vmatpush1.bf16.msra.mxu0 0
    %605 = vmatprep.subr.bf16.mxu0 0
    %606 = vmatpush1.bf16.msra.mxu0 0
    %607 = vmatprep.subr.bf16.mxu0 0
    %608 = vmatpush1.bf16.msra.mxu0 0
    %609 = vmatprep.subr.bf16.mxu0 %v554
    %610 = vmatpush1.bf16.msra.mxu0 %v551
    %611 = vmatprep.subr.bf16.mxu0 %v527
    %612 = vmatpush1.bf16.msra.mxu0 %v526
    %613 = vmatprep.subr.bf16.mxu0 0
    %614 = vmatpush2.bf16.msra.mxu0 0
    %615 = vmatprep.subr.bf16.mxu0 0
    %616 = vmatpush2.bf16.msra.mxu0 0
    %617 = vmatprep.subr.bf16.mxu0 0
    %618 = vmatpush2.bf16.msra.mxu0 0
    %619 = vmatprep.subr.bf16.mxu0 0
    %620 = vmatpush2.bf16.msra.mxu0 0
    %621 = vmatprep.subr.bf16.mxu0 0
    %622 = vmatpush2.bf16.msra.mxu0 0
    %623 = vmatprep.subr.bf16.mxu0 0
    %624 = vmatpush2.bf16.msra.mxu0 0
    %625 = vmatprep.subr.bf16.mxu0 0
    %626 = vmatpush2.bf16.msra.mxu0 0
    %627 = vmatprep.subr.bf16.mxu0 0
    %628 = vmatpush2.bf16.msra.mxu0 0
    %629 = vmatprep.mubr.bf16.mxu0 0
    %630 = vmatmul.mubr.bf16.gmra.mxu0 %v538
    %v631 = vpop.f32.mrf.mxu0
    %v632 = vadd.f32 0.0, %v631
    %v633 = vpop.f32.mrf.mxu0
    %v634 = vadd.f32 0.0, %v633
    %v635 = vpop.f32.mrf.mxu0
    %v636 = vpop.f32.mrf.mxu0
    %637 = vdwg.mxu0
    %vm638 = vcmask 1041408
    %v639 = vsel %vm638, %v591, 0.0
    %v640 = vsel %vm638, %v593, 0.0
    %v641 = vadd.f32 %v639, %v640
    %v642 = vsel %vm638, %v632, 0.0
    %v643 = vadd.f32 %v641, %v642
    %vm644 = vcmask 123904
    %v645 = vsel %vm644, %v634, 0.0
    %v646 = vadd.f32 %v643, %v645
    %647 = vadd.xlane.f32.xlu0 %v646
    %v648 = vpop.xlane.xlu0 %647
    %v649 = vrcp.pop 400.0
    %v650 = vmul.f32 %v648, %v649
    %v651 = vmul.f32 %v591, %v591
    %v652 = vmul.f32 %v593, %v593
    %v653 = vmul.f32 %v632, %v632
    %v654 = vmul.f32 %v634, %v634
    %v655 = vsel %vm638, %v651, 0.0
    %v656 = vsel %vm638, %v652, 0.0
    %v657 = vadd.f32 %v655, %v656
    %v658 = vsel %vm638, %v653, 0.0
    %v659 = vadd.f32 %v657, %v658
    %v660 = vsel %vm644, %v654, 0.0
    %v661 = vadd.f32 %v659, %v660
    %662 = vadd.xlane.f32.xlu0 %v661
    %v663 = vpop.xlane.xlu0 %662
    %v664 = vmul.f32 %v663, %v649
    %v665 = vmul.f32 %v650, %v650
    %v666 = vsub.f32 %v664, %v665
    %v667 = vmax.f32 %v666, 0.0
    %v668 = vsub.f32 %v591, %v650
    %v669 = vsub.f32 %v593, %v650
    %v670 = vsub.f32 %v632, %v650
    %v671 = vsub.f32 %v634, %v650
    %v672 = vadd.f32 %v667, 1e-05
    %v673 = vrsqrt.pop %v672
    %v674 = vmul.f32 %v668, %v673
    %v675 = vmul.f32 %v669, %v673
    %v676 = vmul.f32 %v670, %v673
    %v677 = vmul.f32 %v671, %v673
    %v678 = vld [vmem:[#allocation7] sm:$0xf]
    %v680 = vlaneseq
    %v681 = vshrl.u32 %v680, 7
    %v682 = vsub.s32 0, %v681
    %v683 = vrot.slane %v678, %v682
    %v684 = vlaneseq
    %v685 = vshrl.u32 %v684, 7
    %v686 = vsub.s32 1, %v685
    %v687 = vrot.slane %v678, %v686
    %v688 = vlaneseq
    %v689 = vshrl.u32 %v688, 7
    %v690 = vsub.s32 2, %v689
    %v691 = vrot.slane %v678, %v690
    %v692 = vlaneseq
    %v693 = vshrl.u32 %v692, 7
    %v694 = vsub.s32 3, %v693
    %v695 = vrot.slane %v678, %v694
    %v700 = vmul.f32 %v674, %v683
    %v701 = vmul.f32 %v675, %v687
    %v702 = vmul.f32 %v676, %v691
    %v703 = vmul.f32 %v677, %v695
    %v704 = vld [vmem:[#allocation8] sm:$0xf]
    %v706 = vlaneseq
    %v707 = vshrl.u32 %v706, 7
    %v708 = vsub.s32 0, %v707
    %v709 = vrot.slane %v704, %v708
    %v710 = vlaneseq
    %v711 = vshrl.u32 %v710, 7
    %v712 = vsub.s32 1, %v711
    %v713 = vrot.slane %v704, %v712
    %v714 = vlaneseq
    %v715 = vshrl.u32 %v714, 7
    %v716 = vsub.s32 2, %v715
    %v717 = vrot.slane %v704, %v716
    %v718 = vlaneseq
    %v719 = vshrl.u32 %v718, 7
    %v720 = vsub.s32 3, %v719
    %v721 = vrot.slane %v704, %v720
    %v726 = vadd.f32 %v700, %v709
    %v727 = vadd.f32 %v701, %v713
    %v728 = vadd.f32 %v702, %v717
    %v729 = vadd.f32 %v703, %v721
    %v730 = vmul.f32 %v726, 0.5
    %v731 = vmul.f32 %v727, 0.5
    %v732 = vmul.f32 %v728, 0.5
    %v733 = vmul.f32 %v729, 0.5
    %v734 = vmul.f32 %v726, 0.044715
    %v735 = vmul.f32 %v727, 0.044715
    %v736 = vmul.f32 %v728, 0.044715
    %v737 = vmul.f32 %v729, 0.044715
    %v738 = vmul.f32 %v734, %v726
    %v739 = vmul.f32 %v735, %v727
    %v740 = vmul.f32 %v736, %v728
    %v741 = vmul.f32 %v737, %v729
    %v742 = vmul.f32 %v738, %v726
    %v743 = vmul.f32 %v739, %v727
    %v744 = vmul.f32 %v740, %v728
    %v745 = vmul.f32 %v741, %v729
    %v746 = vadd.f32 %v726, %v742
    %v747 = vadd.f32 %v727, %v743
    %v748 = vadd.f32 %v728, %v744
    %v749 = vadd.f32 %v729, %v745
    %v750 = vmul.f32 %v746, 0.7978846
    %v751 = vmul.f32 %v747, 0.7978846
    %v752 = vmul.f32 %v748, 0.7978846
    %v753 = vmul.f32 %v749, 0.7978846
    %v754 = vtanh.pop %v750
    %v755 = vtanh.pop %v751
    %v756 = vtanh.pop %v752
    %v757 = vtanh.pop %v753
    %v758 = vadd.f32 %v754, 1.0
    %v759 = vadd.f32 %v755, 1.0
    %v760 = vadd.f32 %v756, 1.0
    %v761 = vadd.f32 %v757, 1.0
    %v762 = vmul.f32 %v730, %v758
    %v763 = vmul.f32 %v731, %v759
    %v764 = vmul.f32 %v732, %v760
    %v765 = vmul.f32 %v733, %v761
    %v766 = vpack.c.bf16 %v762, %v762
    %v767 = vpack.c.bf16 %v763, %v763
    %v768 = vpack.c.bf16 %v764, %v764
    %v769 = vpack.c.bf16 %v765, %v765
    %v770 = vld [vmem:[#allocation10] sm:$0xff]
    %v771 = vld [vmem:[#allocation10 + $0x8] sm:$0xff]
    %v772 = vld [vmem:[#allocation10 + $0x10] sm:$0xff]
    %v773 = vld [vmem:[#allocation10 + $0x18] sm:$0xff]
    %v774 = vld [vmem:[#allocation10 + $0x20] sm:$0xff]
    %v775 = vld [vmem:[#allocation10 + $0x28] sm:$0xff]
    %v776 = vld [vmem:[#allocation10 + $0x30] sm:$0xff]
    %v777 = vld [vmem:[#allocation10 + $0x38] sm:$0xff]
    %v778 = vld [vmem:[#allocation10 + $0x40] sm:$0xff]
    %v779 = vld [vmem:[#allocation10 + $0x48] sm:$0xff]
    %v780 = vld [vmem:[#allocation10 + $0x50] sm:$0xff]
    %v781 = vld [vmem:[#allocation10 + $0x58] sm:$0xff]
    %v782 = vld [vmem:[#allocation10 + $0x60] sm:$0xff]
    %v783 = vld [vmem:[#allocation10 + $0x68] sm:$0xff]
    %v784 = vld [vmem:[#allocation10 + $0x70] sm:$0xff]
    %v785 = vld [vmem:[#allocation10 + $0x78] sm:$0xff]
    %v786 = vld [vmem:[#allocation10 + $0x80] sm:$0xff]
    %v787 = vld [vmem:[#allocation10 + $0x88] sm:$0xff]
    %v788 = vld [vmem:[#allocation10 + $0x90] sm:$0xff]
    %v789 = vld [vmem:[#allocation10 + $0x98] sm:$0xff]
    %v790 = vld [vmem:[#allocation10 + $0xa0] sm:$0xff]
    %v791 = vld [vmem:[#allocation10 + $0xa8] sm:$0xff]
    %v792 = vld [vmem:[#allocation10 + $0xb0] sm:$0xff]
    %v793 = vld [vmem:[#allocation10 + $0xb8] sm:$0xff]
    %v794 = vld [vmem:[#allocation10 + $0xc0] sm:$0xff]
    %v795 = vld [vmem:[#allocation10 + $0xc8] sm:$0xff]
    %v796 = vld [vmem:[#allocation10 + $0xd0] sm:$0xff]
    %v797 = vld [vmem:[#allocation10 + $0xd8] sm:$0xff]
    %v798 = vld [vmem:[#allocation10 + $0xe0] sm:$0xff]
    %v799 = vld [vmem:[#allocation10 + $0xe8] sm:$0xff]
    %v800 = vld [vmem:[#allocation10 + $0xf0] sm:$0xff]
    %v801 = vld [vmem:[#allocation10 + $0xf8] sm:$0xff]
    %v802 = vld [vmem:[#allocation10 + $0x100] sm:$0xff]
    %v803 = vld [vmem:[#allocation10 + $0x108] sm:$0xff]
    %v804 = vld [vmem:[#allocation10 + $0x110] sm:$0xff]
    %v805 = vld [vmem:[#allocation10 + $0x118] sm:$0xff]
    %v806 = vld [vmem:[#allocation10 + $0x120] sm:$0xff]
    %v807 = vld [vmem:[#allocation10 + $0x128] sm:$0xff]
    %v808 = vld [vmem:[#allocation10 + $0x130] sm:$0xff]
    %v809 = vld [vmem:[#allocation10 + $0x138] sm:$0xff]
    %v810 = vld [vmem:[#allocation10 + $0x140] sm:$0xff]
    %v811 = vld [vmem:[#allocation10 + $0x148] sm:$0xff]
    %v812 = vld [vmem:[#allocation10 + $0x150] sm:$0xff]
    %v813 = vld [vmem:[#allocation10 + $0x158] sm:$0xff]
    %v814 = vld [vmem:[#allocation10 + $0x160] sm:$0xff]
    %v815 = vld [vmem:[#allocation10 + $0x168] sm:$0xff]
    %v816 = vld [vmem:[#allocation10 + $0x170] sm:$0xff]
    %v817 = vld [vmem:[#allocation10 + $0x178] sm:$0xff]
    %v818 = vld [vmem:[#allocation10 + $0x180] sm:$0xff]
    %v819 = vld [vmem:[#allocation10 + $0x188] sm:$0xff]
    %v820 = vld [vmem:[#allocation10 + $0x190] sm:$0xff]
    %v821 = vld [vmem:[#allocation10 + $0x198] sm:$0xff]
    %v822 = vld [vmem:[#allocation10 + $0x1a0] sm:$0xff]
    %v823 = vld [vmem:[#allocation10 + $0x1a8] sm:$0xff]
    %v824 = vld [vmem:[#allocation10 + $0x1b0] sm:$0xff]
    %v825 = vld [vmem:[#allocation10 + $0x1b8] sm:$0xff]
    %v826 = vld [vmem:[#allocation10 + $0x1c0] sm:$0xff]
    %v827 = vld [vmem:[#allocation10 + $0x1c8] sm:$0xff]
    %v828 = vld [vmem:[#allocation10 + $0x1d0] sm:$0xff]
    %v829 = vld [vmem:[#allocation10 + $0x1d8] sm:$0xff]
    %v830 = vld [vmem:[#allocation10 + $0x1e0] sm:$0xff]
    %v831 = vld [vmem:[#allocation10 + $0x1e8] sm:$0xff]
    %v832 = vld [vmem:[#allocation10 + $0x1f0] sm:$0xff]
    %v833 = vld [vmem:[#allocation10 + $0x1f8] sm:$0xff]
    %v834 = vld [vmem:[#allocation10 + $0x200] sm:$0xff]
    %v835 = vld [vmem:[#allocation10 + $0x208] sm:$0xff]
    %v836 = vld [vmem:[#allocation10 + $0x210] sm:$0xff]
    %v837 = vld [vmem:[#allocation10 + $0x218] sm:$0xff]
    %v838 = vld [vmem:[#allocation10 + $0x220] sm:$0xff]
    %v839 = vld [vmem:[#allocation10 + $0x228] sm:$0xff]
    %v840 = vld [vmem:[#allocation10 + $0x230] sm:$0xff]
    %v841 = vld [vmem:[#allocation10 + $0x238] sm:$0xff]
    %v842 = vld [vmem:[#allocation10 + $0x240] sm:$0xff]
    %v843 = vld [vmem:[#allocation10 + $0x248] sm:$0xff]
    %v844 = vld [vmem:[#allocation10 + $0x250] sm:$0xff]
    %v845 = vld [vmem:[#allocation10 + $0x258] sm:$0xff]
    %v846 = vld [vmem:[#allocation10 + $0x260] sm:$0xff]
    %v847 = vld [vmem:[#allocation10 + $0x268] sm:$0xff]
    %v848 = vld [vmem:[#allocation10 + $0x270] sm:$0xff]
    %v849 = vld [vmem:[#allocation10 + $0x278] sm:$0xff]
    %v850 = vld [vmem:[#allocation10 + $0x280] sm:$0xff]
    %v851 = vld [vmem:[#allocation10 + $0x288] sm:$0xff]
    %v852 = vld [vmem:[#allocation10 + $0x290] sm:$0xff]
    %v853 = vld [vmem:[#allocation10 + $0x298] sm:$0xff]
    %v854 = vld [vmem:[#allocation10 + $0x2a0] sm:$0xff]
    %v855 = vld [vmem:[#allocation10 + $0x2a8] sm:$0xff]
    %v856 = vld [vmem:[#allocation10 + $0x2b0] sm:$0xff]
    %v857 = vld [vmem:[#allocation10 + $0x2b8] sm:$0xff]
    %v858 = vld [vmem:[#allocation10 + $0x2c0] sm:$0xff]
    %v859 = vld [vmem:[#allocation10 + $0x2c8] sm:$0xff]
    %v860 = vld [vmem:[#allocation10 + $0x2d0] sm:$0xff]
    %v861 = vld [vmem:[#allocation10 + $0x2d8] sm:$0xff]
    %v862 = vld [vmem:[#allocation10 + $0x2e0] sm:$0xff]
    %v863 = vld [vmem:[#allocation10 + $0x2e8] sm:$0xff]
    %v864 = vld [vmem:[#allocation10 + $0x2f0] sm:$0xff]
    %v865 = vld [vmem:[#allocation10 + $0x2f8] sm:$0xff]
    %v866 = vld [vmem:[#allocation10 + $0x300] sm:$0xff]
    %v867 = vld [vmem:[#allocation10 + $0x308] sm:$0xff]
    %v868 = vld [vmem:[#allocation10 + $0x310] sm:$0xff]
    %v869 = vld [vmem:[#allocation10 + $0x318] sm:$0xff]
    %v970 = vunpack.c.l.b16 %v770
    %v971 = vunpack.c.h.b16 %v770
    %v972 = vunpack.c.l.b16 %v771
    %v973 = vunpack.c.h.b16 %v771
    %v974 = vunpack.c.l.b16 %v772
    %v975 = vunpack.c.h.b16 %v772
    %v976 = vunpack.c.l.b16 %v773
    %v977 = vunpack.c.h.b16 %v773
    %v978 = vunpack.c.l.b16 %v774
    %v979 = vunpack.c.h.b16 %v774
    %v980 = vunpack.c.l.b16 %v775
    %v981 = vunpack.c.h.b16 %v775
    %v982 = vunpack.c.l.b16 %v776
    %v983 = vunpack.c.h.b16 %v776
    %v984 = vunpack.c.l.b16 %v777
    %v985 = vunpack.c.h.b16 %v777
    %v986 = vunpack.c.l.b16 %v778
    %v987 = vunpack.c.h.b16 %v778
    %v988 = vunpack.c.l.b16 %v779
    %v989 = vunpack.c.h.b16 %v779
    %v990 = vunpack.c.l.b16 %v780
    %v991 = vunpack.c.h.b16 %v780
    %v992 = vunpack.c.l.b16 %v781
    %v993 = vunpack.c.h.b16 %v781
    %v994 = vunpack.c.l.b16 %v782
    %v995 = vunpack.c.h.b16 %v782
    %v996 = vunpack.c.l.b16 %v783
    %v997 = vunpack.c.h.b16 %v783
    %v998 = vunpack.c.l.b16 %v784
    %v999 = vunpack.c.h.b16 %v784
    %v1000 = vunpack.c.l.b16 %v785
    %v1001 = vunpack.c.h.b16 %v785
    %v1002 = vunpack.c.l.b16 %v786
    %v1003 = vunpack.c.h.b16 %v786
    %v1004 = vunpack.c.l.b16 %v787
    %v1005 = vunpack.c.h.b16 %v787
    %v1006 = vunpack.c.l.b16 %v788
    %v1007 = vunpack.c.h.b16 %v788
    %v1008 = vunpack.c.l.b16 %v789
    %v1009 = vunpack.c.h.b16 %v789
    %v1010 = vunpack.c.l.b16 %v790
    %v1011 = vunpack.c.h.b16 %v790
    %v1012 = vunpack.c.l.b16 %v791
    %v1013 = vunpack.c.h.b16 %v791
    %v1014 = vunpack.c.l.b16 %v792
    %v1015 = vunpack.c.h.b16 %v792
    %v1016 = vunpack.c.l.b16 %v793
    %v1017 = vunpack.c.h.b16 %v793
    %v1018 = vunpack.c.l.b16 %v794
    %v1019 = vunpack.c.h.b16 %v794
    %v1020 = vunpack.c.l.b16 %v795
    %v1021 = vunpack.c.h.b16 %v795
    %v1022 = vunpack.c.l.b16 %v796
    %v1023 = vunpack.c.h.b16 %v796
    %v1024 = vunpack.c.l.b16 %v797
    %v1025 = vunpack.c.h.b16 %v797
    %v1026 = vunpack.c.l.b16 %v798
    %v1027 = vunpack.c.h.b16 %v798
    %v1028 = vunpack.c.l.b16 %v799
    %v1029 = vunpack.c.h.b16 %v799
    %v1030 = vunpack.c.l.b16 %v800
    %v1031 = vunpack.c.h.b16 %v800
    %v1032 = vunpack.c.l.b16 %v801
    %v1033 = vunpack.c.h.b16 %v801
    %v1034 = vunpack.c.l.b16 %v802
    %v1035 = vunpack.c.h.b16 %v802
    %v1036 = vunpack.c.l.b16 %v803
    %v1037 = vunpack.c.h.b16 %v803
    %v1038 = vunpack.c.l.b16 %v804
    %v1039 = vunpack.c.h.b16 %v804
    %v1040 = vunpack.c.l.b16 %v805
    %v1041 = vunpack.c.h.b16 %v805
    %v1042 = vunpack.c.l.b16 %v806
    %v1043 = vunpack.c.h.b16 %v806
    %v1044 = vunpack.c.l.b16 %v807
    %v1045 = vunpack.c.h.b16 %v807
    %v1046 = vunpack.c.l.b16 %v808
    %v1047 = vunpack.c.h.b16 %v808
    %v1048 = vunpack.c.l.b16 %v809
    %v1049 = vunpack.c.h.b16 %v809
    %v1050 = vunpack.c.l.b16 %v810
    %v1051 = vunpack.c.h.b16 %v810
    %v1052 = vunpack.c.l.b16 %v811
    %v1053 = vunpack.c.h.b16 %v811
    %v1054 = vunpack.c.l.b16 %v812
    %v1055 = vunpack.c.h.b16 %v812
    %v1056 = vunpack.c.l.b16 %v813
    %v1057 = vunpack.c.h.b16 %v813
    %v1058 = vunpack.c.l.b16 %v814
    %v1059 = vunpack.c.h.b16 %v814
    %v1060 = vunpack.c.l.b16 %v815
    %v1061 = vunpack.c.h.b16 %v815
    %v1062 = vunpack.c.l.b16 %v816
    %v1063 = vunpack.c.h.b16 %v816
    %v1064 = vunpack.c.l.b16 %v817
    %v1065 = vunpack.c.h.b16 %v817
    %v1066 = vunpack.c.l.b16 %v818
    %v1067 = vunpack.c.h.b16 %v818
    %v1068 = vunpack.c.l.b16 %v819
    %v1069 = vunpack.c.h.b16 %v819
    %v1070 = vunpack.c.l.b16 %v820
    %v1071 = vunpack.c.h.b16 %v820
    %v1072 = vunpack.c.l.b16 %v821
    %v1073 = vunpack.c.h.b16 %v821
    %v1074 = vunpack.c.l.b16 %v822
    %v1075 = vunpack.c.h.b16 %v822
    %v1076 = vunpack.c.l.b16 %v823
    %v1077 = vunpack.c.h.b16 %v823
    %v1078 = vunpack.c.l.b16 %v824
    %v1079 = vunpack.c.h.b16 %v824
    %v1080 = vunpack.c.l.b16 %v825
    %v1081 = vunpack.c.h.b16 %v825
    %v1082 = vunpack.c.l.b16 %v826
    %v1083 = vunpack.c.h.b16 %v826
    %v1084 = vunpack.c.l.b16 %v827
    %v1085 = vunpack.c.h.b16 %v827
    %v1086 = vunpack.c.l.b16 %v828
    %v1087 = vunpack.c.h.b16 %v828
    %v1088 = vunpack.c.l.b16 %v829
    %v1089 = vunpack.c.h.b16 %v829
    %v1090 = vunpack.c.l.b16 %v830
    %v1091 = vunpack.c.h.b16 %v830
    %v1092 = vunpack.c.l.b16 %v831
    %v1093 = vunpack.c.h.b16 %v831
    %v1094 = vunpack.c.l.b16 %v832
    %v1095 = vunpack.c.h.b16 %v832
    %v1096 = vunpack.c.l.b16 %v833
    %v1097 = vunpack.c.h.b16 %v833
    %v1098 = vunpack.c.l.b16 %v834
    %v1099 = vunpack.c.h.b16 %v834
    %v1100 = vunpack.c.l.b16 %v835
    %v1101 = vunpack.c.h.b16 %v835
    %v1102 = vunpack.c.l.b16 %v836
    %v1103 = vunpack.c.h.b16 %v836
    %v1104 = vunpack.c.l.b16 %v837
    %v1105 = vunpack.c.h.b16 %v837
    %v1106 = vunpack.c.l.b16 %v838
    %v1107 = vunpack.c.h.b16 %v838
    %v1108 = vunpack.c.l.b16 %v839
    %v1109 = vunpack.c.h.b16 %v839
    %v1110 = vunpack.c.l.b16 %v840
    %v1111 = vunpack.c.h.b16 %v840
    %v1112 = vunpack.c.l.b16 %v841
    %v1113 = vunpack.c.h.b16 %v841
    %v1114 = vunpack.c.l.b16 %v842
    %v1115 = vunpack.c.h.b16 %v842
    %v1116 = vunpack.c.l.b16 %v843
    %v1117 = vunpack.c.h.b16 %v843
    %v1118 = vunpack.c.l.b16 %v844
    %v1119 = vunpack.c.h.b16 %v844
    %v1120 = vunpack.c.l.b16 %v845
    %v1121 = vunpack.c.h.b16 %v845
    %v1122 = vunpack.c.l.b16 %v846
    %v1123 = vunpack.c.h.b16 %v846
    %v1124 = vunpack.c.l.b16 %v847
    %v1125 = vunpack.c.h.b16 %v847
    %v1126 = vunpack.c.l.b16 %v848
    %v1127 = vunpack.c.h.b16 %v848
    %v1128 = vunpack.c.l.b16 %v849
    %v1129 = vunpack.c.h.b16 %v849
    %v1130 = vunpack.c.l.b16 %v850
    %v1131 = vunpack.c.h.b16 %v850
    %v1132 = vunpack.c.l.b16 %v851
    %v1133 = vunpack.c.h.b16 %v851
    %v1134 = vunpack.c.l.b16 %v852
    %v1135 = vunpack.c.h.b16 %v852
    %v1136 = vunpack.c.l.b16 %v853
    %v1137 = vunpack.c.h.b16 %v853
    %v1138 = vunpack.c.l.b16 %v854
    %v1139 = vunpack.c.h.b16 %v854
    %v1140 = vunpack.c.l.b16 %v855
    %v1141 = vunpack.c.h.b16 %v855
    %v1142 = vunpack.c.l.b16 %v856
    %v1143 = vunpack.c.h.b16 %v856
    %v1144 = vunpack.c.l.b16 %v857
    %v1145 = vunpack.c.h.b16 %v857
    %v1146 = vunpack.c.l.b16 %v858
    %v1147 = vunpack.c.h.b16 %v858
    %v1148 = vunpack.c.l.b16 %v859
    %v1149 = vunpack.c.h.b16 %v859
    %v1150 = vunpack.c.l.b16 %v860
    %v1151 = vunpack.c.h.b16 %v860
    %v1152 = vunpack.c.l.b16 %v861
    %v1153 = vunpack.c.h.b16 %v861
    %v1154 = vunpack.c.l.b16 %v862
    %v1155 = vunpack.c.h.b16 %v862
    %v1156 = vunpack.c.l.b16 %v863
    %v1157 = vunpack.c.h.b16 %v863
    %v1158 = vunpack.c.l.b16 %v864
    %v1159 = vunpack.c.h.b16 %v864
    %v1160 = vunpack.c.l.b16 %v865
    %v1161 = vunpack.c.h.b16 %v865
    %v1162 = vunpack.c.l.b16 %v866
    %v1163 = vunpack.c.h.b16 %v866
    %v1164 = vunpack.c.l.b16 %v867
    %v1165 = vunpack.c.h.b16 %v867
    %v1166 = vunpack.c.l.b16 %v868
    %v1167 = vunpack.c.h.b16 %v868
    %v1168 = vunpack.c.l.b16 %v869
    %v1169 = vunpack.c.h.b16 %v869
    %v1170 = vpack.c.b16 %v974, %v970
    %v1171 = vpack.c.b16 %v975, %v971
    %v1172 = vpack.c.b16 %v976, %v972
    %v1173 = vpack.c.b16 %v977, %v973
    %v1174 = vpack.c.b16 %v982, %v978
    %v1175 = vpack.c.b16 %v983, %v979
    %v1176 = vpack.c.b16 %v984, %v980
    %v1177 = vpack.c.b16 %v985, %v981
    %v1178 = vpack.c.b16 %v990, %v986
    %v1179 = vpack.c.b16 %v991, %v987
    %v1180 = vpack.c.b16 %v992, %v988
    %v1181 = vpack.c.b16 %v993, %v989
    %v1182 = vpack.c.b16 %v998, %v994
    %v1183 = vpack.c.b16 %v999, %v995
    %v1184 = vpack.c.b16 %v1000, %v996
    %v1185 = vpack.c.b16 %v1001, %v997
    %v1186 = vpack.c.b16 %v1006, %v1002
    %v1187 = vpack.c.b16 %v1007, %v1003
    %v1188 = vpack.c.b16 %v1008, %v1004
    %v1189 = vpack.c.b16 %v1009, %v1005
    %v1190 = vpack.c.b16 %v1014, %v1010
    %v1191 = vpack.c.b16 %v1015, %v1011
    %v1192 = vpack.c.b16 %v1016, %v1012
    %v1193 = vpack.c.b16 %v1017, %v1013
    %v1194 = vpack.c.b16 %v1022, %v1018
    %v1195 = vpack.c.b16 %v1023, %v1019
    %v1196 = vpack.c.b16 %v1024, %v1020
    %v1197 = vpack.c.b16 %v1025, %v1021
    %v1198 = vpack.c.b16 %v1030, %v1026
    %v1199 = vpack.c.b16 %v1031, %v1027
    %v1200 = vpack.c.b16 %v1032, %v1028
    %v1201 = vpack.c.b16 %v1033, %v1029
    %v1202 = vpack.c.b16 %v1038, %v1034
    %v1203 = vpack.c.b16 %v1039, %v1035
    %v1204 = vpack.c.b16 %v1040, %v1036
    %v1205 = vpack.c.b16 %v1041, %v1037
    %v1206 = vpack.c.b16 %v1046, %v1042
    %v1207 = vpack.c.b16 %v1047, %v1043
    %v1208 = vpack.c.b16 %v1048, %v1044
    %v1209 = vpack.c.b16 %v1049, %v1045
    %v1210 = vpack.c.b16 %v1054, %v1050
    %v1211 = vpack.c.b16 %v1055, %v1051
    %v1212 = vpack.c.b16 %v1056, %v1052
    %v1213 = vpack.c.b16 %v1057, %v1053
    %v1214 = vpack.c.b16 %v1062, %v1058
    %v1215 = vpack.c.b16 %v1063, %v1059
    %v1216 = vpack.c.b16 %v1064, %v1060
    %v1217 = vpack.c.b16 %v1065, %v1061
    %v1218 = vpack.c.b16 %v1070, %v1066
    %v1219 = vpack.c.b16 %v1071, %v1067
    %v1220 = vpack.c.b16 %v1072, %v1068
    %v1221 = vpack.c.b16 %v1073, %v1069
    %v1222 = vpack.c.b16 %v1078, %v1074
    %v1223 = vpack.c.b16 %v1079, %v1075
    %v1224 = vpack.c.b16 %v1080, %v1076
    %v1225 = vpack.c.b16 %v1081, %v1077
    %v1226 = vpack.c.b16 %v1086, %v1082
    %v1227 = vpack.c.b16 %v1087, %v1083
    %v1228 = vpack.c.b16 %v1088, %v1084
    %v1229 = vpack.c.b16 %v1089, %v1085
    %v1230 = vpack.c.b16 %v1094, %v1090
    %v1231 = vpack.c.b16 %v1095, %v1091
    %v1232 = vpack.c.b16 %v1096, %v1092
    %v1233 = vpack.c.b16 %v1097, %v1093
    %v1234 = vpack.c.b16 %v1102, %v1098
    %v1235 = vpack.c.b16 %v1103, %v1099
    %v1236 = vpack.c.b16 %v1104, %v1100
    %v1237 = vpack.c.b16 %v1105, %v1101
    %v1238 = vpack.c.b16 %v1110, %v1106
    %v1239 = vpack.c.b16 %v1111, %v1107
    %v1240 = vpack.c.b16 %v1112, %v1108
    %v1241 = vpack.c.b16 %v1113, %v1109
    %v1242 = vpack.c.b16 %v1118, %v1114
    %v1243 = vpack.c.b16 %v1119, %v1115
    %v1244 = vpack.c.b16 %v1120, %v1116
    %v1245 = vpack.c.b16 %v1121, %v1117
    %v1246 = vpack.c.b16 %v1126, %v1122
    %v1247 = vpack.c.b16 %v1127, %v1123
    %v1248 = vpack.c.b16 %v1128, %v1124
    %v1249 = vpack.c.b16 %v1129, %v1125
    %v1250 = vpack.c.b16 %v1134, %v1130
    %v1251 = vpack.c.b16 %v1135, %v1131
    %v1252 = vpack.c.b16 %v1136, %v1132
    %v1253 = vpack.c.b16 %v1137, %v1133
    %v1254 = vpack.c.b16 %v1142, %v1138
    %v1255 = vpack.c.b16 %v1143, %v1139
    %v1256 = vpack.c.b16 %v1144, %v1140
    %v1257 = vpack.c.b16 %v1145, %v1141
    %v1258 = vpack.c.b16 %v1150, %v1146
    %v1259 = vpack.c.b16 %v1151, %v1147
    %v1260 = vpack.c.b16 %v1152, %v1148
    %v1261 = vpack.c.b16 %v1153, %v1149
    %v1262 = vpack.c.b16 %v1158, %v1154
    %v1263 = vpack.c.b16 %v1159, %v1155
    %v1264 = vpack.c.b16 %v1160, %v1156
    %v1265 = vpack.c.b16 %v1161, %v1157
    %v1266 = vpack.c.b16 %v1166, %v1162
    %v1267 = vpack.c.b16 %v1167, %v1163
    %v1268 = vpack.c.b16 %v1168, %v1164
    %v1269 = vpack.c.b16 %v1169, %v1165
    %vm1370 = vcmask 130048
    %v1372 = vsel %vm1370, %v769, 0
    %1374 = vmatprep.subr.bf16.mxu0 %v1199
    %1375 = vmatpush1.bf16.msra.mxu0 %v1198
    %1376 = vmatprep.subr.bf16.mxu0 %v1195
    %1377 = vmatpush1.bf16.msra.mxu0 %v1194
    %1378 = vmatprep.subr.bf16.mxu0 %v1191
    %1379 = vmatpush1.bf16.msra.mxu0 %v1190
    %1380 = vmatprep.subr.bf16.mxu0 %v1187
    %1381 = vmatpush1.bf16.msra.mxu0 %v1186
    %1382 = vmatprep.subr.bf16.mxu0 %v1183
    %1383 = vmatpush1.bf16.msra.mxu0 %v1182
    %1384 = vmatprep.subr.bf16.mxu0 %v1179
    %1385 = vmatpush1.bf16.msra.mxu0 %v1178
    %1386 = vmatprep.subr.bf16.mxu0 %v1175
    %1387 = vmatpush1.bf16.msra.mxu0 %v1174
    %1388 = vmatprep.subr.bf16.mxu0 %v1171
    %1389 = vmatpush1.bf16.msra.mxu0 %v1170
    %1390 = vmatprep.subr.bf16.mxu0 %v1231
    %1391 = vmatpush2.bf16.msra.mxu0 %v1230
    %1392 = vmatprep.subr.bf16.mxu0 %v1227
    %1393 = vmatpush2.bf16.msra.mxu0 %v1226
    %1394 = vmatprep.subr.bf16.mxu0 %v1223
    %1395 = vmatpush2.bf16.msra.mxu0 %v1222
    %1396 = vmatprep.subr.bf16.mxu0 %v1219
    %1397 = vmatpush2.bf16.msra.mxu0 %v1218
    %1398 = vmatprep.subr.bf16.mxu0 %v1215
    %1399 = vmatpush2.bf16.msra.mxu0 %v1214
    %1400 = vmatprep.subr.bf16.mxu0 %v1211
    %1401 = vmatpush2.bf16.msra.mxu0 %v1210
    %1402 = vmatprep.subr.bf16.mxu0 %v1207
    %1403 = vmatpush2.bf16.msra.mxu0 %v1206
    %1404 = vmatprep.subr.bf16.mxu0 %v1203
    %1405 = vmatpush2.bf16.msra.mxu0 %v1202
    %1406 = vmatprep.mubr.bf16.mxu0 %v767
    %1407 = vmatmul.mubr.bf16.gmra.mxu0 %v766
    %v1408 = vpop.f32.mrf.mxu0
    %v1409 = vadd.f32 0.0, %v1408
    %v1410 = vpop.f32.mrf.mxu0
    %v1411 = vadd.f32 0.0, %v1410
    %v1412 = vpop.f32.mrf.mxu0
    %v1413 = vpop.f32.mrf.mxu0
    %1414 = vdwg.mxu0
    %1415 = vmatprep.subr.bf16.mxu0 %v1263
    %1416 = vmatpush1.bf16.msra.mxu0 %v1262
    %1417 = vmatprep.subr.bf16.mxu0 %v1259
    %1418 = vmatpush1.bf16.msra.mxu0 %v1258
    %1419 = vmatprep.subr.bf16.mxu0 %v1255
    %1420 = vmatpush1.bf16.msra.mxu0 %v1254
    %1421 = vmatprep.subr.bf16.mxu0 %v1251
    %1422 = vmatpush1.bf16.msra.mxu0 %v1250
    %1423 = vmatprep.subr.bf16.mxu0 %v1247
    %1424 = vmatpush1.bf16.msra.mxu0 %v1246
    %1425 = vmatprep.subr.bf16.mxu0 %v1243
    %1426 = vmatpush1.bf16.msra.mxu0 %v1242
    %1427 = vmatprep.subr.bf16.mxu0 %v1239
    %1428 = vmatpush1.bf16.msra.mxu0 %v1238
    %1429 = vmatprep.subr.bf16.mxu0 %v1235
    %1430 = vmatpush1.bf16.msra.mxu0 %v1234
    %1431 = vmatprep.subr.bf16.mxu0 0
    %1432 = vmatpush2.bf16.msra.mxu0 0
    %1433 = vmatprep.subr.bf16.mxu0 0
    %1434 = vmatpush2.bf16.msra.mxu0 0
    %1435 = vmatprep.subr.bf16.mxu0 0
    %1436 = vmatpush2.bf16.msra.mxu0 0
    %1437 = vmatprep.subr.bf16.mxu0 0
    %1438 = vmatpush2.bf16.msra.mxu0 0
    %1439 = vmatprep.subr.bf16.mxu0 0
    %1440 = vmatpush2.bf16.msra.mxu0 0
    %1441 = vmatprep.subr.bf16.mxu0 0
    %1442 = vmatpush2.bf16.msra.mxu0 0
    %1443 = vmatprep.subr.bf16.mxu0 0
    %1444 = vmatpush2.bf16.msra.mxu0 0
    %1445 = vmatprep.subr.bf16.mxu0 %v1267
    %1446 = vmatpush2.bf16.msra.mxu0 %v1266
    %1447 = vmatprep.mubr.bf16.mxu0 %v1372
    %1448 = vmatmul.mubr.bf16.gmra.mxu0 %v768
    %v1449 = vpop.f32.mrf.mxu0
    %v1450 = vadd.f32 %v1409, %v1449
    %v1451 = vpop.f32.mrf.mxu0
    %v1452 = vadd.f32 %v1411, %v1451
    %v1453 = vpop.f32.mrf.mxu0
    %v1454 = vpop.f32.mrf.mxu0
    %1455 = vdwg.mxu0
    %1456 = vmatprep.subr.bf16.mxu0 %v1201
    %1457 = vmatpush1.bf16.msra.mxu0 %v1200
    %1458 = vmatprep.subr.bf16.mxu0 %v1197
    %1459 = vmatpush1.bf16.msra.mxu0 %v1196
    %1460 = vmatprep.subr.bf16.mxu0 %v1193
    %1461 = vmatpush1.bf16.msra.mxu0 %v1192
    %1462 = vmatprep.subr.bf16.mxu0 %v1189
    %1463 = vmatpush1.bf16.msra.mxu0 %v1188
    %1464 = vmatprep.subr.bf16.mxu0 %v1185
    %1465 = vmatpush1.bf16.msra.mxu0 %v1184
    %1466 = vmatprep.subr.bf16.mxu0 %v1181
    %1467 = vmatpush1.bf16.msra.mxu0 %v1180
    %1468 = vmatprep.subr.bf16.mxu0 %v1177
    %1469 = vmatpush1.bf16.msra.mxu0 %v1176
    %1470 = vmatprep.subr.bf16.mxu0 %v1173
    %1471 = vmatpush1.bf16.msra.mxu0 %v1172
    %1472 = vmatprep.subr.bf16.mxu0 %v1233
    %1473 = vmatpush2.bf16.msra.mxu0 %v1232
    %1474 = vmatprep.subr.bf16.mxu0 %v1229
    %1475 = vmatpush2.bf16.msra.mxu0 %v1228
    %1476 = vmatprep.subr.bf16.mxu0 %v1225
    %1477 = vmatpush2.bf16.msra.mxu0 %v1224
    %1478 = vmatprep.subr.bf16.mxu0 %v1221
    %1479 = vmatpush2.bf16.msra.mxu0 %v1220
    %1480 = vmatprep.subr.bf16.mxu0 %v1217
    %1481 = vmatpush2.bf16.msra.mxu0 %v1216
    %1482 = vmatprep.subr.bf16.mxu0 %v1213
    %1483 = vmatpush2.bf16.msra.mxu0 %v1212
    %1484 = vmatprep.subr.bf16.mxu0 %v1209
    %1485 = vmatpush2.bf16.msra.mxu0 %v1208
    %1486 = vmatprep.subr.bf16.mxu0 %v1205
    %1487 = vmatpush2.bf16.msra.mxu0 %v1204
    %1488 = vmatprep.mubr.bf16.mxu0 %v767
    %1489 = vmatmul.mubr.bf16.gmra.mxu0 %v766
    %v1490 = vpop.f32.mrf.mxu0
    %v1491 = vadd.f32 0.0, %v1490
    %v1492 = vpop.f32.mrf.mxu0
    %v1493 = vadd.f32 0.0, %v1492
    %v1494 = vpop.f32.mrf.mxu0
    %v1495 = vpop.f32.mrf.mxu0
    %1496 = vdwg.mxu0
    %1497 = vmatprep.subr.bf16.mxu0 %v1265
    %1498 = vmatpush1.bf16.msra.mxu0 %v1264
    %1499 = vmatprep.subr.bf16.mxu0 %v1261
    %1500 = vmatpush1.bf16.msra.mxu0 %v1260
    %1501 = vmatprep.subr.bf16.mxu0 %v1257
    %1502 = vmatpush1.bf16.msra.mxu0 %v1256
    %1503 = vmatprep.subr.bf16.mxu0 %v1253
    %1504 = vmatpush1.bf16.msra.mxu0 %v1252
    %1505 = vmatprep.subr.bf16.mxu0 %v1249
    %1506 = vmatpush1.bf16.msra.mxu0 %v1248
    %1507 = vmatprep.subr.bf16.mxu0 %v1245
    %1508 = vmatpush1.bf16.msra.mxu0 %v1244
    %1509 = vmatprep.subr.bf16.mxu0 %v1241
    %1510 = vmatpush1.bf16.msra.mxu0 %v1240
    %1511 = vmatprep.subr.bf16.mxu0 %v1237
    %1512 = vmatpush1.bf16.msra.mxu0 %v1236
    %1513 = vmatprep.subr.bf16.mxu0 0
    %1514 = vmatpush2.bf16.msra.mxu0 0
    %1515 = vmatprep.subr.bf16.mxu0 0
    %1516 = vmatpush2.bf16.msra.mxu0 0
    %1517 = vmatprep.subr.bf16.mxu0 0
    %1518 = vmatpush2.bf16.msra.mxu0 0
    %1519 = vmatprep.subr.bf16.mxu0 0
    %1520 = vmatpush2.bf16.msra.mxu0 0
    %1521 = vmatprep.subr.bf16.mxu0 0
    %1522 = vmatpush2.bf16.msra.mxu0 0
    %1523 = vmatprep.subr.bf16.mxu0 0
    %1524 = vmatpush2.bf16.msra.mxu0 0
    %1525 = vmatprep.subr.bf16.mxu0 0
    %1526 = vmatpush2.bf16.msra.mxu0 0
    %1527 = vmatprep.subr.bf16.mxu0 %v1269
    %1528 = vmatpush2.bf16.msra.mxu0 %v1268
    %1529 = vmatprep.mubr.bf16.mxu0 %v1372
    %1530 = vmatmul.mubr.bf16.gmra.mxu0 %v768
    %v1531 = vpop.f32.mrf.mxu0
    %v1532 = vadd.f32 %v1491, %v1531
    %v1533 = vpop.f32.mrf.mxu0
    %v1534 = vadd.f32 %v1493, %v1533
    %v1535 = vpop.f32.mrf.mxu0
    %v1536 = vpop.f32.mrf.mxu0
    %1537 = vdwg.mxu0
    %v1538 = vsel %vm638, %v1450, 0.0
    %v1539 = vsel %vm638, %v1452, 0.0
    %v1540 = vadd.f32 %v1538, %v1539
    %v1541 = vsel %vm638, %v1532, 0.0
    %v1542 = vadd.f32 %v1540, %v1541
    %v1543 = vsel %vm644, %v1534, 0.0
    %v1544 = vadd.f32 %v1542, %v1543
    %1545 = vadd.xlane.f32.xlu0 %v1544
    %v1546 = vpop.xlane.xlu0 %1545
    %v1547 = vmul.f32 %v1546, %v649
    %v1548 = vmul.f32 %v1450, %v1450
    %v1549 = vmul.f32 %v1452, %v1452
    %v1550 = vmul.f32 %v1532, %v1532
    %v1551 = vmul.f32 %v1534, %v1534
    %v1552 = vsel %vm638, %v1548, 0.0
    %v1553 = vsel %vm638, %v1549, 0.0
    %v1554 = vadd.f32 %v1552, %v1553
    %v1555 = vsel %vm638, %v1550, 0.0
    %v1556 = vadd.f32 %v1554, %v1555
    %v1557 = vsel %vm644, %v1551, 0.0
    %v1558 = vadd.f32 %v1556, %v1557
    %1559 = vadd.xlane.f32.xlu0 %v1558
    %v1560 = vpop.xlane.xlu0 %1559
    %v1561 = vmul.f32 %v1560, %v649
    %v1562 = vmul.f32 %v1547, %v1547
    %v1563 = vsub.f32 %v1561, %v1562
    %v1564 = vmax.f32 %v1563, 0.0
    %v1565 = vsub.f32 %v1450, %v1547
    %v1566 = vsub.f32 %v1452, %v1547
    %v1567 = vsub.f32 %v1532, %v1547
    %v1568 = vsub.f32 %v1534, %v1547
    %v1569 = vadd.f32 %v1564, 1e-05
    %v1570 = vrsqrt.pop %v1569
    %v1571 = vmul.f32 %v1565, %v1570
    %v1572 = vmul.f32 %v1566, %v1570
    %v1573 = vmul.f32 %v1567, %v1570
    %v1574 = vmul.f32 %v1568, %v1570
    %v1575 = vld [vmem:[#allocation11] sm:$0xf]
    %v1577 = vlaneseq
    %v1578 = vshrl.u32 %v1577, 7
    %v1579 = vsub.s32 0, %v1578
    %v1580 = vrot.slane %v1575, %v1579
    %v1581 = vlaneseq
    %v1582 = vshrl.u32 %v1581, 7
    %v1583 = vsub.s32 1, %v1582
    %v1584 = vrot.slane %v1575, %v1583
    %v1585 = vlaneseq
    %v1586 = vshrl.u32 %v1585, 7
    %v1587 = vsub.s32 2, %v1586
    %v1588 = vrot.slane %v1575, %v1587
    %v1589 = vlaneseq
    %v1590 = vshrl.u32 %v1589, 7
    %v1591 = vsub.s32 3, %v1590
    %v1592 = vrot.slane %v1575, %v1591
    %v1597 = vmul.f32 %v1571, %v1580
    %v1598 = vmul.f32 %v1572, %v1584
    %v1599 = vmul.f32 %v1573, %v1588
    %v1600 = vmul.f32 %v1574, %v1592
    %v1601 = vld [vmem:[#allocation13] sm:$0xf]
    %v1603 = vlaneseq
    %v1604 = vshrl.u32 %v1603, 7
    %v1605 = vsub.s32 0, %v1604
    %v1606 = vrot.slane %v1601, %v1605
    %v1607 = vlaneseq
    %v1608 = vshrl.u32 %v1607, 7
    %v1609 = vsub.s32 1, %v1608
    %v1610 = vrot.slane %v1601, %v1609
    %v1611 = vlaneseq
    %v1612 = vshrl.u32 %v1611, 7
    %v1613 = vsub.s32 2, %v1612
    %v1614 = vrot.slane %v1601, %v1613
    %v1615 = vlaneseq
    %v1616 = vshrl.u32 %v1615, 7
    %v1617 = vsub.s32 3, %v1616
    %v1618 = vrot.slane %v1601, %v1617
    %v1623 = vadd.f32 %v1597, %v1606
    %v1624 = vadd.f32 %v1598, %v1610
    %v1625 = vadd.f32 %v1599, %v1614
    %v1626 = vadd.f32 %v1600, %v1618
    %1628 = vrot.lane.b32.xlu0 %v490, 25
    %v1629 = vpop.permute.xlu0 %1628
    %1631 = vrot.lane.b32.xlu0 %v490, 50
    %v1632 = vpop.permute.xlu0 %1631
    %1634 = vrot.lane.b32.xlu0 %v490, 75
    %v1635 = vpop.permute.xlu0 %1634
    %1637 = vrot.lane.b32.xlu0 %v490, 100
    %v1638 = vpop.permute.xlu0 %1637
    %1640 = vrot.lane.b32.xlu0 %v490, 125
    %v1641 = vpop.permute.xlu0 %1640
    %1643 = vrot.lane.b32.xlu0 %v490, 22
    %v1644 = vpop.permute.xlu0 %1643
    %1646 = vrot.lane.b32.xlu0 %v490, 47
    %v1647 = vpop.permute.xlu0 %1646
    %1649 = vrot.lane.b32.xlu0 %v490, 72
    %v1650 = vpop.permute.xlu0 %1649
    %1652 = vrot.lane.b32.xlu0 %v490, 97
    %v1653 = vpop.permute.xlu0 %1652
    %1655 = vrot.lane.b32.xlu0 %v490, 122
    %v1656 = vpop.permute.xlu0 %1655
    %1658 = vrot.lane.b32.xlu0 %v490, 19
    %v1659 = vpop.permute.xlu0 %1658
    %1661 = vrot.lane.b32.xlu0 %v490, 44
    %v1662 = vpop.permute.xlu0 %1661
    %1664 = vrot.lane.b32.xlu0 %v490, 69
    %v1665 = vpop.permute.xlu0 %1664
    %1667 = vrot.lane.b32.xlu0 %v490, 94
    %v1668 = vpop.permute.xlu0 %1667
    %1670 = vrot.lane.b32.xlu0 %v490, 119
    %v1671 = vpop.permute.xlu0 %1670
    %v1673 = vsel %vm536, %v490, %v1629
    %vm1674 = vcmask 408576
    %v1675 = vsel %vm1674, %v1673, %v1632
    %vm1676 = vcmask 613376
    %v1677 = vsel %vm1676, %v1675, %v1635
    %vm1678 = vcmask 818176
    %v1679 = vsel %vm1678, %v1677, %v1638
    %vm1680 = vcmask 1022976
    %v1681 = vsel %vm1680, %v1679, %v1641
    %vm1682 = vcmask 179200
    %v1683 = vsel %vm1682, %v1641, %v1644
    %vm1684 = vcmask 384000
    %v1685 = vsel %vm1684, %v1683, %v1647
    %vm1686 = vcmask 588800
    %v1687 = vsel %vm1686, %v1685, %v1650
    %vm1688 = vcmask 793600
    %v1689 = vsel %vm1688, %v1687, %v1653
    %vm1690 = vcmask 998400
    %v1691 = vsel %vm1690, %v1689, %v1656
    %vm1692 = vcmask 154624
    %v1693 = vsel %vm1692, %v1656, %v1659
    %vm1694 = vcmask 359424
    %v1695 = vsel %vm1694, %v1693, %v1662
    %vm1696 = vcmask 564224
    %v1697 = vsel %vm1696, %v1695, %v1665
    %vm1698 = vcmask 769024
    %v1699 = vsel %vm1698, %v1697, %v1668
    %vm1700 = vcmask 973824
    %v1701 = vsel %vm1700, %v1699, %v1671
    %v1702 = vadd.f32 %v1681, %v1623
    %v1703 = vadd.f32 %v1691, %v1624
    %v1704 = vadd.f32 %v1701, %v1625
    %v1705 = vadd.f32 %v1671, %v1626
    %v1706 = vmul.f32 %v1702, 0.5
    %v1707 = vmul.f32 %v1703, 0.5
    %v1708 = vmul.f32 %v1704, 0.5
    %v1709 = vmul.f32 %v1705, 0.5
    %v1710 = vmul.f32 %v1702, 0.044715
    %v1711 = vmul.f32 %v1703, 0.044715
    %v1712 = vmul.f32 %v1704, 0.044715
    %v1713 = vmul.f32 %v1705, 0.044715
    %v1714 = vmul.f32 %v1710, %v1702
    %v1715 = vmul.f32 %v1711, %v1703
    %v1716 = vmul.f32 %v1712, %v1704
    %v1717 = vmul.f32 %v1713, %v1705
    %v1718 = vmul.f32 %v1714, %v1702
    %v1719 = vmul.f32 %v1715, %v1703
    %v1720 = vmul.f32 %v1716, %v1704
    %v1721 = vmul.f32 %v1717, %v1705
    %v1722 = vadd.f32 %v1702, %v1718
    %v1723 = vadd.f32 %v1703, %v1719
    %v1724 = vadd.f32 %v1704, %v1720
    %v1725 = vadd.f32 %v1705, %v1721
    %v1726 = vmul.f32 %v1722, 0.7978846
    %v1727 = vmul.f32 %v1723, 0.7978846
    %v1728 = vmul.f32 %v1724, 0.7978846
    %v1729 = vmul.f32 %v1725, 0.7978846
    %v1730 = vtanh.pop %v1726
    %v1731 = vtanh.pop %v1727
    %v1732 = vtanh.pop %v1728
    %v1733 = vtanh.pop %v1729
    %v1734 = vadd.f32 %v1730, 1.0
    %v1735 = vadd.f32 %v1731, 1.0
    %v1736 = vadd.f32 %v1732, 1.0
    %v1737 = vadd.f32 %v1733, 1.0
    %v1738 = vmul.f32 %v1706, %v1734
    %v1739 = vmul.f32 %v1707, %v1735
    %v1740 = vmul.f32 %v1708, %v1736
    %v1741 = vmul.f32 %v1709, %v1737
    %v1742 = vpack.c.bf16 %v1738, %v1738
    %v1743 = vpack.c.bf16 %v1739, %v1739
    %v1744 = vpack.c.bf16 %v1740, %v1740
    %v1745 = vpack.c.bf16 %v1741, %v1741
    %v1746 = vld [vmem:[#allocation14] sm:$0xff]
    %v1747 = vld [vmem:[#allocation14 + $0x8] sm:$0xff]
    %v1748 = vld [vmem:[#allocation14 + $0x10] sm:$0xff]
    %v1749 = vld [vmem:[#allocation14 + $0x18] sm:$0xff]
    %v1750 = vld [vmem:[#allocation14 + $0x20] sm:$0xff]
    %v1751 = vld [vmem:[#allocation14 + $0x28] sm:$0xff]
    %v1752 = vld [vmem:[#allocation14 + $0x30] sm:$0xff]
    %v1753 = vld [vmem:[#allocation14 + $0x38] sm:$0xff]
    %v1754 = vld [vmem:[#allocation14 + $0x40] sm:$0xff]
    %v1755 = vld [vmem:[#allocation14 + $0x48] sm:$0xff]
    %v1756 = vld [vmem:[#allocation14 + $0x50] sm:$0xff]
    %v1757 = vld [vmem:[#allocation14 + $0x58] sm:$0xff]
    %v1758 = vld [vmem:[#allocation14 + $0x60] sm:$0xff]
    %v1759 = vld [vmem:[#allocation14 + $0x68] sm:$0xff]
    %v1760 = vld [vmem:[#allocation14 + $0x70] sm:$0xff]
    %v1761 = vld [vmem:[#allocation14 + $0x78] sm:$0xff]
    %v1762 = vld [vmem:[#allocation14 + $0x80] sm:$0xff]
    %v1763 = vld [vmem:[#allocation14 + $0x88] sm:$0xff]
    %v1764 = vld [vmem:[#allocation14 + $0x90] sm:$0xff]
    %v1765 = vld [vmem:[#allocation14 + $0x98] sm:$0xff]
    %v1766 = vld [vmem:[#allocation14 + $0xa0] sm:$0xff]
    %v1767 = vld [vmem:[#allocation14 + $0xa8] sm:$0xff]
    %v1768 = vld [vmem:[#allocation14 + $0xb0] sm:$0xff]
    %v1769 = vld [vmem:[#allocation14 + $0xb8] sm:$0xff]
    %v1770 = vld [vmem:[#allocation14 + $0xc0] sm:$0xff]
    %v1771 = vld [vmem:[#allocation14 + $0xc8] sm:$0xff]
    %v1772 = vld [vmem:[#allocation14 + $0xd0] sm:$0xff]
    %v1773 = vld [vmem:[#allocation14 + $0xd8] sm:$0xff]
    %v1774 = vld [vmem:[#allocation14 + $0xe0] sm:$0xff]
    %v1775 = vld [vmem:[#allocation14 + $0xe8] sm:$0xff]
    %v1776 = vld [vmem:[#allocation14 + $0xf0] sm:$0xff]
    %v1777 = vld [vmem:[#allocation14 + $0xf8] sm:$0xff]
    %v1778 = vld [vmem:[#allocation14 + $0x100] sm:$0xff]
    %v1779 = vld [vmem:[#allocation14 + $0x108] sm:$0xff]
    %v1780 = vld [vmem:[#allocation14 + $0x110] sm:$0xff]
    %v1781 = vld [vmem:[#allocation14 + $0x118] sm:$0xff]
    %v1782 = vld [vmem:[#allocation14 + $0x120] sm:$0xff]
    %v1783 = vld [vmem:[#allocation14 + $0x128] sm:$0xff]
    %v1784 = vld [vmem:[#allocation14 + $0x130] sm:$0xff]
    %v1785 = vld [vmem:[#allocation14 + $0x138] sm:$0xff]
    %v1786 = vld [vmem:[#allocation14 + $0x140] sm:$0xff]
    %v1787 = vld [vmem:[#allocation14 + $0x148] sm:$0xff]
    %v1788 = vld [vmem:[#allocation14 + $0x150] sm:$0xff]
    %v1789 = vld [vmem:[#allocation14 + $0x158] sm:$0xff]
    %v1790 = vld [vmem:[#allocation14 + $0x160] sm:$0xff]
    %v1791 = vld [vmem:[#allocation14 + $0x168] sm:$0xff]
    %v1792 = vld [vmem:[#allocation14 + $0x170] sm:$0xff]
    %v1793 = vld [vmem:[#allocation14 + $0x178] sm:$0xff]
    %v1794 = vld [vmem:[#allocation14 + $0x180] sm:$0xff]
    %v1795 = vld [vmem:[#allocation14 + $0x188] sm:$0xff]
    %v1796 = vld [vmem:[#allocation14 + $0x190] sm:$0xff]
    %v1797 = vld [vmem:[#allocation14 + $0x198] sm:$0xff]
    %v1798 = vld [vmem:[#allocation14 + $0x1a0] sm:$0xff]
    %v1799 = vld [vmem:[#allocation14 + $0x1a8] sm:$0xff]
    %v1800 = vld [vmem:[#allocation14 + $0x1b0] sm:$0xff]
    %v1801 = vld [vmem:[#allocation14 + $0x1b8] sm:$0xff]
    %v1802 = vld [vmem:[#allocation14 + $0x1c0] sm:$0xff]
    %v1803 = vld [vmem:[#allocation14 + $0x1c8] sm:$0xff]
    %v1804 = vld [vmem:[#allocation14 + $0x1d0] sm:$0xff]
    %v1805 = vld [vmem:[#allocation14 + $0x1d8] sm:$0xff]
    %v1806 = vld [vmem:[#allocation14 + $0x1e0] sm:$0xff]
    %v1807 = vld [vmem:[#allocation14 + $0x1e8] sm:$0xff]
    %v1808 = vld [vmem:[#allocation14 + $0x1f0] sm:$0xff]
    %v1809 = vld [vmem:[#allocation14 + $0x1f8] sm:$0xff]
    %v1810 = vld [vmem:[#allocation14 + $0x200] sm:$0xff]
    %v1811 = vld [vmem:[#allocation14 + $0x208] sm:$0xff]
    %v1812 = vld [vmem:[#allocation14 + $0x210] sm:$0xff]
    %v1813 = vld [vmem:[#allocation14 + $0x218] sm:$0xff]
    %v1814 = vld [vmem:[#allocation14 + $0x220] sm:$0xff]
    %v1815 = vld [vmem:[#allocation14 + $0x228] sm:$0xff]
    %v1816 = vld [vmem:[#allocation14 + $0x230] sm:$0xff]
    %v1817 = vld [vmem:[#allocation14 + $0x238] sm:$0xff]
    %v1818 = vld [vmem:[#allocation14 + $0x240] sm:$0xff]
    %v1819 = vld [vmem:[#allocation14 + $0x248] sm:$0xff]
    %v1820 = vld [vmem:[#allocation14 + $0x250] sm:$0xff]
    %v1821 = vld [vmem:[#allocation14 + $0x258] sm:$0xff]
    %v1822 = vld [vmem:[#allocation14 + $0x260] sm:$0xff]
    %v1823 = vld [vmem:[#allocation14 + $0x268] sm:$0xff]
    %v1824 = vld [vmem:[#allocation14 + $0x270] sm:$0xff]
    %v1825 = vld [vmem:[#allocation14 + $0x278] sm:$0xff]
    %v1826 = vld [vmem:[#allocation14 + $0x280] sm:$0xff]
    %v1827 = vld [vmem:[#allocation14 + $0x288] sm:$0xff]
    %v1828 = vld [vmem:[#allocation14 + $0x290] sm:$0xff]
    %v1829 = vld [vmem:[#allocation14 + $0x298] sm:$0xff]
    %v1830 = vld [vmem:[#allocation14 + $0x2a0] sm:$0xff]
    %v1831 = vld [vmem:[#allocation14 + $0x2a8] sm:$0xff]
    %v1832 = vld [vmem:[#allocation14 + $0x2b0] sm:$0xff]
    %v1833 = vld [vmem:[#allocation14 + $0x2b8] sm:$0xff]
    %v1834 = vld [vmem:[#allocation14 + $0x2c0] sm:$0xff]
    %v1835 = vld [vmem:[#allocation14 + $0x2c8] sm:$0xff]
    %v1836 = vld [vmem:[#allocation14 + $0x2d0] sm:$0xff]
    %v1837 = vld [vmem:[#allocation14 + $0x2d8] sm:$0xff]
    %v1838 = vld [vmem:[#allocation14 + $0x2e0] sm:$0xff]
    %v1839 = vld [vmem:[#allocation14 + $0x2e8] sm:$0xff]
    %v1840 = vld [vmem:[#allocation14 + $0x2f0] sm:$0xff]
    %v1841 = vld [vmem:[#allocation14 + $0x2f8] sm:$0xff]
    %v1842 = vld [vmem:[#allocation14 + $0x300] sm:$0xff]
    %v1843 = vld [vmem:[#allocation14 + $0x308] sm:$0xff]
    %v1844 = vld [vmem:[#allocation14 + $0x310] sm:$0xff]
    %v1845 = vld [vmem:[#allocation14 + $0x318] sm:$0xff]
    %v1946 = vunpack.c.l.b16 %v1746
    %v1947 = vunpack.c.h.b16 %v1746
    %v1948 = vunpack.c.l.b16 %v1747
    %v1949 = vunpack.c.h.b16 %v1747
    %v1950 = vunpack.c.l.b16 %v1748
    %v1951 = vunpack.c.h.b16 %v1748
    %v1952 = vunpack.c.l.b16 %v1749
    %v1953 = vunpack.c.h.b16 %v1749
    %v1954 = vunpack.c.l.b16 %v1750
    %v1955 = vunpack.c.h.b16 %v1750
    %v1956 = vunpack.c.l.b16 %v1751
    %v1957 = vunpack.c.h.b16 %v1751
    %v1958 = vunpack.c.l.b16 %v1752
    %v1959 = vunpack.c.h.b16 %v1752
    %v1960 = vunpack.c.l.b16 %v1753
    %v1961 = vunpack.c.h.b16 %v1753
    %v1962 = vunpack.c.l.b16 %v1754
    %v1963 = vunpack.c.h.b16 %v1754
    %v1964 = vunpack.c.l.b16 %v1755
    %v1965 = vunpack.c.h.b16 %v1755
    %v1966 = vunpack.c.l.b16 %v1756
    %v1967 = vunpack.c.h.b16 %v1756
    %v1968 = vunpack.c.l.b16 %v1757
    %v1969 = vunpack.c.h.b16 %v1757
    %v1970 = vunpack.c.l.b16 %v1758
    %v1971 = vunpack.c.h.b16 %v1758
    %v1972 = vunpack.c.l.b16 %v1759
    %v1973 = vunpack.c.h.b16 %v1759
    %v1974 = vunpack.c.l.b16 %v1760
    %v1975 = vunpack.c.h.b16 %v1760
    %v1976 = vunpack.c.l.b16 %v1761
    %v1977 = vunpack.c.h.b16 %v1761
    %v1978 = vunpack.c.l.b16 %v1762
    %v1979 = vunpack.c.h.b16 %v1762
    %v1980 = vunpack.c.l.b16 %v1763
    %v1981 = vunpack.c.h.b16 %v1763
    %v1982 = vunpack.c.l.b16 %v1764
    %v1983 = vunpack.c.h.b16 %v1764
    %v1984 = vunpack.c.l.b16 %v1765
    %v1985 = vunpack.c.h.b16 %v1765
    %v1986 = vunpack.c.l.b16 %v1766
    %v1987 = vunpack.c.h.b16 %v1766
    %v1988 = vunpack.c.l.b16 %v1767
    %v1989 = vunpack.c.h.b16 %v1767
    %v1990 = vunpack.c.l.b16 %v1768
    %v1991 = vunpack.c.h.b16 %v1768
    %v1992 = vunpack.c.l.b16 %v1769
    %v1993 = vunpack.c.h.b16 %v1769
    %v1994 = vunpack.c.l.b16 %v1770
    %v1995 = vunpack.c.h.b16 %v1770
    %v1996 = vunpack.c.l.b16 %v1771
    %v1997 = vunpack.c.h.b16 %v1771
    %v1998 = vunpack.c.l.b16 %v1772
    %v1999 = vunpack.c.h.b16 %v1772
    %v2000 = vunpack.c.l.b16 %v1773
    %v2001 = vunpack.c.h.b16 %v1773
    %v2002 = vunpack.c.l.b16 %v1774
    %v2003 = vunpack.c.h.b16 %v1774
    %v2004 = vunpack.c.l.b16 %v1775
    %v2005 = vunpack.c.h.b16 %v1775
    %v2006 = vunpack.c.l.b16 %v1776
    %v2007 = vunpack.c.h.b16 %v1776
    %v2008 = vunpack.c.l.b16 %v1777
    %v2009 = vunpack.c.h.b16 %v1777
    %v2010 = vunpack.c.l.b16 %v1778
    %v2011 = vunpack.c.h.b16 %v1778
    %v2012 = vunpack.c.l.b16 %v1779
    %v2013 = vunpack.c.h.b16 %v1779
    %v2014 = vunpack.c.l.b16 %v1780
    %v2015 = vunpack.c.h.b16 %v1780
    %v2016 = vunpack.c.l.b16 %v1781
    %v2017 = vunpack.c.h.b16 %v1781
    %v2018 = vunpack.c.l.b16 %v1782
    %v2019 = vunpack.c.h.b16 %v1782
    %v2020 = vunpack.c.l.b16 %v1783
    %v2021 = vunpack.c.h.b16 %v1783
    %v2022 = vunpack.c.l.b16 %v1784
    %v2023 = vunpack.c.h.b16 %v1784
    %v2024 = vunpack.c.l.b16 %v1785
    %v2025 = vunpack.c.h.b16 %v1785
    %v2026 = vunpack.c.l.b16 %v1786
    %v2027 = vunpack.c.h.b16 %v1786
    %v2028 = vunpack.c.l.b16 %v1787
    %v2029 = vunpack.c.h.b16 %v1787
    %v2030 = vunpack.c.l.b16 %v1788
    %v2031 = vunpack.c.h.b16 %v1788
    %v2032 = vunpack.c.l.b16 %v1789
    %v2033 = vunpack.c.h.b16 %v1789
    %v2034 = vunpack.c.l.b16 %v1790
    %v2035 = vunpack.c.h.b16 %v1790
    %v2036 = vunpack.c.l.b16 %v1791
    %v2037 = vunpack.c.h.b16 %v1791
    %v2038 = vunpack.c.l.b16 %v1792
    %v2039 = vunpack.c.h.b16 %v1792
    %v2040 = vunpack.c.l.b16 %v1793
    %v2041 = vunpack.c.h.b16 %v1793
    %v2042 = vunpack.c.l.b16 %v1794
    %v2043 = vunpack.c.h.b16 %v1794
    %v2044 = vunpack.c.l.b16 %v1795
    %v2045 = vunpack.c.h.b16 %v1795
    %v2046 = vunpack.c.l.b16 %v1796
    %v2047 = vunpack.c.h.b16 %v1796
    %v2048 = vunpack.c.l.b16 %v1797
    %v2049 = vunpack.c.h.b16 %v1797
    %v2050 = vunpack.c.l.b16 %v1798
    %v2051 = vunpack.c.h.b16 %v1798
    %v2052 = vunpack.c.l.b16 %v1799
    %v2053 = vunpack.c.h.b16 %v1799
    %v2054 = vunpack.c.l.b16 %v1800
    %v2055 = vunpack.c.h.b16 %v1800
    %v2056 = vunpack.c.l.b16 %v1801
    %v2057 = vunpack.c.h.b16 %v1801
    %v2058 = vunpack.c.l.b16 %v1802
    %v2059 = vunpack.c.h.b16 %v1802
    %v2060 = vunpack.c.l.b16 %v1803
    %v2061 = vunpack.c.h.b16 %v1803
    %v2062 = vunpack.c.l.b16 %v1804
    %v2063 = vunpack.c.h.b16 %v1804
    %v2064 = vunpack.c.l.b16 %v1805
    %v2065 = vunpack.c.h.b16 %v1805
    %v2066 = vunpack.c.l.b16 %v1806
    %v2067 = vunpack.c.h.b16 %v1806
    %v2068 = vunpack.c.l.b16 %v1807
    %v2069 = vunpack.c.h.b16 %v1807
    %v2070 = vunpack.c.l.b16 %v1808
    %v2071 = vunpack.c.h.b16 %v1808
    %v2072 = vunpack.c.l.b16 %v1809
    %v2073 = vunpack.c.h.b16 %v1809
    %v2074 = vunpack.c.l.b16 %v1810
    %v2075 = vunpack.c.h.b16 %v1810
    %v2076 = vunpack.c.l.b16 %v1811
    %v2077 = vunpack.c.h.b16 %v1811
    %v2078 = vunpack.c.l.b16 %v1812
    %v2079 = vunpack.c.h.b16 %v1812
    %v2080 = vunpack.c.l.b16 %v1813
    %v2081 = vunpack.c.h.b16 %v1813
    %v2082 = vunpack.c.l.b16 %v1814
    %v2083 = vunpack.c.h.b16 %v1814
    %v2084 = vunpack.c.l.b16 %v1815
    %v2085 = vunpack.c.h.b16 %v1815
    %v2086 = vunpack.c.l.b16 %v1816
    %v2087 = vunpack.c.h.b16 %v1816
    %v2088 = vunpack.c.l.b16 %v1817
    %v2089 = vunpack.c.h.b16 %v1817
    %v2090 = vunpack.c.l.b16 %v1818
    %v2091 = vunpack.c.h.b16 %v1818
    %v2092 = vunpack.c.l.b16 %v1819
    %v2093 = vunpack.c.h.b16 %v1819
    %v2094 = vunpack.c.l.b16 %v1820
    %v2095 = vunpack.c.h.b16 %v1820
    %v2096 = vunpack.c.l.b16 %v1821
    %v2097 = vunpack.c.h.b16 %v1821
    %v2098 = vunpack.c.l.b16 %v1822
    %v2099 = vunpack.c.h.b16 %v1822
    %v2100 = vunpack.c.l.b16 %v1823
    %v2101 = vunpack.c.h.b16 %v1823
    %v2102 = vunpack.c.l.b16 %v1824
    %v2103 = vunpack.c.h.b16 %v1824
    %v2104 = vunpack.c.l.b16 %v1825
    %v2105 = vunpack.c.h.b16 %v1825
    %v2106 = vunpack.c.l.b16 %v1826
    %v2107 = vunpack.c.h.b16 %v1826
    %v2108 = vunpack.c.l.b16 %v1827
    %v2109 = vunpack.c.h.b16 %v1827
    %v2110 = vunpack.c.l.b16 %v1828
    %v2111 = vunpack.c.h.b16 %v1828
    %v2112 = vunpack.c.l.b16 %v1829
    %v2113 = vunpack.c.h.b16 %v1829
    %v2114 = vunpack.c.l.b16 %v1830
    %v2115 = vunpack.c.h.b16 %v1830
    %v2116 = vunpack.c.l.b16 %v1831
    %v2117 = vunpack.c.h.b16 %v1831
    %v2118 = vunpack.c.l.b16 %v1832
    %v2119 = vunpack.c.h.b16 %v1832
    %v2120 = vunpack.c.l.b16 %v1833
    %v2121 = vunpack.c.h.b16 %v1833
    %v2122 = vunpack.c.l.b16 %v1834
    %v2123 = vunpack.c.h.b16 %v1834
    %v2124 = vunpack.c.l.b16 %v1835
    %v2125 = vunpack.c.h.b16 %v1835
    %v2126 = vunpack.c.l.b16 %v1836
    %v2127 = vunpack.c.h.b16 %v1836
    %v2128 = vunpack.c.l.b16 %v1837
    %v2129 = vunpack.c.h.b16 %v1837
    %v2130 = vunpack.c.l.b16 %v1838
    %v2131 = vunpack.c.h.b16 %v1838
    %v2132 = vunpack.c.l.b16 %v1839
    %v2133 = vunpack.c.h.b16 %v1839
    %v2134 = vunpack.c.l.b16 %v1840
    %v2135 = vunpack.c.h.b16 %v1840
    %v2136 = vunpack.c.l.b16 %v1841
    %v2137 = vunpack.c.h.b16 %v1841
    %v2138 = vunpack.c.l.b16 %v1842
    %v2139 = vunpack.c.h.b16 %v1842
    %v2140 = vunpack.c.l.b16 %v1843
    %v2141 = vunpack.c.h.b16 %v1843
    %v2142 = vunpack.c.l.b16 %v1844
    %v2143 = vunpack.c.h.b16 %v1844
    %v2144 = vunpack.c.l.b16 %v1845
    %v2145 = vunpack.c.h.b16 %v1845
    %v2146 = vpack.c.b16 %v1950, %v1946
    %v2147 = vpack.c.b16 %v1951, %v1947
    %v2148 = vpack.c.b16 %v1952, %v1948
    %v2149 = vpack.c.b16 %v1953, %v1949
    %v2150 = vpack.c.b16 %v1958, %v1954
    %v2151 = vpack.c.b16 %v1959, %v1955
    %v2152 = vpack.c.b16 %v1960, %v1956
    %v2153 = vpack.c.b16 %v1961, %v1957
    %v2154 = vpack.c.b16 %v1966, %v1962
    %v2155 = vpack.c.b16 %v1967, %v1963
    %v2156 = vpack.c.b16 %v1968, %v1964
    %v2157 = vpack.c.b16 %v1969, %v1965
    %v2158 = vpack.c.b16 %v1974, %v1970
    %v2159 = vpack.c.b16 %v1975, %v1971
    %v2160 = vpack.c.b16 %v1976, %v1972
    %v2161 = vpack.c.b16 %v1977, %v1973
    %v2162 = vpack.c.b16 %v1982, %v1978
    %v2163 = vpack.c.b16 %v1983, %v1979
    %v2164 = vpack.c.b16 %v1984, %v1980
    %v2165 = vpack.c.b16 %v1985, %v1981
    %v2166 = vpack.c.b16 %v1990, %v1986
    %v2167 = vpack.c.b16 %v1991, %v1987
    %v2168 = vpack.c.b16 %v1992, %v1988
    %v2169 = vpack.c.b16 %v1993, %v1989
    %v2170 = vpack.c.b16 %v1998, %v1994
    %v2171 = vpack.c.b16 %v1999, %v1995
    %v2172 = vpack.c.b16 %v2000, %v1996
    %v2173 = vpack.c.b16 %v2001, %v1997
    %v2174 = vpack.c.b16 %v2006, %v2002
    %v2175 = vpack.c.b16 %v2007, %v2003
    %v2176 = vpack.c.b16 %v2008, %v2004
    %v2177 = vpack.c.b16 %v2009, %v2005
    %v2178 = vpack.c.b16 %v2014, %v2010
    %v2179 = vpack.c.b16 %v2015, %v2011
    %v2180 = vpack.c.b16 %v2016, %v2012
    %v2181 = vpack.c.b16 %v2017, %v2013
    %v2182 = vpack.c.b16 %v2022, %v2018
    %v2183 = vpack.c.b16 %v2023, %v2019
    %v2184 = vpack.c.b16 %v2024, %v2020
    %v2185 = vpack.c.b16 %v2025, %v2021
    %v2186 = vpack.c.b16 %v2030, %v2026
    %v2187 = vpack.c.b16 %v2031, %v2027
    %v2188 = vpack.c.b16 %v2032, %v2028
    %v2189 = vpack.c.b16 %v2033, %v2029
    %v2190 = vpack.c.b16 %v2038, %v2034
    %v2191 = vpack.c.b16 %v2039, %v2035
    %v2192 = vpack.c.b16 %v2040, %v2036
    %v2193 = vpack.c.b16 %v2041, %v2037
    %v2194 = vpack.c.b16 %v2046, %v2042
    %v2195 = vpack.c.b16 %v2047, %v2043
    %v2196 = vpack.c.b16 %v2048, %v2044
    %v2197 = vpack.c.b16 %v2049, %v2045
    %v2198 = vpack.c.b16 %v2054, %v2050
    %v2199 = vpack.c.b16 %v2055, %v2051
    %v2200 = vpack.c.b16 %v2056, %v2052
    %v2201 = vpack.c.b16 %v2057, %v2053
    %v2202 = vpack.c.b16 %v2062, %v2058
    %v2203 = vpack.c.b16 %v2063, %v2059
    %v2204 = vpack.c.b16 %v2064, %v2060
    %v2205 = vpack.c.b16 %v2065, %v2061
    %v2206 = vpack.c.b16 %v2070, %v2066
    %v2207 = vpack.c.b16 %v2071, %v2067
    %v2208 = vpack.c.b16 %v2072, %v2068
    %v2209 = vpack.c.b16 %v2073, %v2069
    %v2210 = vpack.c.b16 %v2078, %v2074
    %v2211 = vpack.c.b16 %v2079, %v2075
    %v2212 = vpack.c.b16 %v2080, %v2076
    %v2213 = vpack.c.b16 %v2081, %v2077
    %v2214 = vpack.c.b16 %v2086, %v2082
    %v2215 = vpack.c.b16 %v2087, %v2083
    %v2216 = vpack.c.b16 %v2088, %v2084
    %v2217 = vpack.c.b16 %v2089, %v2085
    %v2218 = vpack.c.b16 %v2094, %v2090
    %v2219 = vpack.c.b16 %v2095, %v2091
    %v2220 = vpack.c.b16 %v2096, %v2092
    %v2221 = vpack.c.b16 %v2097, %v2093
    %v2222 = vpack.c.b16 %v2102, %v2098
    %v2223 = vpack.c.b16 %v2103, %v2099
    %v2224 = vpack.c.b16 %v2104, %v2100
    %v2225 = vpack.c.b16 %v2105, %v2101
    %v2226 = vpack.c.b16 %v2110, %v2106
    %v2227 = vpack.c.b16 %v2111, %v2107
    %v2228 = vpack.c.b16 %v2112, %v2108
    %v2229 = vpack.c.b16 %v2113, %v2109
    %v2230 = vpack.c.b16 %v2118, %v2114
    %v2231 = vpack.c.b16 %v2119, %v2115
    %v2232 = vpack.c.b16 %v2120, %v2116
    %v2233 = vpack.c.b16 %v2121, %v2117
    %v2234 = vpack.c.b16 %v2126, %v2122
    %v2235 = vpack.c.b16 %v2127, %v2123
    %v2236 = vpack.c.b16 %v2128, %v2124
    %v2237 = vpack.c.b16 %v2129, %v2125
    %v2238 = vpack.c.b16 %v2134, %v2130
    %v2239 = vpack.c.b16 %v2135, %v2131
    %v2240 = vpack.c.b16 %v2136, %v2132
    %v2241 = vpack.c.b16 %v2137, %v2133
    %v2242 = vpack.c.b16 %v2142, %v2138
    %v2243 = vpack.c.b16 %v2143, %v2139
    %v2244 = vpack.c.b16 %v2144, %v2140
    %v2245 = vpack.c.b16 %v2145, %v2141
    %v2347 = vsel %vm1370, %v1745, 0
    %2349 = vmatprep.subr.bf16.mxu0 %v2175
    %2350 = vmatpush1.bf16.msra.mxu0 %v2174
    %2351 = vmatprep.subr.bf16.mxu0 %v2171
    %2352 = vmatpush1.bf16.msra.mxu0 %v2170
    %2353 = vmatprep.subr.bf16.mxu0 %v2167
    %2354 = vmatpush1.bf16.msra.mxu0 %v2166
    %2355 = vmatprep.subr.bf16.mxu0 %v2163
    %2356 = vmatpush1.bf16.msra.mxu0 %v2162
    %2357 = vmatprep.subr.bf16.mxu0 %v2159
    %2358 = vmatpush1.bf16.msra.mxu0 %v2158
    %2359 = vmatprep.subr.bf16.mxu0 %v2155
    %2360 = vmatpush1.bf16.msra.mxu0 %v2154
    %2361 = vmatprep.subr.bf16.mxu0 %v2151
    %2362 = vmatpush1.bf16.msra.mxu0 %v2150
    %2363 = vmatprep.subr.bf16.mxu0 %v2147
    %2364 = vmatpush1.bf16.msra.mxu0 %v2146
    %2365 = vmatprep.subr.bf16.mxu0 %v2207
    %2366 = vmatpush2.bf16.msra.mxu0 %v2206
    %2367 = vmatprep.subr.bf16.mxu0 %v2203
    %2368 = vmatpush2.bf16.msra.mxu0 %v2202
    %2369 = vmatprep.subr.bf16.mxu0 %v2199
    %2370 = vmatpush2.bf16.msra.mxu0 %v2198
    %2371 = vmatprep.subr.bf16.mxu0 %v2195
    %2372 = vmatpush2.bf16.msra.mxu0 %v2194
    %2373 = vmatprep.subr.bf16.mxu0 %v2191
    %2374 = vmatpush2.bf16.msra.mxu0 %v2190
    %2375 = vmatprep.subr.bf16.mxu0 %v2187
    %2376 = vmatpush2.bf16.msra.mxu0 %v2186
    %2377 = vmatprep.subr.bf16.mxu0 %v2183
    %2378 = vmatpush2.bf16.msra.mxu0 %v2182
    %2379 = vmatprep.subr.bf16.mxu0 %v2179
    %2380 = vmatpush2.bf16.msra.mxu0 %v2178
    %2381 = vmatprep.mubr.bf16.mxu0 %v1743
    %2382 = vmatmul.mubr.bf16.gmra.mxu0 %v1742
    %v2383 = vpop.f32.mrf.mxu0
    %v2384 = vadd.f32 0.0, %v2383
    %v2385 = vpop.f32.mrf.mxu0
    %v2386 = vadd.f32 0.0, %v2385
    %v2387 = vpop.f32.mrf.mxu0
    %v2388 = vpop.f32.mrf.mxu0
    %2389 = vdwg.mxu0
    %2390 = vmatprep.subr.bf16.mxu0 %v2239
    %2391 = vmatpush1.bf16.msra.mxu0 %v2238
    %2392 = vmatprep.subr.bf16.mxu0 %v2235
    %2393 = vmatpush1.bf16.msra.mxu0 %v2234
    %2394 = vmatprep.subr.bf16.mxu0 %v2231
    %2395 = vmatpush1.bf16.msra.mxu0 %v2230
    %2396 = vmatprep.subr.bf16.mxu0 %v2227
    %2397 = vmatpush1.bf16.msra.mxu0 %v2226
    %2398 = vmatprep.subr.bf16.mxu0 %v2223
    %2399 = vmatpush1.bf16.msra.mxu0 %v2222
    %2400 = vmatprep.subr.bf16.mxu0 %v2219
    %2401 = vmatpush1.bf16.msra.mxu0 %v2218
    %2402 = vmatprep.subr.bf16.mxu0 %v2215
    %2403 = vmatpush1.bf16.msra.mxu0 %v2214
    %2404 = vmatprep.subr.bf16.mxu0 %v2211
    %2405 = vmatpush1.bf16.msra.mxu0 %v2210
    %2406 = vmatprep.subr.bf16.mxu0 0
    %2407 = vmatpush2.bf16.msra.mxu0 0
    %2408 = vmatprep.subr.bf16.mxu0 0
    %2409 = vmatpush2.bf16.msra.mxu0 0
    %2410 = vmatprep.subr.bf16.mxu0 0
    %2411 = vmatpush2.bf16.msra.mxu0 0
    %2412 = vmatprep.subr.bf16.mxu0 0
    %2413 = vmatpush2.bf16.msra.mxu0 0
    %2414 = vmatprep.subr.bf16.mxu0 0
    %2415 = vmatpush2.bf16.msra.mxu0 0
    %2416 = vmatprep.subr.bf16.mxu0 0
    %2417 = vmatpush2.bf16.msra.mxu0 0
    %2418 = vmatprep.subr.bf16.mxu0 0
    %2419 = vmatpush2.bf16.msra.mxu0 0
    %2420 = vmatprep.subr.bf16.mxu0 %v2243
    %2421 = vmatpush2.bf16.msra.mxu0 %v2242
    %2422 = vmatprep.mubr.bf16.mxu0 %v2347
    %2423 = vmatmul.mubr.bf16.gmra.mxu0 %v1744
    %v2424 = vpop.f32.mrf.mxu0
    %v2425 = vadd.f32 %v2384, %v2424
    %v2426 = vpop.f32.mrf.mxu0
    %v2427 = vadd.f32 %v2386, %v2426
    %v2428 = vpop.f32.mrf.mxu0
    %v2429 = vpop.f32.mrf.mxu0
    %2430 = vdwg.mxu0
    %2431 = vmatprep.subr.bf16.mxu0 %v2177
    %2432 = vmatpush1.bf16.msra.mxu0 %v2176
    %2433 = vmatprep.subr.bf16.mxu0 %v2173
    %2434 = vmatpush1.bf16.msra.mxu0 %v2172
    %2435 = vmatprep.subr.bf16.mxu0 %v2169
    %2436 = vmatpush1.bf16.msra.mxu0 %v2168
    %2437 = vmatprep.subr.bf16.mxu0 %v2165
    %2438 = vmatpush1.bf16.msra.mxu0 %v2164
    %2439 = vmatprep.subr.bf16.mxu0 %v2161
    %2440 = vmatpush1.bf16.msra.mxu0 %v2160
    %2441 = vmatprep.subr.bf16.mxu0 %v2157
    %2442 = vmatpush1.bf16.msra.mxu0 %v2156
    %2443 = vmatprep.subr.bf16.mxu0 %v2153
    %2444 = vmatpush1.bf16.msra.mxu0 %v2152
    %2445 = vmatprep.subr.bf16.mxu0 %v2149
    %2446 = vmatpush1.bf16.msra.mxu0 %v2148
    %2447 = vmatprep.subr.bf16.mxu0 %v2209
    %2448 = vmatpush2.bf16.msra.mxu0 %v2208
    %2449 = vmatprep.subr.bf16.mxu0 %v2205
    %2450 = vmatpush2.bf16.msra.mxu0 %v2204
    %2451 = vmatprep.subr.bf16.mxu0 %v2201
    %2452 = vmatpush2.bf16.msra.mxu0 %v2200
    %2453 = vmatprep.subr.bf16.mxu0 %v2197
    %2454 = vmatpush2.bf16.msra.mxu0 %v2196
    %2455 = vmatprep.subr.bf16.mxu0 %v2193
    %2456 = vmatpush2.bf16.msra.mxu0 %v2192
    %2457 = vmatprep.subr.bf16.mxu0 %v2189
    %2458 = vmatpush2.bf16.msra.mxu0 %v2188
    %2459 = vmatprep.subr.bf16.mxu0 %v2185
    %2460 = vmatpush2.bf16.msra.mxu0 %v2184
    %2461 = vmatprep.subr.bf16.mxu0 %v2181
    %2462 = vmatpush2.bf16.msra.mxu0 %v2180
    %2463 = vmatprep.mubr.bf16.mxu0 %v1743
    %2464 = vmatmul.mubr.bf16.gmra.mxu0 %v1742
    %v2465 = vpop.f32.mrf.mxu0
    %v2466 = vadd.f32 0.0, %v2465
    %v2467 = vpop.f32.mrf.mxu0
    %v2468 = vadd.f32 0.0, %v2467
    %v2469 = vpop.f32.mrf.mxu0
    %v2470 = vpop.f32.mrf.mxu0
    %2471 = vdwg.mxu0
    %2472 = vmatprep.subr.bf16.mxu0 %v2241
    %2473 = vmatpush1.bf16.msra.mxu0 %v2240
    %2474 = vmatprep.subr.bf16.mxu0 %v2237
    %2475 = vmatpush1.bf16.msra.mxu0 %v2236
    %2476 = vmatprep.subr.bf16.mxu0 %v2233
    %2477 = vmatpush1.bf16.msra.mxu0 %v2232
    %2478 = vmatprep.subr.bf16.mxu0 %v2229
    %2479 = vmatpush1.bf16.msra.mxu0 %v2228
    %2480 = vmatprep.subr.bf16.mxu0 %v2225
    %2481 = vmatpush1.bf16.msra.mxu0 %v2224
    %2482 = vmatprep.subr.bf16.mxu0 %v2221
    %2483 = vmatpush1.bf16.msra.mxu0 %v2220
    %2484 = vmatprep.subr.bf16.mxu0 %v2217
    %2485 = vmatpush1.bf16.msra.mxu0 %v2216
    %2486 = vmatprep.subr.bf16.mxu0 %v2213
    %2487 = vmatpush1.bf16.msra.mxu0 %v2212
    %2488 = vmatprep.subr.bf16.mxu0 0
    %2489 = vmatpush2.bf16.msra.mxu0 0
    %2490 = vmatprep.subr.bf16.mxu0 0
    %2491 = vmatpush2.bf16.msra.mxu0 0
    %2492 = vmatprep.subr.bf16.mxu0 0
    %2493 = vmatpush2.bf16.msra.mxu0 0
    %2494 = vmatprep.subr.bf16.mxu0 0
    %2495 = vmatpush2.bf16.msra.mxu0 0
    %2496 = vmatprep.subr.bf16.mxu0 0
    %2497 = vmatpush2.bf16.msra.mxu0 0
    %2498 = vmatprep.subr.bf16.mxu0 0
    %2499 = vmatpush2.bf16.msra.mxu0 0
    %2500 = vmatprep.subr.bf16.mxu0 0
    %2501 = vmatpush2.bf16.msra.mxu0 0
    %2502 = vmatprep.subr.bf16.mxu0 %v2245
    %2503 = vmatpush2.bf16.msra.mxu0 %v2244
    %2504 = vmatprep.mubr.bf16.mxu0 %v2347
    %2505 = vmatmul.mubr.bf16.gmra.mxu0 %v1744
    %v2506 = vpop.f32.mrf.mxu0
    %v2507 = vadd.f32 %v2466, %v2506
    %v2508 = vpop.f32.mrf.mxu0
    %v2509 = vadd.f32 %v2468, %v2508
    %v2510 = vpop.f32.mrf.mxu0
    %v2511 = vpop.f32.mrf.mxu0
    %2512 = vdwg.mxu0
    %v2513 = vsel %vm638, %v2425, 0.0
    %v2514 = vsel %vm638, %v2427, 0.0
    %v2515 = vadd.f32 %v2513, %v2514
    %v2516 = vsel %vm638, %v2507, 0.0
    %v2517 = vadd.f32 %v2515, %v2516
    %v2518 = vsel %vm644, %v2509, 0.0
    %v2519 = vadd.f32 %v2517, %v2518
    %2520 = vadd.xlane.f32.xlu0 %v2519
    %v2521 = vpop.xlane.xlu0 %2520
    %v2522 = vmul.f32 %v2521, %v649
    %v2523 = vmul.f32 %v2425, %v2425
    %v2524 = vmul.f32 %v2427, %v2427
    %v2525 = vmul.f32 %v2507, %v2507
    %v2526 = vmul.f32 %v2509, %v2509
    %v2527 = vsel %vm638, %v2523, 0.0
    %v2528 = vsel %vm638, %v2524, 0.0
    %v2529 = vadd.f32 %v2527, %v2528
    %v2530 = vsel %vm638, %v2525, 0.0
    %v2531 = vadd.f32 %v2529, %v2530
    %v2532 = vsel %vm644, %v2526, 0.0
    %v2533 = vadd.f32 %v2531, %v2532
    %2534 = vadd.xlane.f32.xlu0 %v2533
    %v2535 = vpop.xlane.xlu0 %2534
    %v2536 = vmul.f32 %v2535, %v649
    %v2537 = vmul.f32 %v2522, %v2522
    %v2538 = vsub.f32 %v2536, %v2537
    %v2539 = vmax.f32 %v2538, 0.0
    %v2540 = vsub.f32 %v2425, %v2522
    %v2541 = vsub.f32 %v2427, %v2522
    %v2542 = vsub.f32 %v2507, %v2522
    %v2543 = vsub.f32 %v2509, %v2522
    %v2544 = vadd.f32 %v2539, 1e-05
    %v2545 = vrsqrt.pop %v2544
    %v2546 = vmul.f32 %v2540, %v2545
    %v2547 = vmul.f32 %v2541, %v2545
    %v2548 = vmul.f32 %v2542, %v2545
    %v2549 = vmul.f32 %v2543, %v2545
    %v2550 = vld [vmem:[#allocation16] sm:$0xf]
    %v2552 = vlaneseq
    %v2553 = vshrl.u32 %v2552, 7
    %v2554 = vsub.s32 0, %v2553
    %v2555 = vrot.slane %v2550, %v2554
    %v2556 = vlaneseq
    %v2557 = vshrl.u32 %v2556, 7
    %v2558 = vsub.s32 1, %v2557
    %v2559 = vrot.slane %v2550, %v2558
    %v2560 = vlaneseq
    %v2561 = vshrl.u32 %v2560, 7
    %v2562 = vsub.s32 2, %v2561
    %v2563 = vrot.slane %v2550, %v2562
    %v2564 = vlaneseq
    %v2565 = vshrl.u32 %v2564, 7
    %v2566 = vsub.s32 3, %v2565
    %v2567 = vrot.slane %v2550, %v2566
    %v2572 = vmul.f32 %v2546, %v2555
    %v2573 = vmul.f32 %v2547, %v2559
    %v2574 = vmul.f32 %v2548, %v2563
    %v2575 = vmul.f32 %v2549, %v2567
    %v2576 = vld [vmem:[#allocation17] sm:$0xf]
    %v2578 = vlaneseq
    %v2579 = vshrl.u32 %v2578, 7
    %v2580 = vsub.s32 0, %v2579
    %v2581 = vrot.slane %v2576, %v2580
    %v2582 = vlaneseq
    %v2583 = vshrl.u32 %v2582, 7
    %v2584 = vsub.s32 1, %v2583
    %v2585 = vrot.slane %v2576, %v2584
    %v2586 = vlaneseq
    %v2587 = vshrl.u32 %v2586, 7
    %v2588 = vsub.s32 2, %v2587
    %v2589 = vrot.slane %v2576, %v2588
    %v2590 = vlaneseq
    %v2591 = vshrl.u32 %v2590, 7
    %v2592 = vsub.s32 3, %v2591
    %v2593 = vrot.slane %v2576, %v2592
    %v2598 = vadd.f32 %v2572, %v2581
    %v2599 = vadd.f32 %v2573, %v2585
    %v2600 = vadd.f32 %v2574, %v2589
    %v2601 = vadd.f32 %v2575, %v2593
    %v2602 = vmul.f32 %v2598, 0.5
    %v2603 = vmul.f32 %v2599, 0.5
    %v2604 = vmul.f32 %v2600, 0.5
    %v2605 = vmul.f32 %v2601, 0.5
    %v2606 = vmul.f32 %v2598, 0.044715
    %v2607 = vmul.f32 %v2599, 0.044715
    %v2608 = vmul.f32 %v2600, 0.044715
    %v2609 = vmul.f32 %v2601, 0.044715
    %v2610 = vmul.f32 %v2606, %v2598
    %v2611 = vmul.f32 %v2607, %v2599
    %v2612 = vmul.f32 %v2608, %v2600
    %v2613 = vmul.f32 %v2609, %v2601
    %v2614 = vmul.f32 %v2610, %v2598
    %v2615 = vmul.f32 %v2611, %v2599
    %v2616 = vmul.f32 %v2612, %v2600
    %v2617 = vmul.f32 %v2613, %v2601
    %v2618 = vadd.f32 %v2598, %v2614
    %v2619 = vadd.f32 %v2599, %v2615
    %v2620 = vadd.f32 %v2600, %v2616
    %v2621 = vadd.f32 %v2601, %v2617
    %v2622 = vmul.f32 %v2618, 0.7978846
    %v2623 = vmul.f32 %v2619, 0.7978846
    %v2624 = vmul.f32 %v2620, 0.7978846
    %v2625 = vmul.f32 %v2621, 0.7978846
    %v2626 = vtanh.pop %v2622
    %v2627 = vtanh.pop %v2623
    %v2628 = vtanh.pop %v2624
    %v2629 = vtanh.pop %v2625
    %v2630 = vadd.f32 %v2626, 1.0
    %v2631 = vadd.f32 %v2627, 1.0
    %v2632 = vadd.f32 %v2628, 1.0
    %v2633 = vadd.f32 %v2629, 1.0
    %v2634 = vmul.f32 %v2602, %v2630
    %v2635 = vmul.f32 %v2603, %v2631
    %v2636 = vmul.f32 %v2604, %v2632
    %v2637 = vmul.f32 %v2605, %v2633
    %v2638 = vpack.c.bf16 %v2634, %v2634
    %v2639 = vpack.c.bf16 %v2635, %v2635
    %v2640 = vpack.c.bf16 %v2636, %v2636
    %v2641 = vpack.c.bf16 %v2637, %v2637
    %v2642 = vld [vmem:[#allocation19] sm:$0xff]
    %v2643 = vld [vmem:[#allocation19 + $0x8] sm:$0xff]
    %v2644 = vld [vmem:[#allocation19 + $0x10] sm:$0xff]
    %v2645 = vld [vmem:[#allocation19 + $0x18] sm:$0xff]
    %v2646 = vld [vmem:[#allocation19 + $0x20] sm:$0xff]
    %v2647 = vld [vmem:[#allocation19 + $0x28] sm:$0xff]
    %v2648 = vld [vmem:[#allocation19 + $0x30] sm:$0xff]
    %v2649 = vld [vmem:[#allocation19 + $0x38] sm:$0xff]
    %v2650 = vld [vmem:[#allocation19 + $0x40] sm:$0xff]
    %v2651 = vld [vmem:[#allocation19 + $0x48] sm:$0xff]
    %v2652 = vld [vmem:[#allocation19 + $0x50] sm:$0xff]
    %v2653 = vld [vmem:[#allocation19 + $0x58] sm:$0xff]
    %v2654 = vld [vmem:[#allocation19 + $0x60] sm:$0xff]
    %v2655 = vld [vmem:[#allocation19 + $0x68] sm:$0xff]
    %v2656 = vld [vmem:[#allocation19 + $0x70] sm:$0xff]
    %v2657 = vld [vmem:[#allocation19 + $0x78] sm:$0xff]
    %v2658 = vld [vmem:[#allocation19 + $0x80] sm:$0xff]
    %v2659 = vld [vmem:[#allocation19 + $0x88] sm:$0xff]
    %v2660 = vld [vmem:[#allocation19 + $0x90] sm:$0xff]
    %v2661 = vld [vmem:[#allocation19 + $0x98] sm:$0xff]
    %v2662 = vld [vmem:[#allocation19 + $0xa0] sm:$0xff]
    %v2663 = vld [vmem:[#allocation19 + $0xa8] sm:$0xff]
    %v2664 = vld [vmem:[#allocation19 + $0xb0] sm:$0xff]
    %v2665 = vld [vmem:[#allocation19 + $0xb8] sm:$0xff]
    %v2666 = vld [vmem:[#allocation19 + $0xc0] sm:$0xff]
    %v2667 = vld [vmem:[#allocation19 + $0xc8] sm:$0xff]
    %v2668 = vld [vmem:[#allocation19 + $0xd0] sm:$0xff]
    %v2669 = vld [vmem:[#allocation19 + $0xd8] sm:$0xff]
    %v2670 = vld [vmem:[#allocation19 + $0xe0] sm:$0xff]
    %v2671 = vld [vmem:[#allocation19 + $0xe8] sm:$0xff]
    %v2672 = vld [vmem:[#allocation19 + $0xf0] sm:$0xff]
    %v2673 = vld [vmem:[#allocation19 + $0xf8] sm:$0xff]
    %v2674 = vld [vmem:[#allocation19 + $0x100] sm:$0xff]
    %v2675 = vld [vmem:[#allocation19 + $0x108] sm:$0xff]
    %v2676 = vld [vmem:[#allocation19 + $0x110] sm:$0xff]
    %v2677 = vld [vmem:[#allocation19 + $0x118] sm:$0xff]
    %v2678 = vld [vmem:[#allocation19 + $0x120] sm:$0xff]
    %v2679 = vld [vmem:[#allocation19 + $0x128] sm:$0xff]
    %v2680 = vld [vmem:[#allocation19 + $0x130] sm:$0xff]
    %v2681 = vld [vmem:[#allocation19 + $0x138] sm:$0xff]
    %v2682 = vld [vmem:[#allocation19 + $0x140] sm:$0xff]
    %v2683 = vld [vmem:[#allocation19 + $0x148] sm:$0xff]
    %v2684 = vld [vmem:[#allocation19 + $0x150] sm:$0xff]
    %v2685 = vld [vmem:[#allocation19 + $0x158] sm:$0xff]
    %v2686 = vld [vmem:[#allocation19 + $0x160] sm:$0xff]
    %v2687 = vld [vmem:[#allocation19 + $0x168] sm:$0xff]
    %v2688 = vld [vmem:[#allocation19 + $0x170] sm:$0xff]
    %v2689 = vld [vmem:[#allocation19 + $0x178] sm:$0xff]
    %v2690 = vld [vmem:[#allocation19 + $0x180] sm:$0xff]
    %v2691 = vld [vmem:[#allocation19 + $0x188] sm:$0xff]
    %v2692 = vld [vmem:[#allocation19 + $0x190] sm:$0xff]
    %v2693 = vld [vmem:[#allocation19 + $0x198] sm:$0xff]
    %v2694 = vld [vmem:[#allocation19 + $0x1a0] sm:$0xff]
    %v2695 = vld [vmem:[#allocation19 + $0x1a8] sm:$0xff]
    %v2696 = vld [vmem:[#allocation19 + $0x1b0] sm:$0xff]
    %v2697 = vld [vmem:[#allocation19 + $0x1b8] sm:$0xff]
    %v2698 = vld [vmem:[#allocation19 + $0x1c0] sm:$0xff]
    %v2699 = vld [vmem:[#allocation19 + $0x1c8] sm:$0xff]
    %v2700 = vld [vmem:[#allocation19 + $0x1d0] sm:$0xff]
    %v2701 = vld [vmem:[#allocation19 + $0x1d8] sm:$0xff]
    %v2702 = vld [vmem:[#allocation19 + $0x1e0] sm:$0xff]
    %v2703 = vld [vmem:[#allocation19 + $0x1e8] sm:$0xff]
    %v2704 = vld [vmem:[#allocation19 + $0x1f0] sm:$0xff]
    %v2705 = vld [vmem:[#allocation19 + $0x1f8] sm:$0xff]
    %v2706 = vld [vmem:[#allocation19 + $0x200] sm:$0xff]
    %v2707 = vld [vmem:[#allocation19 + $0x208] sm:$0xff]
    %v2708 = vld [vmem:[#allocation19 + $0x210] sm:$0xff]
    %v2709 = vld [vmem:[#allocation19 + $0x218] sm:$0xff]
    %v2710 = vld [vmem:[#allocation19 + $0x220] sm:$0xff]
    %v2711 = vld [vmem:[#allocation19 + $0x228] sm:$0xff]
    %v2712 = vld [vmem:[#allocation19 + $0x230] sm:$0xff]
    %v2713 = vld [vmem:[#allocation19 + $0x238] sm:$0xff]
    %v2714 = vld [vmem:[#allocation19 + $0x240] sm:$0xff]
    %v2715 = vld [vmem:[#allocation19 + $0x248] sm:$0xff]
    %v2716 = vld [vmem:[#allocation19 + $0x250] sm:$0xff]
    %v2717 = vld [vmem:[#allocation19 + $0x258] sm:$0xff]
    %v2718 = vld [vmem:[#allocation19 + $0x260] sm:$0xff]
    %v2719 = vld [vmem:[#allocation19 + $0x268] sm:$0xff]
    %v2720 = vld [vmem:[#allocation19 + $0x270] sm:$0xff]
    %v2721 = vld [vmem:[#allocation19 + $0x278] sm:$0xff]
    %v2722 = vld [vmem:[#allocation19 + $0x280] sm:$0xff]
    %v2723 = vld [vmem:[#allocation19 + $0x288] sm:$0xff]
    %v2724 = vld [vmem:[#allocation19 + $0x290] sm:$0xff]
    %v2725 = vld [vmem:[#allocation19 + $0x298] sm:$0xff]
    %v2726 = vld [vmem:[#allocation19 + $0x2a0] sm:$0xff]
    %v2727 = vld [vmem:[#allocation19 + $0x2a8] sm:$0xff]
    %v2728 = vld [vmem:[#allocation19 + $0x2b0] sm:$0xff]
    %v2729 = vld [vmem:[#allocation19 + $0x2b8] sm:$0xff]
    %v2730 = vld [vmem:[#allocation19 + $0x2c0] sm:$0xff]
    %v2731 = vld [vmem:[#allocation19 + $0x2c8] sm:$0xff]
    %v2732 = vld [vmem:[#allocation19 + $0x2d0] sm:$0xff]
    %v2733 = vld [vmem:[#allocation19 + $0x2d8] sm:$0xff]
    %v2734 = vld [vmem:[#allocation19 + $0x2e0] sm:$0xff]
    %v2735 = vld [vmem:[#allocation19 + $0x2e8] sm:$0xff]
    %v2736 = vld [vmem:[#allocation19 + $0x2f0] sm:$0xff]
    %v2737 = vld [vmem:[#allocation19 + $0x2f8] sm:$0xff]
    %v2738 = vld [vmem:[#allocation19 + $0x300] sm:$0xff]
    %v2739 = vld [vmem:[#allocation19 + $0x308] sm:$0xff]
    %v2740 = vld [vmem:[#allocation19 + $0x310] sm:$0xff]
    %v2741 = vld [vmem:[#allocation19 + $0x318] sm:$0xff]
    %v2842 = vunpack.c.l.b16 %v2642
    %v2843 = vunpack.c.h.b16 %v2642
    %v2844 = vunpack.c.l.b16 %v2643
    %v2845 = vunpack.c.h.b16 %v2643
    %v2846 = vunpack.c.l.b16 %v2644
    %v2847 = vunpack.c.h.b16 %v2644
    %v2848 = vunpack.c.l.b16 %v2645
    %v2849 = vunpack.c.h.b16 %v2645
    %v2850 = vunpack.c.l.b16 %v2646
    %v2851 = vunpack.c.h.b16 %v2646
    %v2852 = vunpack.c.l.b16 %v2647
    %v2853 = vunpack.c.h.b16 %v2647
    %v2854 = vunpack.c.l.b16 %v2648
    %v2855 = vunpack.c.h.b16 %v2648
    %v2856 = vunpack.c.l.b16 %v2649
    %v2857 = vunpack.c.h.b16 %v2649
    %v2858 = vunpack.c.l.b16 %v2650
    %v2859 = vunpack.c.h.b16 %v2650
    %v2860 = vunpack.c.l.b16 %v2651
    %v2861 = vunpack.c.h.b16 %v2651
    %v2862 = vunpack.c.l.b16 %v2652
    %v2863 = vunpack.c.h.b16 %v2652
    %v2864 = vunpack.c.l.b16 %v2653
    %v2865 = vunpack.c.h.b16 %v2653
    %v2866 = vunpack.c.l.b16 %v2654
    %v2867 = vunpack.c.h.b16 %v2654
    %v2868 = vunpack.c.l.b16 %v2655
    %v2869 = vunpack.c.h.b16 %v2655
    %v2870 = vunpack.c.l.b16 %v2656
    %v2871 = vunpack.c.h.b16 %v2656
    %v2872 = vunpack.c.l.b16 %v2657
    %v2873 = vunpack.c.h.b16 %v2657
    %v2874 = vunpack.c.l.b16 %v2658
    %v2875 = vunpack.c.h.b16 %v2658
    %v2876 = vunpack.c.l.b16 %v2659
    %v2877 = vunpack.c.h.b16 %v2659
    %v2878 = vunpack.c.l.b16 %v2660
    %v2879 = vunpack.c.h.b16 %v2660
    %v2880 = vunpack.c.l.b16 %v2661
    %v2881 = vunpack.c.h.b16 %v2661
    %v2882 = vunpack.c.l.b16 %v2662
    %v2883 = vunpack.c.h.b16 %v2662
    %v2884 = vunpack.c.l.b16 %v2663
    %v2885 = vunpack.c.h.b16 %v2663
    %v2886 = vunpack.c.l.b16 %v2664
    %v2887 = vunpack.c.h.b16 %v2664
    %v2888 = vunpack.c.l.b16 %v2665
    %v2889 = vunpack.c.h.b16 %v2665
    %v2890 = vunpack.c.l.b16 %v2666
    %v2891 = vunpack.c.h.b16 %v2666
    %v2892 = vunpack.c.l.b16 %v2667
    %v2893 = vunpack.c.h.b16 %v2667
    %v2894 = vunpack.c.l.b16 %v2668
    %v2895 = vunpack.c.h.b16 %v2668
    %v2896 = vunpack.c.l.b16 %v2669
    %v2897 = vunpack.c.h.b16 %v2669
    %v2898 = vunpack.c.l.b16 %v2670
    %v2899 = vunpack.c.h.b16 %v2670
    %v2900 = vunpack.c.l.b16 %v2671
    %v2901 = vunpack.c.h.b16 %v2671
    %v2902 = vunpack.c.l.b16 %v2672
    %v2903 = vunpack.c.h.b16 %v2672
    %v2904 = vunpack.c.l.b16 %v2673
    %v2905 = vunpack.c.h.b16 %v2673
    %v2906 = vunpack.c.l.b16 %v2674
    %v2907 = vunpack.c.h.b16 %v2674
    %v2908 = vunpack.c.l.b16 %v2675
    %v2909 = vunpack.c.h.b16 %v2675
    %v2910 = vunpack.c.l.b16 %v2676
    %v2911 = vunpack.c.h.b16 %v2676
    %v2912 = vunpack.c.l.b16 %v2677
    %v2913 = vunpack.c.h.b16 %v2677
    %v2914 = vunpack.c.l.b16 %v2678
    %v2915 = vunpack.c.h.b16 %v2678
    %v2916 = vunpack.c.l.b16 %v2679
    %v2917 = vunpack.c.h.b16 %v2679
    %v2918 = vunpack.c.l.b16 %v2680
    %v2919 = vunpack.c.h.b16 %v2680
    %v2920 = vunpack.c.l.b16 %v2681
    %v2921 = vunpack.c.h.b16 %v2681
    %v2922 = vunpack.c.l.b16 %v2682
    %v2923 = vunpack.c.h.b16 %v2682
    %v2924 = vunpack.c.l.b16 %v2683
    %v2925 = vunpack.c.h.b16 %v2683
    %v2926 = vunpack.c.l.b16 %v2684
    %v2927 = vunpack.c.h.b16 %v2684
    %v2928 = vunpack.c.l.b16 %v2685
    %v2929 = vunpack.c.h.b16 %v2685
    %v2930 = vunpack.c.l.b16 %v2686
    %v2931 = vunpack.c.h.b16 %v2686
    %v2932 = vunpack.c.l.b16 %v2687
    %v2933 = vunpack.c.h.b16 %v2687
    %v2934 = vunpack.c.l.b16 %v2688
    %v2935 = vunpack.c.h.b16 %v2688
    %v2936 = vunpack.c.l.b16 %v2689
    %v2937 = vunpack.c.h.b16 %v2689
    %v2938 = vunpack.c.l.b16 %v2690
    %v2939 = vunpack.c.h.b16 %v2690
    %v2940 = vunpack.c.l.b16 %v2691
    %v2941 = vunpack.c.h.b16 %v2691
    %v2942 = vunpack.c.l.b16 %v2692
    %v2943 = vunpack.c.h.b16 %v2692
    %v2944 = vunpack.c.l.b16 %v2693
    %v2945 = vunpack.c.h.b16 %v2693
    %v2946 = vunpack.c.l.b16 %v2694
    %v2947 = vunpack.c.h.b16 %v2694
    %v2948 = vunpack.c.l.b16 %v2695
    %v2949 = vunpack.c.h.b16 %v2695
    %v2950 = vunpack.c.l.b16 %v2696
    %v2951 = vunpack.c.h.b16 %v2696
    %v2952 = vunpack.c.l.b16 %v2697
    %v2953 = vunpack.c.h.b16 %v2697
    %v2954 = vunpack.c.l.b16 %v2698
    %v2955 = vunpack.c.h.b16 %v2698
    %v2956 = vunpack.c.l.b16 %v2699
    %v2957 = vunpack.c.h.b16 %v2699
    %v2958 = vunpack.c.l.b16 %v2700
    %v2959 = vunpack.c.h.b16 %v2700
    %v2960 = vunpack.c.l.b16 %v2701
    %v2961 = vunpack.c.h.b16 %v2701
    %v2962 = vunpack.c.l.b16 %v2702
    %v2963 = vunpack.c.h.b16 %v2702
    %v2964 = vunpack.c.l.b16 %v2703
    %v2965 = vunpack.c.h.b16 %v2703
    %v2966 = vunpack.c.l.b16 %v2704
    %v2967 = vunpack.c.h.b16 %v2704
    %v2968 = vunpack.c.l.b16 %v2705
    %v2969 = vunpack.c.h.b16 %v2705
    %v2970 = vunpack.c.l.b16 %v2706
    %v2971 = vunpack.c.h.b16 %v2706
    %v2972 = vunpack.c.l.b16 %v2707
    %v2973 = vunpack.c.h.b16 %v2707
    %v2974 = vunpack.c.l.b16 %v2708
    %v2975 = vunpack.c.h.b16 %v2708
    %v2976 = vunpack.c.l.b16 %v2709
    %v2977 = vunpack.c.h.b16 %v2709
    %v2978 = vunpack.c.l.b16 %v2710
    %v2979 = vunpack.c.h.b16 %v2710
    %v2980 = vunpack.c.l.b16 %v2711
    %v2981 = vunpack.c.h.b16 %v2711
    %v2982 = vunpack.c.l.b16 %v2712
    %v2983 = vunpack.c.h.b16 %v2712
    %v2984 = vunpack.c.l.b16 %v2713
    %v2985 = vunpack.c.h.b16 %v2713
    %v2986 = vunpack.c.l.b16 %v2714
    %v2987 = vunpack.c.h.b16 %v2714
    %v2988 = vunpack.c.l.b16 %v2715
    %v2989 = vunpack.c.h.b16 %v2715
    %v2990 = vunpack.c.l.b16 %v2716
    %v2991 = vunpack.c.h.b16 %v2716
    %v2992 = vunpack.c.l.b16 %v2717
    %v2993 = vunpack.c.h.b16 %v2717
    %v2994 = vunpack.c.l.b16 %v2718
    %v2995 = vunpack.c.h.b16 %v2718
    %v2996 = vunpack.c.l.b16 %v2719
    %v2997 = vunpack.c.h.b16 %v2719
    %v2998 = vunpack.c.l.b16 %v2720
    %v2999 = vunpack.c.h.b16 %v2720
    %v3000 = vunpack.c.l.b16 %v2721
    %v3001 = vunpack.c.h.b16 %v2721
    %v3002 = vunpack.c.l.b16 %v2722
    %v3003 = vunpack.c.h.b16 %v2722
    %v3004 = vunpack.c.l.b16 %v2723
    %v3005 = vunpack.c.h.b16 %v2723
    %v3006 = vunpack.c.l.b16 %v2724
    %v3007 = vunpack.c.h.b16 %v2724
    %v3008 = vunpack.c.l.b16 %v2725
    %v3009 = vunpack.c.h.b16 %v2725
    %v3010 = vunpack.c.l.b16 %v2726
    %v3011 = vunpack.c.h.b16 %v2726
    %v3012 = vunpack.c.l.b16 %v2727
    %v3013 = vunpack.c.h.b16 %v2727
    %v3014 = vunpack.c.l.b16 %v2728
    %v3015 = vunpack.c.h.b16 %v2728
    %v3016 = vunpack.c.l.b16 %v2729
    %v3017 = vunpack.c.h.b16 %v2729
    %v3018 = vunpack.c.l.b16 %v2730
    %v3019 = vunpack.c.h.b16 %v2730
    %v3020 = vunpack.c.l.b16 %v2731
    %v3021 = vunpack.c.h.b16 %v2731
    %v3022 = vunpack.c.l.b16 %v2732
    %v3023 = vunpack.c.h.b16 %v2732
    %v3024 = vunpack.c.l.b16 %v2733
    %v3025 = vunpack.c.h.b16 %v2733
    %v3026 = vunpack.c.l.b16 %v2734
    %v3027 = vunpack.c.h.b16 %v2734
    %v3028 = vunpack.c.l.b16 %v2735
    %v3029 = vunpack.c.h.b16 %v2735
    %v3030 = vunpack.c.l.b16 %v2736
    %v3031 = vunpack.c.h.b16 %v2736
    %v3032 = vunpack.c.l.b16 %v2737
    %v3033 = vunpack.c.h.b16 %v2737
    %v3034 = vunpack.c.l.b16 %v2738
    %v3035 = vunpack.c.h.b16 %v2738
    %v3036 = vunpack.c.l.b16 %v2739
    %v3037 = vunpack.c.h.b16 %v2739
    %v3038 = vunpack.c.l.b16 %v2740
    %v3039 = vunpack.c.h.b16 %v2740
    %v3040 = vunpack.c.l.b16 %v2741
    %v3041 = vunpack.c.h.b16 %v2741
    %v3042 = vpack.c.b16 %v2846, %v2842
    %v3043 = vpack.c.b16 %v2847, %v2843
    %v3044 = vpack.c.b16 %v2848, %v2844
    %v3045 = vpack.c.b16 %v2849, %v2845
    %v3046 = vpack.c.b16 %v2854, %v2850
    %v3047 = vpack.c.b16 %v2855, %v2851
    %v3048 = vpack.c.b16 %v2856, %v2852
    %v3049 = vpack.c.b16 %v2857, %v2853
    %v3050 = vpack.c.b16 %v2862, %v2858
    %v3051 = vpack.c.b16 %v2863, %v2859
    %v3052 = vpack.c.b16 %v2864, %v2860
    %v3053 = vpack.c.b16 %v2865, %v2861
    %v3054 = vpack.c.b16 %v2870, %v2866
    %v3055 = vpack.c.b16 %v2871, %v2867
    %v3056 = vpack.c.b16 %v2872, %v2868
    %v3057 = vpack.c.b16 %v2873, %v2869
    %v3058 = vpack.c.b16 %v2878, %v2874
    %v3059 = vpack.c.b16 %v2879, %v2875
    %v3060 = vpack.c.b16 %v2880, %v2876
    %v3061 = vpack.c.b16 %v2881, %v2877
    %v3062 = vpack.c.b16 %v2886, %v2882
    %v3063 = vpack.c.b16 %v2887, %v2883
    %v3064 = vpack.c.b16 %v2888, %v2884
    %v3065 = vpack.c.b16 %v2889, %v2885
    %v3066 = vpack.c.b16 %v2894, %v2890
    %v3067 = vpack.c.b16 %v2895, %v2891
    %v3068 = vpack.c.b16 %v2896, %v2892
    %v3069 = vpack.c.b16 %v2897, %v2893
    %v3070 = vpack.c.b16 %v2902, %v2898
    %v3071 = vpack.c.b16 %v2903, %v2899
    %v3072 = vpack.c.b16 %v2904, %v2900
    %v3073 = vpack.c.b16 %v2905, %v2901
    %v3074 = vpack.c.b16 %v2910, %v2906
    %v3075 = vpack.c.b16 %v2911, %v2907
    %v3076 = vpack.c.b16 %v2912, %v2908
    %v3077 = vpack.c.b16 %v2913, %v2909
    %v3078 = vpack.c.b16 %v2918, %v2914
    %v3079 = vpack.c.b16 %v2919, %v2915
    %v3080 = vpack.c.b16 %v2920, %v2916
    %v3081 = vpack.c.b16 %v2921, %v2917
    %v3082 = vpack.c.b16 %v2926, %v2922
    %v3083 = vpack.c.b16 %v2927, %v2923
    %v3084 = vpack.c.b16 %v2928, %v2924
    %v3085 = vpack.c.b16 %v2929, %v2925
    %v3086 = vpack.c.b16 %v2934, %v2930
    %v3087 = vpack.c.b16 %v2935, %v2931
    %v3088 = vpack.c.b16 %v2936, %v2932
    %v3089 = vpack.c.b16 %v2937, %v2933
    %v3090 = vpack.c.b16 %v2942, %v2938
    %v3091 = vpack.c.b16 %v2943, %v2939
    %v3092 = vpack.c.b16 %v2944, %v2940
    %v3093 = vpack.c.b16 %v2945, %v2941
    %v3094 = vpack.c.b16 %v2950, %v2946
    %v3095 = vpack.c.b16 %v2951, %v2947
    %v3096 = vpack.c.b16 %v2952, %v2948
    %v3097 = vpack.c.b16 %v2953, %v2949
    %v3098 = vpack.c.b16 %v2958, %v2954
    %v3099 = vpack.c.b16 %v2959, %v2955
    %v3100 = vpack.c.b16 %v2960, %v2956
    %v3101 = vpack.c.b16 %v2961, %v2957
    %v3102 = vpack.c.b16 %v2966, %v2962
    %v3103 = vpack.c.b16 %v2967, %v2963
    %v3104 = vpack.c.b16 %v2968, %v2964
    %v3105 = vpack.c.b16 %v2969, %v2965
    %v3106 = vpack.c.b16 %v2974, %v2970
    %v3107 = vpack.c.b16 %v2975, %v2971
    %v3108 = vpack.c.b16 %v2976, %v2972
    %v3109 = vpack.c.b16 %v2977, %v2973
    %v3110 = vpack.c.b16 %v2982, %v2978
    %v3111 = vpack.c.b16 %v2983, %v2979
    %v3112 = vpack.c.b16 %v2984, %v2980
    %v3113 = vpack.c.b16 %v2985, %v2981
    %v3114 = vpack.c.b16 %v2990, %v2986
    %v3115 = vpack.c.b16 %v2991, %v2987
    %v3116 = vpack.c.b16 %v2992, %v2988
    %v3117 = vpack.c.b16 %v2993, %v2989
    %v3118 = vpack.c.b16 %v2998, %v2994
    %v3119 = vpack.c.b16 %v2999, %v2995
    %v3120 = vpack.c.b16 %v3000, %v2996
    %v3121 = vpack.c.b16 %v3001, %v2997
    %v3122 = vpack.c.b16 %v3006, %v3002
    %v3123 = vpack.c.b16 %v3007, %v3003
    %v3124 = vpack.c.b16 %v3008, %v3004
    %v3125 = vpack.c.b16 %v3009, %v3005
    %v3126 = vpack.c.b16 %v3014, %v3010
    %v3127 = vpack.c.b16 %v3015, %v3011
    %v3128 = vpack.c.b16 %v3016, %v3012
    %v3129 = vpack.c.b16 %v3017, %v3013
    %v3130 = vpack.c.b16 %v3022, %v3018
    %v3131 = vpack.c.b16 %v3023, %v3019
    %v3132 = vpack.c.b16 %v3024, %v3020
    %v3133 = vpack.c.b16 %v3025, %v3021
    %v3134 = vpack.c.b16 %v3030, %v3026
    %v3135 = vpack.c.b16 %v3031, %v3027
    %v3136 = vpack.c.b16 %v3032, %v3028
    %v3137 = vpack.c.b16 %v3033, %v3029
    %v3138 = vpack.c.b16 %v3038, %v3034
    %v3139 = vpack.c.b16 %v3039, %v3035
    %v3140 = vpack.c.b16 %v3040, %v3036
    %v3141 = vpack.c.b16 %v3041, %v3037
    %v3243 = vsel %vm1370, %v2641, 0
    %3245 = vmatprep.subr.bf16.mxu0 %v3071
    %3246 = vmatpush1.bf16.msra.mxu0 %v3070
    %3247 = vmatprep.subr.bf16.mxu0 %v3067
    %3248 = vmatpush1.bf16.msra.mxu0 %v3066
    %3249 = vmatprep.subr.bf16.mxu0 %v3063
    %3250 = vmatpush1.bf16.msra.mxu0 %v3062
    %3251 = vmatprep.subr.bf16.mxu0 %v3059
    %3252 = vmatpush1.bf16.msra.mxu0 %v3058
    %3253 = vmatprep.subr.bf16.mxu0 %v3055
    %3254 = vmatpush1.bf16.msra.mxu0 %v3054
    %3255 = vmatprep.subr.bf16.mxu0 %v3051
    %3256 = vmatpush1.bf16.msra.mxu0 %v3050
    %3257 = vmatprep.subr.bf16.mxu0 %v3047
    %3258 = vmatpush1.bf16.msra.mxu0 %v3046
    %3259 = vmatprep.subr.bf16.mxu0 %v3043
    %3260 = vmatpush1.bf16.msra.mxu0 %v3042
    %3261 = vmatprep.subr.bf16.mxu0 %v3103
    %3262 = vmatpush2.bf16.msra.mxu0 %v3102
    %3263 = vmatprep.subr.bf16.mxu0 %v3099
    %3264 = vmatpush2.bf16.msra.mxu0 %v3098
    %3265 = vmatprep.subr.bf16.mxu0 %v3095
    %3266 = vmatpush2.bf16.msra.mxu0 %v3094
    %3267 = vmatprep.subr.bf16.mxu0 %v3091
    %3268 = vmatpush2.bf16.msra.mxu0 %v3090
    %3269 = vmatprep.subr.bf16.mxu0 %v3087
    %3270 = vmatpush2.bf16.msra.mxu0 %v3086
    %3271 = vmatprep.subr.bf16.mxu0 %v3083
    %3272 = vmatpush2.bf16.msra.mxu0 %v3082
    %3273 = vmatprep.subr.bf16.mxu0 %v3079
    %3274 = vmatpush2.bf16.msra.mxu0 %v3078
    %3275 = vmatprep.subr.bf16.mxu0 %v3075
    %3276 = vmatpush2.bf16.msra.mxu0 %v3074
    %3277 = vmatprep.mubr.bf16.mxu0 %v2639
    %3278 = vmatmul.mubr.bf16.gmra.mxu0 %v2638
    %v3279 = vpop.f32.mrf.mxu0
    %v3280 = vadd.f32 0.0, %v3279
    %v3281 = vpop.f32.mrf.mxu0
    %v3282 = vadd.f32 0.0, %v3281
    %v3283 = vpop.f32.mrf.mxu0
    %v3284 = vpop.f32.mrf.mxu0
    %3285 = vdwg.mxu0
    %3286 = vmatprep.subr.bf16.mxu0 %v3135
    %3287 = vmatpush1.bf16.msra.mxu0 %v3134
    %3288 = vmatprep.subr.bf16.mxu0 %v3131
    %3289 = vmatpush1.bf16.msra.mxu0 %v3130
    %3290 = vmatprep.subr.bf16.mxu0 %v3127
    %3291 = vmatpush1.bf16.msra.mxu0 %v3126
    %3292 = vmatprep.subr.bf16.mxu0 %v3123
    %3293 = vmatpush1.bf16.msra.mxu0 %v3122
    %3294 = vmatprep.subr.bf16.mxu0 %v3119
    %3295 = vmatpush1.bf16.msra.mxu0 %v3118
    %3296 = vmatprep.subr.bf16.mxu0 %v3115
    %3297 = vmatpush1.bf16.msra.mxu0 %v3114
    %3298 = vmatprep.subr.bf16.mxu0 %v3111
    %3299 = vmatpush1.bf16.msra.mxu0 %v3110
    %3300 = vmatprep.subr.bf16.mxu0 %v3107
    %3301 = vmatpush1.bf16.msra.mxu0 %v3106
    %3302 = vmatprep.subr.bf16.mxu0 0
    %3303 = vmatpush2.bf16.msra.mxu0 0
    %3304 = vmatprep.subr.bf16.mxu0 0
    %3305 = vmatpush2.bf16.msra.mxu0 0
    %3306 = vmatprep.subr.bf16.mxu0 0
    %3307 = vmatpush2.bf16.msra.mxu0 0
    %3308 = vmatprep.subr.bf16.mxu0 0
    %3309 = vmatpush2.bf16.msra.mxu0 0
    %3310 = vmatprep.subr.bf16.mxu0 0
    %3311 = vmatpush2.bf16.msra.mxu0 0
    %3312 = vmatprep.subr.bf16.mxu0 0
    %3313 = vmatpush2.bf16.msra.mxu0 0
    %3314 = vmatprep.subr.bf16.mxu0 0
    %3315 = vmatpush2.bf16.msra.mxu0 0
    %3316 = vmatprep.subr.bf16.mxu0 %v3139
    %3317 = vmatpush2.bf16.msra.mxu0 %v3138
    %3318 = vmatprep.mubr.bf16.mxu0 %v3243
    %3319 = vmatmul.mubr.bf16.gmra.mxu0 %v2640
    %v3320 = vpop.f32.mrf.mxu0
    %v3321 = vadd.f32 %v3280, %v3320
    %v3322 = vpop.f32.mrf.mxu0
    %v3323 = vadd.f32 %v3282, %v3322
    %v3324 = vpop.f32.mrf.mxu0
    %v3325 = vpop.f32.mrf.mxu0
    %3326 = vdwg.mxu0
    %3327 = vmatprep.subr.bf16.mxu0 %v3073
    %3328 = vmatpush1.bf16.msra.mxu0 %v3072
    %3329 = vmatprep.subr.bf16.mxu0 %v3069
    %3330 = vmatpush1.bf16.msra.mxu0 %v3068
    %3331 = vmatprep.subr.bf16.mxu0 %v3065
    %3332 = vmatpush1.bf16.msra.mxu0 %v3064
    %3333 = vmatprep.subr.bf16.mxu0 %v3061
    %3334 = vmatpush1.bf16.msra.mxu0 %v3060
    %3335 = vmatprep.subr.bf16.mxu0 %v3057
    %3336 = vmatpush1.bf16.msra.mxu0 %v3056
    %3337 = vmatprep.subr.bf16.mxu0 %v3053
    %3338 = vmatpush1.bf16.msra.mxu0 %v3052
    %3339 = vmatprep.subr.bf16.mxu0 %v3049
    %3340 = vmatpush1.bf16.msra.mxu0 %v3048
    %3341 = vmatprep.subr.bf16.mxu0 %v3045
    %3342 = vmatpush1.bf16.msra.mxu0 %v3044
    %3343 = vmatprep.subr.bf16.mxu0 %v3105
    %3344 = vmatpush2.bf16.msra.mxu0 %v3104
    %3345 = vmatprep.subr.bf16.mxu0 %v3101
    %3346 = vmatpush2.bf16.msra.mxu0 %v3100
    %3347 = vmatprep.subr.bf16.mxu0 %v3097
    %3348 = vmatpush2.bf16.msra.mxu0 %v3096
    %3349 = vmatprep.subr.bf16.mxu0 %v3093
    %3350 = vmatpush2.bf16.msra.mxu0 %v3092
    %3351 = vmatprep.subr.bf16.mxu0 %v3089
    %3352 = vmatpush2.bf16.msra.mxu0 %v3088
    %3353 = vmatprep.subr.bf16.mxu0 %v3085
    %3354 = vmatpush2.bf16.msra.mxu0 %v3084
    %3355 = vmatprep.subr.bf16.mxu0 %v3081
    %3356 = vmatpush2.bf16.msra.mxu0 %v3080
    %3357 = vmatprep.subr.bf16.mxu0 %v3077
    %3358 = vmatpush2.bf16.msra.mxu0 %v3076
    %3359 = vmatprep.mubr.bf16.mxu0 %v2639
    %3360 = vmatmul.mubr.bf16.gmra.mxu0 %v2638
    %v3361 = vpop.f32.mrf.mxu0
    %v3362 = vadd.f32 0.0, %v3361
    %v3363 = vpop.f32.mrf.mxu0
    %v3364 = vadd.f32 0.0, %v3363
    %v3365 = vpop.f32.mrf.mxu0
    %v3366 = vpop.f32.mrf.mxu0
    %3367 = vdwg.mxu0
    %3368 = vmatprep.subr.bf16.mxu0 %v3137
    %3369 = vmatpush1.bf16.msra.mxu0 %v3136
    %3370 = vmatprep.subr.bf16.mxu0 %v3133
    %3371 = vmatpush1.bf16.msra.mxu0 %v3132
    %3372 = vmatprep.subr.bf16.mxu0 %v3129
    %3373 = vmatpush1.bf16.msra.mxu0 %v3128
    %3374 = vmatprep.subr.bf16.mxu0 %v3125
    %3375 = vmatpush1.bf16.msra.mxu0 %v3124
    %3376 = vmatprep.subr.bf16.mxu0 %v3121
    %3377 = vmatpush1.bf16.msra.mxu0 %v3120
    %3378 = vmatprep.subr.bf16.mxu0 %v3117
    %3379 = vmatpush1.bf16.msra.mxu0 %v3116
    %3380 = vmatprep.subr.bf16.mxu0 %v3113
    %3381 = vmatpush1.bf16.msra.mxu0 %v3112
    %3382 = vmatprep.subr.bf16.mxu0 %v3109
    %3383 = vmatpush1.bf16.msra.mxu0 %v3108
    %3384 = vmatprep.subr.bf16.mxu0 0
    %3385 = vmatpush2.bf16.msra.mxu0 0
    %3386 = vmatprep.subr.bf16.mxu0 0
    %3387 = vmatpush2.bf16.msra.mxu0 0
    %3388 = vmatprep.subr.bf16.mxu0 0
    %3389 = vmatpush2.bf16.msra.mxu0 0
    %3390 = vmatprep.subr.bf16.mxu0 0
    %3391 = vmatpush2.bf16.msra.mxu0 0
    %3392 = vmatprep.subr.bf16.mxu0 0
    %3393 = vmatpush2.bf16.msra.mxu0 0
    %3394 = vmatprep.subr.bf16.mxu0 0
    %3395 = vmatpush2.bf16.msra.mxu0 0
    %3396 = vmatprep.subr.bf16.mxu0 0
    %3397 = vmatpush2.bf16.msra.mxu0 0
    %3398 = vmatprep.subr.bf16.mxu0 %v3141
    %3399 = vmatpush2.bf16.msra.mxu0 %v3140
    %3400 = vmatprep.mubr.bf16.mxu0 %v3243
    %3401 = vmatmul.mubr.bf16.gmra.mxu0 %v2640
    %v3402 = vpop.f32.mrf.mxu0
    %v3403 = vadd.f32 %v3362, %v3402
    %v3404 = vpop.f32.mrf.mxu0
    %v3405 = vadd.f32 %v3364, %v3404
    %v3406 = vpop.f32.mrf.mxu0
    %v3407 = vpop.f32.mrf.mxu0
    %3408 = vdwg.mxu0
    %v3409 = vsel %vm638, %v3321, 0.0
    %v3410 = vsel %vm638, %v3323, 0.0
    %v3411 = vadd.f32 %v3409, %v3410
    %v3412 = vsel %vm638, %v3403, 0.0
    %v3413 = vadd.f32 %v3411, %v3412
    %v3414 = vsel %vm644, %v3405, 0.0
    %v3415 = vadd.f32 %v3413, %v3414
    %3416 = vadd.xlane.f32.xlu0 %v3415
    %v3417 = vpop.xlane.xlu0 %3416
    %v3418 = vmul.f32 %v3417, %v649
    %v3419 = vmul.f32 %v3321, %v3321
    %v3420 = vmul.f32 %v3323, %v3323
    %v3421 = vmul.f32 %v3403, %v3403
    %v3422 = vmul.f32 %v3405, %v3405
    %v3423 = vsel %vm638, %v3419, 0.0
    %v3424 = vsel %vm638, %v3420, 0.0
    %v3425 = vadd.f32 %v3423, %v3424
    %v3426 = vsel %vm638, %v3421, 0.0
    %v3427 = vadd.f32 %v3425, %v3426
    %v3428 = vsel %vm644, %v3422, 0.0
    %v3429 = vadd.f32 %v3427, %v3428
    %3430 = vadd.xlane.f32.xlu0 %v3429
    %v3431 = vpop.xlane.xlu0 %3430
    %v3432 = vmul.f32 %v3431, %v649
    %v3433 = vmul.f32 %v3418, %v3418
    %v3434 = vsub.f32 %v3432, %v3433
    %v3435 = vmax.f32 %v3434, 0.0
    %v3436 = vsub.f32 %v3321, %v3418
    %v3437 = vsub.f32 %v3323, %v3418
    %v3438 = vsub.f32 %v3403, %v3418
    %v3439 = vsub.f32 %v3405, %v3418
    %v3440 = vadd.f32 %v3435, 1e-05
    %v3441 = vrsqrt.pop %v3440
    %v3442 = vmul.f32 %v3436, %v3441
    %v3443 = vmul.f32 %v3437, %v3441
    %v3444 = vmul.f32 %v3438, %v3441
    %v3445 = vmul.f32 %v3439, %v3441
    %v3446 = vld [vmem:[#allocation20] sm:$0xf]
    %v3448 = vlaneseq
    %v3449 = vshrl.u32 %v3448, 7
    %v3450 = vsub.s32 0, %v3449
    %v3451 = vrot.slane %v3446, %v3450
    %v3452 = vlaneseq
    %v3453 = vshrl.u32 %v3452, 7
    %v3454 = vsub.s32 1, %v3453
    %v3455 = vrot.slane %v3446, %v3454
    %v3456 = vlaneseq
    %v3457 = vshrl.u32 %v3456, 7
    %v3458 = vsub.s32 2, %v3457
    %v3459 = vrot.slane %v3446, %v3458
    %v3460 = vlaneseq
    %v3461 = vshrl.u32 %v3460, 7
    %v3462 = vsub.s32 3, %v3461
    %v3463 = vrot.slane %v3446, %v3462
    %v3468 = vmul.f32 %v3442, %v3451
    %v3469 = vmul.f32 %v3443, %v3455
    %v3470 = vmul.f32 %v3444, %v3459
    %v3471 = vmul.f32 %v3445, %v3463
    %v3472 = vld [vmem:[#allocation22] sm:$0xf]
    %v3474 = vlaneseq
    %v3475 = vshrl.u32 %v3474, 7
    %v3476 = vsub.s32 0, %v3475
    %v3477 = vrot.slane %v3472, %v3476
    %v3478 = vlaneseq
    %v3479 = vshrl.u32 %v3478, 7
    %v3480 = vsub.s32 1, %v3479
    %v3481 = vrot.slane %v3472, %v3480
    %v3482 = vlaneseq
    %v3483 = vshrl.u32 %v3482, 7
    %v3484 = vsub.s32 2, %v3483
    %v3485 = vrot.slane %v3472, %v3484
    %v3486 = vlaneseq
    %v3487 = vshrl.u32 %v3486, 7
    %v3488 = vsub.s32 3, %v3487
    %v3489 = vrot.slane %v3472, %v3488
    %v3494 = vadd.f32 %v3468, %v3477
    %v3495 = vadd.f32 %v3469, %v3481
    %v3496 = vadd.f32 %v3470, %v3485
    %v3497 = vadd.f32 %v3471, %v3489
    %v3498 = vadd.f32 %v1738, %v3494
    %v3499 = vadd.f32 %v1739, %v3495
    %v3500 = vadd.f32 %v1740, %v3496
    %v3501 = vadd.f32 %v1741, %v3497
    %v3502 = vmul.f32 %v3498, 0.5
    %v3503 = vmul.f32 %v3499, 0.5
    %v3504 = vmul.f32 %v3500, 0.5
    %v3505 = vmul.f32 %v3501, 0.5
    %v3506 = vmul.f32 %v3498, 0.044715
    %v3507 = vmul.f32 %v3499, 0.044715
    %v3508 = vmul.f32 %v3500, 0.044715
    %v3509 = vmul.f32 %v3501, 0.044715
    %v3510 = vmul.f32 %v3506, %v3498
    %v3511 = vmul.f32 %v3507, %v3499
    %v3512 = vmul.f32 %v3508, %v3500
    %v3513 = vmul.f32 %v3509, %v3501
    %v3514 = vmul.f32 %v3510, %v3498
    %v3515 = vmul.f32 %v3511, %v3499
    %v3516 = vmul.f32 %v3512, %v3500
    %v3517 = vmul.f32 %v3513, %v3501
    %v3518 = vadd.f32 %v3498, %v3514
    %v3519 = vadd.f32 %v3499, %v3515
    %v3520 = vadd.f32 %v3500, %v3516
    %v3521 = vadd.f32 %v3501, %v3517
    %v3522 = vmul.f32 %v3518, 0.7978846
    %v3523 = vmul.f32 %v3519, 0.7978846
    %v3524 = vmul.f32 %v3520, 0.7978846
    %v3525 = vmul.f32 %v3521, 0.7978846
    %v3526 = vtanh.pop %v3522
    %v3527 = vtanh.pop %v3523
    %v3528 = vtanh.pop %v3524
    %v3529 = vtanh.pop %v3525
    %v3530 = vadd.f32 %v3526, 1.0
    %v3531 = vadd.f32 %v3527, 1.0
    %v3532 = vadd.f32 %v3528, 1.0
    %v3533 = vadd.f32 %v3529, 1.0
    %v3534 = vmul.f32 %v3502, %v3530
    %v3535 = vmul.f32 %v3503, %v3531
    %v3536 = vmul.f32 %v3504, %v3532
    %v3537 = vmul.f32 %v3505, %v3533
    %v3538 = vpack.c.bf16 %v3534, %v3534
    %v3539 = vpack.c.bf16 %v3535, %v3535
    %v3540 = vpack.c.bf16 %v3536, %v3536
    %v3541 = vpack.c.bf16 %v3537, %v3537
    %v3542 = vld [vmem:[%s27] sm:$0xff]
    %v3543 = vld [vmem:[%s27 + $0x8] sm:$0xff]
    %v3544 = vld [vmem:[%s27 + $0x10] sm:$0xff]
    %v3545 = vld [vmem:[%s27 + $0x18] sm:$0xff]
    %v3546 = vld [vmem:[%s27 + $0x20] sm:$0xff]
    %v3547 = vld [vmem:[%s27 + $0x28] sm:$0xff]
    %v3548 = vld [vmem:[%s27 + $0x30] sm:$0xff]
    %v3549 = vld [vmem:[%s27 + $0x38] sm:$0xff]
    %v3550 = vld [vmem:[%s27 + $0x40] sm:$0xff]
    %v3551 = vld [vmem:[%s27 + $0x48] sm:$0xff]
    %v3552 = vld [vmem:[%s27 + $0x50] sm:$0xff]
    %v3553 = vld [vmem:[%s27 + $0x58] sm:$0xff]
    %v3554 = vld [vmem:[%s27 + $0x60] sm:$0xff]
    %v3555 = vld [vmem:[%s27 + $0x68] sm:$0xff]
    %v3556 = vld [vmem:[%s27 + $0x70] sm:$0xff]
    %v3557 = vld [vmem:[%s27 + $0x78] sm:$0xff]
    %v3558 = vld [vmem:[%s27 + $0x80] sm:$0xff]
    %v3559 = vld [vmem:[%s27 + $0x88] sm:$0xff]
    %v3560 = vld [vmem:[%s27 + $0x90] sm:$0xff]
    %v3561 = vld [vmem:[%s27 + $0x98] sm:$0xff]
    %v3562 = vld [vmem:[%s27 + $0xa0] sm:$0xff]
    %v3563 = vld [vmem:[%s27 + $0xa8] sm:$0xff]
    %v3564 = vld [vmem:[%s27 + $0xb0] sm:$0xff]
    %v3565 = vld [vmem:[%s27 + $0xb8] sm:$0xff]
    %v3566 = vld [vmem:[%s27 + $0xc0] sm:$0xff]
    %v3567 = vld [vmem:[%s27 + $0xc8] sm:$0xff]
    %v3568 = vld [vmem:[%s27 + $0xd0] sm:$0xff]
    %v3569 = vld [vmem:[%s27 + $0xd8] sm:$0xff]
    %v3570 = vld [vmem:[%s27 + $0xe0] sm:$0xff]
    %v3571 = vld [vmem:[%s27 + $0xe8] sm:$0xff]
    %v3572 = vld [vmem:[%s27 + $0xf0] sm:$0xff]
    %v3573 = vld [vmem:[%s27 + $0xf8] sm:$0xff]
    %v3574 = vld [vmem:[%s27 + $0x100] sm:$0xff]
    %v3575 = vld [vmem:[%s27 + $0x108] sm:$0xff]
    %v3576 = vld [vmem:[%s27 + $0x110] sm:$0xff]
    %v3577 = vld [vmem:[%s27 + $0x118] sm:$0xff]
    %v3578 = vld [vmem:[%s27 + $0x120] sm:$0xff]
    %v3579 = vld [vmem:[%s27 + $0x128] sm:$0xff]
    %v3580 = vld [vmem:[%s27 + $0x130] sm:$0xff]
    %v3581 = vld [vmem:[%s27 + $0x138] sm:$0xff]
    %v3582 = vld [vmem:[%s27 + $0x140] sm:$0xff]
    %v3583 = vld [vmem:[%s27 + $0x148] sm:$0xff]
    %v3584 = vld [vmem:[%s27 + $0x150] sm:$0xff]
    %v3585 = vld [vmem:[%s27 + $0x158] sm:$0xff]
    %v3586 = vld [vmem:[%s27 + $0x160] sm:$0xff]
    %v3587 = vld [vmem:[%s27 + $0x168] sm:$0xff]
    %v3588 = vld [vmem:[%s27 + $0x170] sm:$0xff]
    %v3589 = vld [vmem:[%s27 + $0x178] sm:$0xff]
    %v3590 = vld [vmem:[%s27 + $0x180] sm:$0xff]
    %v3591 = vld [vmem:[%s27 + $0x188] sm:$0xff]
    %v3642 = vunpack.c.l.b16 %v3542
    %v3643 = vunpack.c.h.b16 %v3542
    %v3644 = vunpack.c.l.b16 %v3543
    %v3645 = vunpack.c.h.b16 %v3543
    %v3646 = vunpack.c.l.b16 %v3544
    %v3647 = vunpack.c.h.b16 %v3544
    %v3648 = vunpack.c.l.b16 %v3545
    %v3649 = vunpack.c.h.b16 %v3545
    %v3650 = vunpack.c.l.b16 %v3546
    %v3651 = vunpack.c.h.b16 %v3546
    %v3652 = vunpack.c.l.b16 %v3547
    %v3653 = vunpack.c.h.b16 %v3547
    %v3654 = vunpack.c.l.b16 %v3548
    %v3655 = vunpack.c.h.b16 %v3548
    %v3656 = vunpack.c.l.b16 %v3549
    %v3657 = vunpack.c.h.b16 %v3549
    %v3658 = vunpack.c.l.b16 %v3550
    %v3659 = vunpack.c.h.b16 %v3550
    %v3660 = vunpack.c.l.b16 %v3551
    %v3661 = vunpack.c.h.b16 %v3551
    %v3662 = vunpack.c.l.b16 %v3552
    %v3663 = vunpack.c.h.b16 %v3552
    %v3664 = vunpack.c.l.b16 %v3553
    %v3665 = vunpack.c.h.b16 %v3553
    %v3666 = vunpack.c.l.b16 %v3554
    %v3667 = vunpack.c.h.b16 %v3554
    %v3668 = vunpack.c.l.b16 %v3555
    %v3669 = vunpack.c.h.b16 %v3555
    %v3670 = vunpack.c.l.b16 %v3556
    %v3671 = vunpack.c.h.b16 %v3556
    %v3672 = vunpack.c.l.b16 %v3557
    %v3673 = vunpack.c.h.b16 %v3557
    %v3674 = vunpack.c.l.b16 %v3558
    %v3675 = vunpack.c.h.b16 %v3558
    %v3676 = vunpack.c.l.b16 %v3559
    %v3677 = vunpack.c.h.b16 %v3559
    %v3678 = vunpack.c.l.b16 %v3560
    %v3679 = vunpack.c.h.b16 %v3560
    %v3680 = vunpack.c.l.b16 %v3561
    %v3681 = vunpack.c.h.b16 %v3561
    %v3682 = vunpack.c.l.b16 %v3562
    %v3683 = vunpack.c.h.b16 %v3562
    %v3684 = vunpack.c.l.b16 %v3563
    %v3685 = vunpack.c.h.b16 %v3563
    %v3686 = vunpack.c.l.b16 %v3564
    %v3687 = vunpack.c.h.b16 %v3564
    %v3688 = vunpack.c.l.b16 %v3565
    %v3689 = vunpack.c.h.b16 %v3565
    %v3690 = vunpack.c.l.b16 %v3566
    %v3691 = vunpack.c.h.b16 %v3566
    %v3692 = vunpack.c.l.b16 %v3567
    %v3693 = vunpack.c.h.b16 %v3567
    %v3694 = vunpack.c.l.b16 %v3568
    %v3695 = vunpack.c.h.b16 %v3568
    %v3696 = vunpack.c.l.b16 %v3569
    %v3697 = vunpack.c.h.b16 %v3569
    %v3698 = vunpack.c.l.b16 %v3570
    %v3699 = vunpack.c.h.b16 %v3570
    %v3700 = vunpack.c.l.b16 %v3571
    %v3701 = vunpack.c.h.b16 %v3571
    %v3702 = vunpack.c.l.b16 %v3572
    %v3703 = vunpack.c.h.b16 %v3572
    %v3704 = vunpack.c.l.b16 %v3573
    %v3705 = vunpack.c.h.b16 %v3573
    %v3706 = vunpack.c.l.b16 %v3574
    %v3707 = vunpack.c.h.b16 %v3574
    %v3708 = vunpack.c.l.b16 %v3575
    %v3709 = vunpack.c.h.b16 %v3575
    %v3710 = vunpack.c.l.b16 %v3576
    %v3711 = vunpack.c.h.b16 %v3576
    %v3712 = vunpack.c.l.b16 %v3577
    %v3713 = vunpack.c.h.b16 %v3577
    %v3714 = vunpack.c.l.b16 %v3578
    %v3715 = vunpack.c.h.b16 %v3578
    %v3716 = vunpack.c.l.b16 %v3579
    %v3717 = vunpack.c.h.b16 %v3579
    %v3718 = vunpack.c.l.b16 %v3580
    %v3719 = vunpack.c.h.b16 %v3580
    %v3720 = vunpack.c.l.b16 %v3581
    %v3721 = vunpack.c.h.b16 %v3581
    %v3722 = vunpack.c.l.b16 %v3582
    %v3723 = vunpack.c.h.b16 %v3582
    %v3724 = vunpack.c.l.b16 %v3583
    %v3725 = vunpack.c.h.b16 %v3583
    %v3726 = vunpack.c.l.b16 %v3584
    %v3727 = vunpack.c.h.b16 %v3584
    %v3728 = vunpack.c.l.b16 %v3585
    %v3729 = vunpack.c.h.b16 %v3585
    %v3730 = vunpack.c.l.b16 %v3586
    %v3731 = vunpack.c.h.b16 %v3586
    %v3732 = vunpack.c.l.b16 %v3587
    %v3733 = vunpack.c.h.b16 %v3587
    %v3734 = vunpack.c.l.b16 %v3588
    %v3735 = vunpack.c.h.b16 %v3588
    %v3736 = vunpack.c.l.b16 %v3589
    %v3737 = vunpack.c.h.b16 %v3589
    %v3738 = vunpack.c.l.b16 %v3590
    %v3739 = vunpack.c.h.b16 %v3590
    %v3740 = vunpack.c.l.b16 %v3591
    %v3741 = vunpack.c.h.b16 %v3591
    %v3742 = vpack.c.b16 %v3644, %v3642
    %v3743 = vpack.c.b16 %v3645, %v3643
    %v3744 = vpack.c.b16 %v3648, %v3646
    %v3745 = vpack.c.b16 %v3649, %v3647
    %v3746 = vpack.c.b16 %v3652, %v3650
    %v3747 = vpack.c.b16 %v3653, %v3651
    %v3748 = vpack.c.b16 %v3656, %v3654
    %v3749 = vpack.c.b16 %v3657, %v3655
    %v3750 = vpack.c.b16 %v3660, %v3658
    %v3751 = vpack.c.b16 %v3661, %v3659
    %v3752 = vpack.c.b16 %v3664, %v3662
    %v3753 = vpack.c.b16 %v3665, %v3663
    %v3754 = vpack.c.b16 %v3668, %v3666
    %v3755 = vpack.c.b16 %v3669, %v3667
    %v3756 = vpack.c.b16 %v3672, %v3670
    %v3757 = vpack.c.b16 %v3673, %v3671
    %v3758 = vpack.c.b16 %v3676, %v3674
    %v3759 = vpack.c.b16 %v3677, %v3675
    %v3760 = vpack.c.b16 %v3680, %v3678
    %v3761 = vpack.c.b16 %v3681, %v3679
    %v3762 = vpack.c.b16 %v3684, %v3682
    %v3763 = vpack.c.b16 %v3685, %v3683
    %v3764 = vpack.c.b16 %v3688, %v3686
    %v3765 = vpack.c.b16 %v3689, %v3687
    %v3766 = vpack.c.b16 %v3692, %v3690
    %v3767 = vpack.c.b16 %v3693, %v3691
    %v3768 = vpack.c.b16 %v3696, %v3694
    %v3769 = vpack.c.b16 %v3697, %v3695
    %v3770 = vpack.c.b16 %v3700, %v3698
    %v3771 = vpack.c.b16 %v3701, %v3699
    %v3772 = vpack.c.b16 %v3704, %v3702
    %v3773 = vpack.c.b16 %v3705, %v3703
    %v3774 = vpack.c.b16 %v3708, %v3706
    %v3775 = vpack.c.b16 %v3709, %v3707
    %v3776 = vpack.c.b16 %v3712, %v3710
    %v3777 = vpack.c.b16 %v3713, %v3711
    %v3778 = vpack.c.b16 %v3716, %v3714
    %v3779 = vpack.c.b16 %v3717, %v3715
    %v3780 = vpack.c.b16 %v3720, %v3718
    %v3781 = vpack.c.b16 %v3721, %v3719
    %v3782 = vpack.c.b16 %v3724, %v3722
    %v3783 = vpack.c.b16 %v3725, %v3723
    %v3784 = vpack.c.b16 %v3728, %v3726
    %v3785 = vpack.c.b16 %v3729, %v3727
    %v3786 = vpack.c.b16 %v3732, %v3730
    %v3787 = vpack.c.b16 %v3733, %v3731
    %v3788 = vpack.c.b16 %v3736, %v3734
    %v3789 = vpack.c.b16 %v3737, %v3735
    %v3790 = vpack.c.b16 %v3740, %v3738
    %v3791 = vpack.c.b16 %v3741, %v3739
    %v3843 = vsel %vm1370, %v3541, 0
    %3845 = vmatprep.subr.bf16.mxu0 %v3757
    %3846 = vmatpush1.bf16.msra.mxu0 %v3756
    %3847 = vmatprep.subr.bf16.mxu0 %v3755
    %3848 = vmatpush1.bf16.msra.mxu0 %v3754
    %3849 = vmatprep.subr.bf16.mxu0 %v3753
    %3850 = vmatpush1.bf16.msra.mxu0 %v3752
    %3851 = vmatprep.subr.bf16.mxu0 %v3751
    %3852 = vmatpush1.bf16.msra.mxu0 %v3750
    %3853 = vmatprep.subr.bf16.mxu0 %v3749
    %3854 = vmatpush1.bf16.msra.mxu0 %v3748
    %3855 = vmatprep.subr.bf16.mxu0 %v3747
    %3856 = vmatpush1.bf16.msra.mxu0 %v3746
    %3857 = vmatprep.subr.bf16.mxu0 %v3745
    %3858 = vmatpush1.bf16.msra.mxu0 %v3744
    %3859 = vmatprep.subr.bf16.mxu0 %v3743
    %3860 = vmatpush1.bf16.msra.mxu0 %v3742
    %3861 = vmatprep.subr.bf16.mxu0 %v3773
    %3862 = vmatpush2.bf16.msra.mxu0 %v3772
    %3863 = vmatprep.subr.bf16.mxu0 %v3771
    %3864 = vmatpush2.bf16.msra.mxu0 %v3770
    %3865 = vmatprep.subr.bf16.mxu0 %v3769
    %3866 = vmatpush2.bf16.msra.mxu0 %v3768
    %3867 = vmatprep.subr.bf16.mxu0 %v3767
    %3868 = vmatpush2.bf16.msra.mxu0 %v3766
    %3869 = vmatprep.subr.bf16.mxu0 %v3765
    %3870 = vmatpush2.bf16.msra.mxu0 %v3764
    %3871 = vmatprep.subr.bf16.mxu0 %v3763
    %3872 = vmatpush2.bf16.msra.mxu0 %v3762
    %3873 = vmatprep.subr.bf16.mxu0 %v3761
    %3874 = vmatpush2.bf16.msra.mxu0 %v3760
    %3875 = vmatprep.subr.bf16.mxu0 %v3759
    %3876 = vmatpush2.bf16.msra.mxu0 %v3758
    %3877 = vmatprep.mubr.bf16.mxu0 %v3539
    %3878 = vmatmul.mubr.bf16.gmra.mxu0 %v3538
    %v3879 = vpop.f32.mrf.mxu0
    %v3880 = vadd.f32 0.0, %v3879
    %v3881 = vpop.f32.mrf.mxu0
    %v3882 = vadd.f32 0.0, %v3881
    %v3883 = vpop.f32.mrf.mxu0
    %v3884 = vpop.f32.mrf.mxu0
    %3885 = vdwg.mxu0
    %3886 = vmatprep.subr.bf16.mxu0 %v3789
    %3887 = vmatpush1.bf16.msra.mxu0 %v3788
    %3888 = vmatprep.subr.bf16.mxu0 %v3787
    %3889 = vmatpush1.bf16.msra.mxu0 %v3786
    %3890 = vmatprep.subr.bf16.mxu0 %v3785
    %3891 = vmatpush1.bf16.msra.mxu0 %v3784
    %3892 = vmatprep.subr.bf16.mxu0 %v3783
    %3893 = vmatpush1.bf16.msra.mxu0 %v3782
    %3894 = vmatprep.subr.bf16.mxu0 %v3781
    %3895 = vmatpush1.bf16.msra.mxu0 %v3780
    %3896 = vmatprep.subr.bf16.mxu0 %v3779
    %3897 = vmatpush1.bf16.msra.mxu0 %v3778
    %3898 = vmatprep.subr.bf16.mxu0 %v3777
    %3899 = vmatpush1.bf16.msra.mxu0 %v3776
    %3900 = vmatprep.subr.bf16.mxu0 %v3775
    %3901 = vmatpush1.bf16.msra.mxu0 %v3774
    %3902 = vmatprep.subr.bf16.mxu0 0
    %3903 = vmatpush2.bf16.msra.mxu0 0
    %3904 = vmatprep.subr.bf16.mxu0 0
    %3905 = vmatpush2.bf16.msra.mxu0 0
    %3906 = vmatprep.subr.bf16.mxu0 0
    %3907 = vmatpush2.bf16.msra.mxu0 0
    %3908 = vmatprep.subr.bf16.mxu0 0
    %3909 = vmatpush2.bf16.msra.mxu0 0
    %3910 = vmatprep.subr.bf16.mxu0 0
    %3911 = vmatpush2.bf16.msra.mxu0 0
    %3912 = vmatprep.subr.bf16.mxu0 0
    %3913 = vmatpush2.bf16.msra.mxu0 0
    %3914 = vmatprep.subr.bf16.mxu0 0
    %3915 = vmatpush2.bf16.msra.mxu0 0
    %3916 = vmatprep.subr.bf16.mxu0 %v3791
    %3917 = vmatpush2.bf16.msra.mxu0 %v3790
    %3918 = vmatprep.mubr.bf16.mxu0 %v3843
    %3919 = vmatmul.mubr.bf16.gmra.mxu0 %v3540
    %v3920 = vpop.f32.mrf.mxu0
    %v3921 = vadd.f32 %v3880, %v3920
    %v3922 = vpop.f32.mrf.mxu0
    %v3923 = vadd.f32 %v3882, %v3922
    %v3924 = vpop.f32.mrf.mxu0
    %v3925 = vpop.f32.mrf.mxu0
    %3926 = vdwg.mxu0
    %v3927 = vsel %vm638, %v3921, 0.0
    %vm3928 = vcmask 254976
    %v3929 = vsel %vm3928, %v3923, 0.0
    %v3930 = vadd.f32 %v3927, %v3929
    %3931 = vadd.xlane.f32.xlu0 %v3930
    %v3932 = vpop.xlane.xlu0 %3931
    %v3933 = vrcp.pop 160.0
    %v3934 = vmul.f32 %v3932, %v3933
    %v3935 = vmul.f32 %v3921, %v3921
    %v3936 = vmul.f32 %v3923, %v3923
    %v3937 = vsel %vm638, %v3935, 0.0
    %v3938 = vsel %vm3928, %v3936, 0.0
    %v3939 = vadd.f32 %v3937, %v3938
    %3940 = vadd.xlane.f32.xlu0 %v3939
    %v3941 = vpop.xlane.xlu0 %3940
    %v3942 = vmul.f32 %v3941, %v3933
    %v3943 = vmul.f32 %v3934, %v3934
    %v3944 = vsub.f32 %v3942, %v3943
    %v3945 = vmax.f32 %v3944, 0.0
    %v3946 = vsub.f32 %v3921, %v3934
    %v3947 = vsub.f32 %v3923, %v3934
    %v3948 = vadd.f32 %v3945, 1e-05
    %v3949 = vrsqrt.pop %v3948
    %v3950 = vmul.f32 %v3946, %v3949
    %v3951 = vmul.f32 %v3947, %v3949
    %v3952 = vld [vmem:[%s29] sm:$0x3]
    %v3954 = vlaneseq
    %v3955 = vshrl.u32 %v3954, 7
    %v3956 = vsub.s32 0, %v3955
    %v3957 = vrot.slane %v3952, %v3956
    %v3958 = vlaneseq
    %v3959 = vshrl.u32 %v3958, 7
    %v3960 = vsub.s32 1, %v3959
    %v3961 = vrot.slane %v3952, %v3960
    %v3964 = vmul.f32 %v3950, %v3957
    %v3965 = vmul.f32 %v3951, %v3961
    %v3966 = vld [vmem:[%s31] sm:$0x3]
    %v3968 = vlaneseq
    %v3969 = vshrl.u32 %v3968, 7
    %v3970 = vsub.s32 0, %v3969
    %v3971 = vrot.slane %v3966, %v3970
    %v3972 = vlaneseq
    %v3973 = vshrl.u32 %v3972, 7
    %v3974 = vsub.s32 1, %v3973
    %v3975 = vrot.slane %v3966, %v3974
    %v3978 = vadd.f32 %v3964, %v3971
    %v3979 = vadd.f32 %v3965, %v3975
    %v3980 = vmul.f32 %v3978, 0.5
    %v3981 = vmul.f32 %v3979, 0.5
    %v3982 = vmul.f32 %v3978, 0.044715
    %v3983 = vmul.f32 %v3979, 0.044715
    %v3984 = vmul.f32 %v3982, %v3978
    %v3985 = vmul.f32 %v3983, %v3979
    %v3986 = vmul.f32 %v3984, %v3978
    %v3987 = vmul.f32 %v3985, %v3979
    %v3988 = vadd.f32 %v3978, %v3986
    %v3989 = vadd.f32 %v3979, %v3987
    %v3990 = vmul.f32 %v3988, 0.7978846
    %v3991 = vmul.f32 %v3989, 0.7978846
    %v3992 = vtanh.pop %v3990
    %v3993 = vtanh.pop %v3991
    %v3994 = vadd.f32 %v3992, 1.0
    %v3995 = vadd.f32 %v3993, 1.0
    %v3996 = vmul.f32 %v3980, %v3994
    %v3997 = vmul.f32 %v3981, %v3995
    %v3998 = vpack.c.bf16 %v3996, %v3996
    %v3999 = vpack.c.bf16 %v3997, %v3997
    %v4000 = vld [vmem:[%s33] sm:$0xff]
    %v4001 = vld [vmem:[%s33 + $0x8] sm:$0xff]
    %v4002 = vld [vmem:[%s33 + $0x10] sm:$0xff]
    %v4003 = vld [vmem:[%s33 + $0x18] sm:$0xff]
    %v4004 = vld [vmem:[%s33 + $0x20] sm:$0xff]
    %v4005 = vld [vmem:[%s33 + $0x28] sm:$0xff]
    %v4006 = vld [vmem:[%s33 + $0x30] sm:$0xff]
    %v4007 = vld [vmem:[%s33 + $0x38] sm:$0xff]
    %v4008 = vld [vmem:[%s33 + $0x40] sm:$0xff]
    %v4009 = vld [vmem:[%s33 + $0x48] sm:$0xff]
    %v4010 = vld [vmem:[%s33 + $0x50] sm:$0xff]
    %v4011 = vld [vmem:[%s33 + $0x58] sm:$0xff]
    %v4012 = vld [vmem:[%s33 + $0x60] sm:$0xff]
    %v4013 = vld [vmem:[%s33 + $0x68] sm:$0xff]
    %v4014 = vld [vmem:[%s33 + $0x70] sm:$0xff]
    %v4015 = vld [vmem:[%s33 + $0x78] sm:$0xff]
    %v4016 = vld [vmem:[%s33 + $0x80] sm:$0xff]
    %v4017 = vld [vmem:[%s33 + $0x88] sm:$0xff]
    %v4018 = vld [vmem:[%s33 + $0x90] sm:$0xff]
    %v4019 = vld [vmem:[%s33 + $0x98] sm:$0xff]
    %v4040 = vunpack.c.l.b16 %v4000
    %v4041 = vunpack.c.h.b16 %v4000
    %v4042 = vunpack.c.l.b16 %v4001
    %v4043 = vunpack.c.h.b16 %v4001
    %v4044 = vunpack.c.l.b16 %v4002
    %v4045 = vunpack.c.h.b16 %v4002
    %v4046 = vunpack.c.l.b16 %v4003
    %v4047 = vunpack.c.h.b16 %v4003
    %v4048 = vunpack.c.l.b16 %v4004
    %v4049 = vunpack.c.h.b16 %v4004
    %v4050 = vunpack.c.l.b16 %v4005
    %v4051 = vunpack.c.h.b16 %v4005
    %v4052 = vunpack.c.l.b16 %v4006
    %v4053 = vunpack.c.h.b16 %v4006
    %v4054 = vunpack.c.l.b16 %v4007
    %v4055 = vunpack.c.h.b16 %v4007
    %v4056 = vunpack.c.l.b16 %v4008
    %v4057 = vunpack.c.h.b16 %v4008
    %v4058 = vunpack.c.l.b16 %v4009
    %v4059 = vunpack.c.h.b16 %v4009
    %v4060 = vunpack.c.l.b16 %v4010
    %v4061 = vunpack.c.h.b16 %v4010
    %v4062 = vunpack.c.l.b16 %v4011
    %v4063 = vunpack.c.h.b16 %v4011
    %v4064 = vunpack.c.l.b16 %v4012
    %v4065 = vunpack.c.h.b16 %v4012
    %v4066 = vunpack.c.l.b16 %v4013
    %v4067 = vunpack.c.h.b16 %v4013
    %v4068 = vunpack.c.l.b16 %v4014
    %v4069 = vunpack.c.h.b16 %v4014
    %v4070 = vunpack.c.l.b16 %v4015
    %v4071 = vunpack.c.h.b16 %v4015
    %v4072 = vunpack.c.l.b16 %v4016
    %v4073 = vunpack.c.h.b16 %v4016
    %v4074 = vunpack.c.l.b16 %v4017
    %v4075 = vunpack.c.h.b16 %v4017
    %v4076 = vunpack.c.l.b16 %v4018
    %v4077 = vunpack.c.h.b16 %v4018
    %v4078 = vunpack.c.l.b16 %v4019
    %v4079 = vunpack.c.h.b16 %v4019
    %v4080 = vpack.c.b16 %v4042, %v4040
    %v4081 = vpack.c.b16 %v4043, %v4041
    %v4082 = vpack.c.b16 %v4046, %v4044
    %v4083 = vpack.c.b16 %v4047, %v4045
    %v4084 = vpack.c.b16 %v4050, %v4048
    %v4085 = vpack.c.b16 %v4051, %v4049
    %v4086 = vpack.c.b16 %v4054, %v4052
    %v4087 = vpack.c.b16 %v4055, %v4053
    %v4088 = vpack.c.b16 %v4058, %v4056
    %v4089 = vpack.c.b16 %v4059, %v4057
    %v4090 = vpack.c.b16 %v4062, %v4060
    %v4091 = vpack.c.b16 %v4063, %v4061
    %v4092 = vpack.c.b16 %v4066, %v4064
    %v4093 = vpack.c.b16 %v4067, %v4065
    %v4094 = vpack.c.b16 %v4070, %v4068
    %v4095 = vpack.c.b16 %v4071, %v4069
    %v4096 = vpack.c.b16 %v4074, %v4072
    %v4097 = vpack.c.b16 %v4075, %v4073
    %v4098 = vpack.c.b16 %v4078, %v4076
    %v4099 = vpack.c.b16 %v4079, %v4077
    %vm4120 = vcmask 261120
    %v4122 = vsel %vm4120, %v3999, 0
    %4124 = vmatprep.subr.bf16.mxu0 %v4095
    %4125 = vmatpush1.bf16.msra.mxu0 %v4094
    %4126 = vmatprep.subr.bf16.mxu0 %v4093
    %4127 = vmatpush1.bf16.msra.mxu0 %v4092
    %4128 = vmatprep.subr.bf16.mxu0 %v4091
    %4129 = vmatpush1.bf16.msra.mxu0 %v4090
    %4130 = vmatprep.subr.bf16.mxu0 %v4089
    %4131 = vmatpush1.bf16.msra.mxu0 %v4088
    %4132 = vmatprep.subr.bf16.mxu0 %v4087
    %4133 = vmatpush1.bf16.msra.mxu0 %v4086
    %4134 = vmatprep.subr.bf16.mxu0 %v4085
    %4135 = vmatpush1.bf16.msra.mxu0 %v4084
    %4136 = vmatprep.subr.bf16.mxu0 %v4083
    %4137 = vmatpush1.bf16.msra.mxu0 %v4082
    %4138 = vmatprep.subr.bf16.mxu0 %v4081
    %4139 = vmatpush1.bf16.msra.mxu0 %v4080
    %4140 = vmatprep.subr.bf16.mxu0 0
    %4141 = vmatpush2.bf16.msra.mxu0 0
    %4142 = vmatprep.subr.bf16.mxu0 0
    %4143 = vmatpush2.bf16.msra.mxu0 0
    %4144 = vmatprep.subr.bf16.mxu0 0
    %4145 = vmatpush2.bf16.msra.mxu0 0
    %4146 = vmatprep.subr.bf16.mxu0 0
    %4147 = vmatpush2.bf16.msra.mxu0 0
    %4148 = vmatprep.subr.bf16.mxu0 0
    %4149 = vmatpush2.bf16.msra.mxu0 0
    %4150 = vmatprep.subr.bf16.mxu0 0
    %4151 = vmatpush2.bf16.msra.mxu0 0
    %4152 = vmatprep.subr.bf16.mxu0 %v4099
    %4153 = vmatpush2.bf16.msra.mxu0 %v4098
    %4154 = vmatprep.subr.bf16.mxu0 %v4097
    %4155 = vmatpush2.bf16.msra.mxu0 %v4096
    %4156 = vmatprep.mubr.bf16.mxu0 %v4122
    %4157 = vmatmul.mubr.bf16.gmra.mxu0 %v3998
    %v4158 = vpop.f32.mrf.mxu0
    %v4159 = vadd.f32 0.0, %v4158
    %v4160 = vpop.f32.mrf.mxu0
    %v4161 = vadd.f32 0.0, %v4160
    %v4162 = vpop.f32.mrf.mxu0
    %v4163 = vpop.f32.mrf.mxu0
    %4164 = vdwg.mxu0
    %v4165 = vsel %vm638, %v4159, 0.0
    %v4166 = vsel %vm3928, %v4161, 0.0
    %v4167 = vadd.f32 %v4165, %v4166
    %4168 = vadd.xlane.f32.xlu0 %v4167
    %v4169 = vpop.xlane.xlu0 %4168
    %v4170 = vmul.f32 %v4169, %v3933
    %v4171 = vmul.f32 %v4159, %v4159
    %v4172 = vmul.f32 %v4161, %v4161
    %v4173 = vsel %vm638, %v4171, 0.0
    %v4174 = vsel %vm3928, %v4172, 0.0
    %v4175 = vadd.f32 %v4173, %v4174
    %4176 = vadd.xlane.f32.xlu0 %v4175
    %v4177 = vpop.xlane.xlu0 %4176
    %v4178 = vmul.f32 %v4177, %v3933
    %v4179 = vmul.f32 %v4170, %v4170
    %v4180 = vsub.f32 %v4178, %v4179
    %v4181 = vmax.f32 %v4180, 0.0
    %v4182 = vsub.f32 %v4159, %v4170
    %v4183 = vsub.f32 %v4161, %v4170
    %v4184 = vadd.f32 %v4181, 1e-05
    %v4185 = vrsqrt.pop %v4184
    %v4186 = vmul.f32 %v4182, %v4185
    %v4187 = vmul.f32 %v4183, %v4185
    %v4188 = vld [vmem:[#allocation23] sm:$0x3]
    %v4190 = vlaneseq
    %v4191 = vshrl.u32 %v4190, 7
    %v4192 = vsub.s32 0, %v4191
    %v4193 = vrot.slane %v4188, %v4192
    %v4194 = vlaneseq
    %v4195 = vshrl.u32 %v4194, 7
    %v4196 = vsub.s32 1, %v4195
    %v4197 = vrot.slane %v4188, %v4196
    %v4200 = vmul.f32 %v4186, %v4193
    %v4201 = vmul.f32 %v4187, %v4197
    %v4202 = vld [vmem:[#allocation25] sm:$0x3]
    %v4204 = vlaneseq
    %v4205 = vshrl.u32 %v4204, 7
    %v4206 = vsub.s32 0, %v4205
    %v4207 = vrot.slane %v4202, %v4206
    %v4208 = vlaneseq
    %v4209 = vshrl.u32 %v4208, 7
    %v4210 = vsub.s32 1, %v4209
    %v4211 = vrot.slane %v4202, %v4210
    %v4214 = vadd.f32 %v4200, %v4207
    %v4215 = vadd.f32 %v4201, %v4211
    %v4216 = vmul.f32 %v4214, 0.5
    %v4217 = vmul.f32 %v4215, 0.5
    %v4218 = vmul.f32 %v4214, 0.044715
    %v4219 = vmul.f32 %v4215, 0.044715
    %v4220 = vmul.f32 %v4218, %v4214
    %v4221 = vmul.f32 %v4219, %v4215
    %v4222 = vmul.f32 %v4220, %v4214
    %v4223 = vmul.f32 %v4221, %v4215
    %v4224 = vadd.f32 %v4214, %v4222
    %v4225 = vadd.f32 %v4215, %v4223
    %v4226 = vmul.f32 %v4224, 0.7978846
    %v4227 = vmul.f32 %v4225, 0.7978846
    %v4228 = vtanh.pop %v4226
    %v4229 = vtanh.pop %v4227
    %v4230 = vadd.f32 %v4228, 1.0
    %v4231 = vadd.f32 %v4229, 1.0
    %v4232 = vmul.f32 %v4216, %v4230
    %v4233 = vmul.f32 %v4217, %v4231
    %v4234 = vpack.c.bf16 %v4232, %v4232
    %v4235 = vpack.c.bf16 %v4233, %v4233
    %v4236 = vld [vmem:[%s39] sm:$0xff]
    %v4237 = vld [vmem:[%s39 + $0x8] sm:$0xff]
    %v4238 = vld [vmem:[%s39 + $0x10] sm:$0xff]
    %v4239 = vld [vmem:[%s39 + $0x18] sm:$0xff]
    %v4240 = vld [vmem:[%s39 + $0x20] sm:$0xff]
    %v4241 = vld [vmem:[%s39 + $0x28] sm:$0xff]
    %v4242 = vld [vmem:[%s39 + $0x30] sm:$0xff]
    %v4243 = vld [vmem:[%s39 + $0x38] sm:$0xff]
    %v4244 = vld [vmem:[%s39 + $0x40] sm:$0xff]
    %v4245 = vld [vmem:[%s39 + $0x48] sm:$0xff]
    %v4246 = vld [vmem:[%s39 + $0x50] sm:$0xff]
    %v4247 = vld [vmem:[%s39 + $0x58] sm:$0xff]
    %v4248 = vld [vmem:[%s39 + $0x60] sm:$0xff]
    %v4249 = vld [vmem:[%s39 + $0x68] sm:$0xff]
    %v4250 = vld [vmem:[%s39 + $0x70] sm:$0xff]
    %v4251 = vld [vmem:[%s39 + $0x78] sm:$0xff]
    %v4252 = vld [vmem:[%s39 + $0x80] sm:$0xff]
    %v4253 = vld [vmem:[%s39 + $0x88] sm:$0xff]
    %v4254 = vld [vmem:[%s39 + $0x90] sm:$0xff]
    %v4255 = vld [vmem:[%s39 + $0x98] sm:$0xff]
    %v4276 = vunpack.c.l.b16 %v4236
    %v4277 = vunpack.c.h.b16 %v4236
    %v4278 = vunpack.c.l.b16 %v4237
    %v4279 = vunpack.c.h.b16 %v4237
    %v4280 = vunpack.c.l.b16 %v4238
    %v4281 = vunpack.c.h.b16 %v4238
    %v4282 = vunpack.c.l.b16 %v4239
    %v4283 = vunpack.c.h.b16 %v4239
    %v4284 = vunpack.c.l.b16 %v4240
    %v4285 = vunpack.c.h.b16 %v4240
    %v4286 = vunpack.c.l.b16 %v4241
    %v4287 = vunpack.c.h.b16 %v4241
    %v4288 = vunpack.c.l.b16 %v4242
    %v4289 = vunpack.c.h.b16 %v4242
    %v4290 = vunpack.c.l.b16 %v4243
    %v4291 = vunpack.c.h.b16 %v4243
    %v4292 = vunpack.c.l.b16 %v4244
    %v4293 = vunpack.c.h.b16 %v4244
    %v4294 = vunpack.c.l.b16 %v4245
    %v4295 = vunpack.c.h.b16 %v4245
    %v4296 = vunpack.c.l.b16 %v4246
    %v4297 = vunpack.c.h.b16 %v4246
    %v4298 = vunpack.c.l.b16 %v4247
    %v4299 = vunpack.c.h.b16 %v4247
    %v4300 = vunpack.c.l.b16 %v4248
    %v4301 = vunpack.c.h.b16 %v4248
    %v4302 = vunpack.c.l.b16 %v4249
    %v4303 = vunpack.c.h.b16 %v4249
    %v4304 = vunpack.c.l.b16 %v4250
    %v4305 = vunpack.c.h.b16 %v4250
    %v4306 = vunpack.c.l.b16 %v4251
    %v4307 = vunpack.c.h.b16 %v4251
    %v4308 = vunpack.c.l.b16 %v4252
    %v4309 = vunpack.c.h.b16 %v4252
    %v4310 = vunpack.c.l.b16 %v4253
    %v4311 = vunpack.c.h.b16 %v4253
    %v4312 = vunpack.c.l.b16 %v4254
    %v4313 = vunpack.c.h.b16 %v4254
    %v4314 = vunpack.c.l.b16 %v4255
    %v4315 = vunpack.c.h.b16 %v4255
    %v4316 = vpack.c.b16 %v4278, %v4276
    %v4317 = vpack.c.b16 %v4279, %v4277
    %v4318 = vpack.c.b16 %v4282, %v4280
    %v4319 = vpack.c.b16 %v4283, %v4281
    %v4320 = vpack.c.b16 %v4286, %v4284
    %v4321 = vpack.c.b16 %v4287, %v4285
    %v4322 = vpack.c.b16 %v4290, %v4288
    %v4323 = vpack.c.b16 %v4291, %v4289
    %v4324 = vpack.c.b16 %v4294, %v4292
    %v4325 = vpack.c.b16 %v4295, %v4293
    %v4326 = vpack.c.b16 %v4298, %v4296
    %v4327 = vpack.c.b16 %v4299, %v4297
    %v4328 = vpack.c.b16 %v4302, %v4300
    %v4329 = vpack.c.b16 %v4303, %v4301
    %v4330 = vpack.c.b16 %v4306, %v4304
    %v4331 = vpack.c.b16 %v4307, %v4305
    %v4332 = vpack.c.b16 %v4310, %v4308
    %v4333 = vpack.c.b16 %v4311, %v4309
    %v4334 = vpack.c.b16 %v4314, %v4312
    %v4335 = vpack.c.b16 %v4315, %v4313
    %v4357 = vsel %vm4120, %v4235, 0
    %4359 = vmatprep.subr.bf16.mxu0 %v4331
    %4360 = vmatpush1.bf16.msra.mxu0 %v4330
    %4361 = vmatprep.subr.bf16.mxu0 %v4329
    %4362 = vmatpush1.bf16.msra.mxu0 %v4328
    %4363 = vmatprep.subr.bf16.mxu0 %v4327
    %4364 = vmatpush1.bf16.msra.mxu0 %v4326
    %4365 = vmatprep.subr.bf16.mxu0 %v4325
    %4366 = vmatpush1.bf16.msra.mxu0 %v4324
    %4367 = vmatprep.subr.bf16.mxu0 %v4323
    %4368 = vmatpush1.bf16.msra.mxu0 %v4322
    %4369 = vmatprep.subr.bf16.mxu0 %v4321
    %4370 = vmatpush1.bf16.msra.mxu0 %v4320
    %4371 = vmatprep.subr.bf16.mxu0 %v4319
    %4372 = vmatpush1.bf16.msra.mxu0 %v4318
    %4373 = vmatprep.subr.bf16.mxu0 %v4317
    %4374 = vmatpush1.bf16.msra.mxu0 %v4316
    %4375 = vmatprep.subr.bf16.mxu0 0
    %4376 = vmatpush2.bf16.msra.mxu0 0
    %4377 = vmatprep.subr.bf16.mxu0 0
    %4378 = vmatpush2.bf16.msra.mxu0 0
    %4379 = vmatprep.subr.bf16.mxu0 0
    %4380 = vmatpush2.bf16.msra.mxu0 0
    %4381 = vmatprep.subr.bf16.mxu0 0
    %4382 = vmatpush2.bf16.msra.mxu0 0
    %4383 = vmatprep.subr.bf16.mxu0 0
    %4384 = vmatpush2.bf16.msra.mxu0 0
    %4385 = vmatprep.subr.bf16.mxu0 0
    %4386 = vmatpush2.bf16.msra.mxu0 0
    %4387 = vmatprep.subr.bf16.mxu0 %v4335
    %4388 = vmatpush2.bf16.msra.mxu0 %v4334
    %4389 = vmatprep.subr.bf16.mxu0 %v4333
    %4390 = vmatpush2.bf16.msra.mxu0 %v4332
    %4391 = vmatprep.mubr.bf16.mxu0 %v4357
    %4392 = vmatmul.mubr.bf16.gmra.mxu0 %v4234
    %v4393 = vpop.f32.mrf.mxu0
    %v4394 = vadd.f32 0.0, %v4393
    %v4395 = vpop.f32.mrf.mxu0
    %v4396 = vadd.f32 0.0, %v4395
    %v4397 = vpop.f32.mrf.mxu0
    %v4398 = vpop.f32.mrf.mxu0
    %4399 = vdwg.mxu0
    %v4400 = vsel %vm638, %v4394, 0.0
    %v4401 = vsel %vm3928, %v4396, 0.0
    %v4402 = vadd.f32 %v4400, %v4401
    %4403 = vadd.xlane.f32.xlu0 %v4402
    %v4404 = vpop.xlane.xlu0 %4403
    %v4405 = vmul.f32 %v4404, %v3933
    %v4406 = vmul.f32 %v4394, %v4394
    %v4407 = vmul.f32 %v4396, %v4396
    %v4408 = vsel %vm638, %v4406, 0.0
    %v4409 = vsel %vm3928, %v4407, 0.0
    %v4410 = vadd.f32 %v4408, %v4409
    %4411 = vadd.xlane.f32.xlu0 %v4410
    %v4412 = vpop.xlane.xlu0 %4411
    %v4413 = vmul.f32 %v4412, %v3933
    %v4414 = vmul.f32 %v4405, %v4405
    %v4415 = vsub.f32 %v4413, %v4414
    %v4416 = vmax.f32 %v4415, 0.0
    %v4417 = vsub.f32 %v4394, %v4405
    %v4418 = vsub.f32 %v4396, %v4405
    %v4419 = vadd.f32 %v4416, 1e-05
    %v4420 = vrsqrt.pop %v4419
    %v4421 = vmul.f32 %v4417, %v4420
    %v4422 = vmul.f32 %v4418, %v4420
    %v4423 = vld [vmem:[#allocation26] sm:$0x3]
    %v4425 = vlaneseq
    %v4426 = vshrl.u32 %v4425, 7
    %v4427 = vsub.s32 0, %v4426
    %v4428 = vrot.slane %v4423, %v4427
    %v4429 = vlaneseq
    %v4430 = vshrl.u32 %v4429, 7
    %v4431 = vsub.s32 1, %v4430
    %v4432 = vrot.slane %v4423, %v4431
    %v4435 = vmul.f32 %v4421, %v4428
    %v4436 = vmul.f32 %v4422, %v4432
    %v4437 = vld [vmem:[#allocation28] sm:$0x3]
    %v4439 = vlaneseq
    %v4440 = vshrl.u32 %v4439, 7
    %v4441 = vsub.s32 0, %v4440
    %v4442 = vrot.slane %v4437, %v4441
    %v4443 = vlaneseq
    %v4444 = vshrl.u32 %v4443, 7
    %v4445 = vsub.s32 1, %v4444
    %v4446 = vrot.slane %v4437, %v4445
    %v4449 = vadd.f32 %v4435, %v4442
    %v4450 = vadd.f32 %v4436, %v4446
    %v4451 = vadd.f32 %v3996, %v4449
    %v4452 = vadd.f32 %v3997, %v4450
    %v4453 = vmul.f32 %v4451, 0.5
    %v4454 = vmul.f32 %v4452, 0.5
    %v4455 = vmul.f32 %v4451, 0.044715
    %v4456 = vmul.f32 %v4452, 0.044715
    %v4457 = vmul.f32 %v4455, %v4451
    %v4458 = vmul.f32 %v4456, %v4452
    %v4459 = vmul.f32 %v4457, %v4451
    %v4460 = vmul.f32 %v4458, %v4452
    %v4461 = vadd.f32 %v4451, %v4459
    %v4462 = vadd.f32 %v4452, %v4460
    %v4463 = vmul.f32 %v4461, 0.7978846
    %v4464 = vmul.f32 %v4462, 0.7978846
    %v4465 = vtanh.pop %v4463
    %v4466 = vtanh.pop %v4464
    %v4467 = vadd.f32 %v4465, 1.0
    %v4468 = vadd.f32 %v4466, 1.0
    %v4469 = vmul.f32 %v4453, %v4467
    %v4470 = vmul.f32 %v4454, %v4468
    %v4471 = vpack.c.bf16 %v4469, %v4469
    %v4472 = vpack.c.bf16 %v4470, %v4470
    %v4473 = vld [vmem:[%s45] sm:$0xff]
    %v4474 = vld [vmem:[%s45 + $0x8] sm:$0xff]
    %v4475 = vld [vmem:[%s45 + $0x10] sm:$0xff]
    %v4476 = vld [vmem:[%s45 + $0x18] sm:$0xff]
    %v4477 = vld [vmem:[%s45 + $0x20] sm:$0xff]
    %v4478 = vld [vmem:[%s45 + $0x28] sm:$0xff]
    %v4479 = vld [vmem:[%s45 + $0x30] sm:$0xff]
    %v4480 = vld [vmem:[%s45 + $0x38] sm:$0xff]
    %v4481 = vld [vmem:[%s45 + $0x40] sm:$0xff]
    %v4482 = vld [vmem:[%s45 + $0x48] sm:$0xff]
    %v4483 = vld [vmem:[%s45 + $0x50] sm:$0xff]
    %v4484 = vld [vmem:[%s45 + $0x58] sm:$0xff]
    %v4485 = vld [vmem:[%s45 + $0x60] sm:$0xff]
    %v4486 = vld [vmem:[%s45 + $0x68] sm:$0xff]
    %v4487 = vld [vmem:[%s45 + $0x70] sm:$0xff]
    %v4488 = vld [vmem:[%s45 + $0x78] sm:$0xff]
    %v4489 = vld [vmem:[%s45 + $0x80] sm:$0xff]
    %v4490 = vld [vmem:[%s45 + $0x88] sm:$0xff]
    %v4491 = vld [vmem:[%s45 + $0x90] sm:$0xff]
    %v4492 = vld [vmem:[%s45 + $0x98] sm:$0xff]
    %v4513 = vunpack.c.l.b16 %v4473
    %v4514 = vunpack.c.h.b16 %v4473
    %v4515 = vunpack.c.l.b16 %v4474
    %v4516 = vunpack.c.h.b16 %v4474
    %v4517 = vunpack.c.l.b16 %v4475
    %v4518 = vunpack.c.h.b16 %v4475
    %v4519 = vunpack.c.l.b16 %v4476
    %v4520 = vunpack.c.h.b16 %v4476
    %v4521 = vunpack.c.l.b16 %v4477
    %v4522 = vunpack.c.h.b16 %v4477
    %v4523 = vunpack.c.l.b16 %v4478
    %v4524 = vunpack.c.h.b16 %v4478
    %v4525 = vunpack.c.l.b16 %v4479
    %v4526 = vunpack.c.h.b16 %v4479
    %v4527 = vunpack.c.l.b16 %v4480
    %v4528 = vunpack.c.h.b16 %v4480
    %v4529 = vunpack.c.l.b16 %v4481
    %v4530 = vunpack.c.h.b16 %v4481
    %v4531 = vunpack.c.l.b16 %v4482
    %v4532 = vunpack.c.h.b16 %v4482
    %v4533 = vunpack.c.l.b16 %v4483
    %v4534 = vunpack.c.h.b16 %v4483
    %v4535 = vunpack.c.l.b16 %v4484
    %v4536 = vunpack.c.h.b16 %v4484
    %v4537 = vunpack.c.l.b16 %v4485
    %v4538 = vunpack.c.h.b16 %v4485
    %v4539 = vunpack.c.l.b16 %v4486
    %v4540 = vunpack.c.h.b16 %v4486
    %v4541 = vunpack.c.l.b16 %v4487
    %v4542 = vunpack.c.h.b16 %v4487
    %v4543 = vunpack.c.l.b16 %v4488
    %v4544 = vunpack.c.h.b16 %v4488
    %v4545 = vunpack.c.l.b16 %v4489
    %v4546 = vunpack.c.h.b16 %v4489
    %v4547 = vunpack.c.l.b16 %v4490
    %v4548 = vunpack.c.h.b16 %v4490
    %v4549 = vunpack.c.l.b16 %v4491
    %v4550 = vunpack.c.h.b16 %v4491
    %v4551 = vunpack.c.l.b16 %v4492
    %v4552 = vunpack.c.h.b16 %v4492
    %v4553 = vpack.c.b16 %v4515, %v4513
    %v4554 = vpack.c.b16 %v4516, %v4514
    %v4555 = vpack.c.b16 %v4519, %v4517
    %v4556 = vpack.c.b16 %v4520, %v4518
    %v4557 = vpack.c.b16 %v4523, %v4521
    %v4558 = vpack.c.b16 %v4524, %v4522
    %v4559 = vpack.c.b16 %v4527, %v4525
    %v4560 = vpack.c.b16 %v4528, %v4526
    %v4561 = vpack.c.b16 %v4531, %v4529
    %v4562 = vpack.c.b16 %v4532, %v4530
    %v4563 = vpack.c.b16 %v4535, %v4533
    %v4564 = vpack.c.b16 %v4536, %v4534
    %v4565 = vpack.c.b16 %v4539, %v4537
    %v4566 = vpack.c.b16 %v4540, %v4538
    %v4567 = vpack.c.b16 %v4543, %v4541
    %v4568 = vpack.c.b16 %v4544, %v4542
    %v4569 = vpack.c.b16 %v4547, %v4545
    %v4570 = vpack.c.b16 %v4548, %v4546
    %v4571 = vpack.c.b16 %v4551, %v4549
    %v4572 = vpack.c.b16 %v4552, %v4550
    %v4594 = vsel %vm4120, %v4472, 0
    %4596 = vmatprep.subr.bf16.mxu0 %v4568
    %4597 = vmatpush1.bf16.msra.mxu0 %v4567
    %4598 = vmatprep.subr.bf16.mxu0 %v4566
    %4599 = vmatpush1.bf16.msra.mxu0 %v4565
    %4600 = vmatprep.subr.bf16.mxu0 %v4564
    %4601 = vmatpush1.bf16.msra.mxu0 %v4563
    %4602 = vmatprep.subr.bf16.mxu0 %v4562
    %4603 = vmatpush1.bf16.msra.mxu0 %v4561
    %4604 = vmatprep.subr.bf16.mxu0 %v4560
    %4605 = vmatpush1.bf16.msra.mxu0 %v4559
    %4606 = vmatprep.subr.bf16.mxu0 %v4558
    %4607 = vmatpush1.bf16.msra.mxu0 %v4557
    %4608 = vmatprep.subr.bf16.mxu0 %v4556
    %4609 = vmatpush1.bf16.msra.mxu0 %v4555
    %4610 = vmatprep.subr.bf16.mxu0 %v4554
    %4611 = vmatpush1.bf16.msra.mxu0 %v4553
    %4612 = vmatprep.subr.bf16.mxu0 0
    %4613 = vmatpush2.bf16.msra.mxu0 0
    %4614 = vmatprep.subr.bf16.mxu0 0
    %4615 = vmatpush2.bf16.msra.mxu0 0
    %4616 = vmatprep.subr.bf16.mxu0 0
    %4617 = vmatpush2.bf16.msra.mxu0 0
    %4618 = vmatprep.subr.bf16.mxu0 0
    %4619 = vmatpush2.bf16.msra.mxu0 0
    %4620 = vmatprep.subr.bf16.mxu0 0
    %4621 = vmatpush2.bf16.msra.mxu0 0
    %4622 = vmatprep.subr.bf16.mxu0 0
    %4623 = vmatpush2.bf16.msra.mxu0 0
    %4624 = vmatprep.subr.bf16.mxu0 %v4572
    %4625 = vmatpush2.bf16.msra.mxu0 %v4571
    %4626 = vmatprep.subr.bf16.mxu0 %v4570
    %4627 = vmatpush2.bf16.msra.mxu0 %v4569
    %4628 = vmatprep.mubr.bf16.mxu0 %v4594
    %4629 = vmatmul.mubr.bf16.gmra.mxu0 %v4471
    %v4630 = vpop.f32.mrf.mxu0
    %v4631 = vadd.f32 0.0, %v4630
    %v4632 = vpop.f32.mrf.mxu0
    %v4633 = vadd.f32 0.0, %v4632
    %v4634 = vpop.f32.mrf.mxu0
    %v4635 = vpop.f32.mrf.mxu0
    %4636 = vdwg.mxu0
    %v4637 = vsel %vm638, %v4631, 0.0
    %v4638 = vsel %vm3928, %v4633, 0.0
    %v4639 = vadd.f32 %v4637, %v4638
    %4640 = vadd.xlane.f32.xlu0 %v4639
    %v4641 = vpop.xlane.xlu0 %4640
    %v4642 = vmul.f32 %v4641, %v3933
    %v4643 = vmul.f32 %v4631, %v4631
    %v4644 = vmul.f32 %v4633, %v4633
    %v4645 = vsel %vm638, %v4643, 0.0
    %v4646 = vsel %vm3928, %v4644, 0.0
    %v4647 = vadd.f32 %v4645, %v4646
    %4648 = vadd.xlane.f32.xlu0 %v4647
    %v4649 = vpop.xlane.xlu0 %4648
    %v4650 = vmul.f32 %v4649, %v3933
    %v4651 = vmul.f32 %v4642, %v4642
    %v4652 = vsub.f32 %v4650, %v4651
    %v4653 = vmax.f32 %v4652, 0.0
    %v4654 = vsub.f32 %v4631, %v4642
    %v4655 = vsub.f32 %v4633, %v4642
    %v4656 = vadd.f32 %v4653, 1e-05
    %v4657 = vrsqrt.pop %v4656
    %v4658 = vmul.f32 %v4654, %v4657
    %v4659 = vmul.f32 %v4655, %v4657
    %v4660 = vld [vmem:[#allocation29] sm:$0x3]
    %v4662 = vlaneseq
    %v4663 = vshrl.u32 %v4662, 7
    %v4664 = vsub.s32 0, %v4663
    %v4665 = vrot.slane %v4660, %v4664
    %v4666 = vlaneseq
    %v4667 = vshrl.u32 %v4666, 7
    %v4668 = vsub.s32 1, %v4667
    %v4669 = vrot.slane %v4660, %v4668
    %v4672 = vmul.f32 %v4658, %v4665
    %v4673 = vmul.f32 %v4659, %v4669
    %v4674 = vld [vmem:[#allocation31] sm:$0x3]
    %v4676 = vlaneseq
    %v4677 = vshrl.u32 %v4676, 7
    %v4678 = vsub.s32 0, %v4677
    %v4679 = vrot.slane %v4674, %v4678
    %v4680 = vlaneseq
    %v4681 = vshrl.u32 %v4680, 7
    %v4682 = vsub.s32 1, %v4681
    %v4683 = vrot.slane %v4674, %v4682
    %v4686 = vadd.f32 %v4672, %v4679
    %v4687 = vadd.f32 %v4673, %v4683
    %v4688 = vmul.f32 %v4686, 0.5
    %v4689 = vmul.f32 %v4687, 0.5
    %v4690 = vmul.f32 %v4686, 0.044715
    %v4691 = vmul.f32 %v4687, 0.044715
    %v4692 = vmul.f32 %v4690, %v4686
    %v4693 = vmul.f32 %v4691, %v4687
    %v4694 = vmul.f32 %v4692, %v4686
    %v4695 = vmul.f32 %v4693, %v4687
    %v4696 = vadd.f32 %v4686, %v4694
    %v4697 = vadd.f32 %v4687, %v4695
    %v4698 = vmul.f32 %v4696, 0.7978846
    %v4699 = vmul.f32 %v4697, 0.7978846
    %v4700 = vtanh.pop %v4698
    %v4701 = vtanh.pop %v4699
    %v4702 = vadd.f32 %v4700, 1.0
    %v4703 = vadd.f32 %v4701, 1.0
    %v4704 = vmul.f32 %v4688, %v4702
    %v4705 = vmul.f32 %v4689, %v4703
    %v4706 = vpack.c.bf16 %v4704, %v4704
    %v4707 = vpack.c.bf16 %v4705, %v4705
    %v4708 = vld [vmem:[%s51] sm:$0xff]
    %v4709 = vld [vmem:[%s51 + $0x8] sm:$0xff]
    %v4710 = vld [vmem:[%s51 + $0x10] sm:$0xff]
    %v4711 = vld [vmem:[%s51 + $0x18] sm:$0xff]
    %v4712 = vld [vmem:[%s51 + $0x20] sm:$0xff]
    %v4713 = vld [vmem:[%s51 + $0x28] sm:$0xff]
    %v4714 = vld [vmem:[%s51 + $0x30] sm:$0xff]
    %v4715 = vld [vmem:[%s51 + $0x38] sm:$0xff]
    %v4716 = vld [vmem:[%s51 + $0x40] sm:$0xff]
    %v4717 = vld [vmem:[%s51 + $0x48] sm:$0xff]
    %v4718 = vld [vmem:[%s51 + $0x50] sm:$0xff]
    %v4719 = vld [vmem:[%s51 + $0x58] sm:$0xff]
    %v4720 = vld [vmem:[%s51 + $0x60] sm:$0xff]
    %v4721 = vld [vmem:[%s51 + $0x68] sm:$0xff]
    %v4722 = vld [vmem:[%s51 + $0x70] sm:$0xff]
    %v4723 = vld [vmem:[%s51 + $0x78] sm:$0xff]
    %v4724 = vld [vmem:[%s51 + $0x80] sm:$0xff]
    %v4725 = vld [vmem:[%s51 + $0x88] sm:$0xff]
    %v4726 = vld [vmem:[%s51 + $0x90] sm:$0xff]
    %v4727 = vld [vmem:[%s51 + $0x98] sm:$0xff]
    %v4748 = vunpack.c.l.b16 %v4708
    %v4749 = vunpack.c.h.b16 %v4708
    %v4750 = vunpack.c.l.b16 %v4709
    %v4751 = vunpack.c.h.b16 %v4709
    %v4752 = vunpack.c.l.b16 %v4710
    %v4753 = vunpack.c.h.b16 %v4710
    %v4754 = vunpack.c.l.b16 %v4711
    %v4755 = vunpack.c.h.b16 %v4711
    %v4756 = vunpack.c.l.b16 %v4712
    %v4757 = vunpack.c.h.b16 %v4712
    %v4758 = vunpack.c.l.b16 %v4713
    %v4759 = vunpack.c.h.b16 %v4713
    %v4760 = vunpack.c.l.b16 %v4714
    %v4761 = vunpack.c.h.b16 %v4714
    %v4762 = vunpack.c.l.b16 %v4715
    %v4763 = vunpack.c.h.b16 %v4715
    %v4764 = vunpack.c.l.b16 %v4716
    %v4765 = vunpack.c.h.b16 %v4716
    %v4766 = vunpack.c.l.b16 %v4717
    %v4767 = vunpack.c.h.b16 %v4717
    %v4768 = vunpack.c.l.b16 %v4718
    %v4769 = vunpack.c.h.b16 %v4718
    %v4770 = vunpack.c.l.b16 %v4719
    %v4771 = vunpack.c.h.b16 %v4719
    %v4772 = vunpack.c.l.b16 %v4720
    %v4773 = vunpack.c.h.b16 %v4720
    %v4774 = vunpack.c.l.b16 %v4721
    %v4775 = vunpack.c.h.b16 %v4721
    %v4776 = vunpack.c.l.b16 %v4722
    %v4777 = vunpack.c.h.b16 %v4722
    %v4778 = vunpack.c.l.b16 %v4723
    %v4779 = vunpack.c.h.b16 %v4723
    %v4780 = vunpack.c.l.b16 %v4724
    %v4781 = vunpack.c.h.b16 %v4724
    %v4782 = vunpack.c.l.b16 %v4725
    %v4783 = vunpack.c.h.b16 %v4725
    %v4784 = vunpack.c.l.b16 %v4726
    %v4785 = vunpack.c.h.b16 %v4726
    %v4786 = vunpack.c.l.b16 %v4727
    %v4787 = vunpack.c.h.b16 %v4727
    %v4788 = vpack.c.b16 %v4750, %v4748
    %v4789 = vpack.c.b16 %v4751, %v4749
    %v4790 = vpack.c.b16 %v4754, %v4752
    %v4791 = vpack.c.b16 %v4755, %v4753
    %v4792 = vpack.c.b16 %v4758, %v4756
    %v4793 = vpack.c.b16 %v4759, %v4757
    %v4794 = vpack.c.b16 %v4762, %v4760
    %v4795 = vpack.c.b16 %v4763, %v4761
    %v4796 = vpack.c.b16 %v4766, %v4764
    %v4797 = vpack.c.b16 %v4767, %v4765
    %v4798 = vpack.c.b16 %v4770, %v4768
    %v4799 = vpack.c.b16 %v4771, %v4769
    %v4800 = vpack.c.b16 %v4774, %v4772
    %v4801 = vpack.c.b16 %v4775, %v4773
    %v4802 = vpack.c.b16 %v4778, %v4776
    %v4803 = vpack.c.b16 %v4779, %v4777
    %v4804 = vpack.c.b16 %v4782, %v4780
    %v4805 = vpack.c.b16 %v4783, %v4781
    %v4806 = vpack.c.b16 %v4786, %v4784
    %v4807 = vpack.c.b16 %v4787, %v4785
    %v4829 = vsel %vm4120, %v4707, 0
    %4831 = vmatprep.subr.bf16.mxu0 %v4803
    %4832 = vmatpush1.bf16.msra.mxu0 %v4802
    %4833 = vmatprep.subr.bf16.mxu0 %v4801
    %4834 = vmatpush1.bf16.msra.mxu0 %v4800
    %4835 = vmatprep.subr.bf16.mxu0 %v4799
    %4836 = vmatpush1.bf16.msra.mxu0 %v4798
    %4837 = vmatprep.subr.bf16.mxu0 %v4797
    %4838 = vmatpush1.bf16.msra.mxu0 %v4796
    %4839 = vmatprep.subr.bf16.mxu0 %v4795
    %4840 = vmatpush1.bf16.msra.mxu0 %v4794
    %4841 = vmatprep.subr.bf16.mxu0 %v4793
    %4842 = vmatpush1.bf16.msra.mxu0 %v4792
    %4843 = vmatprep.subr.bf16.mxu0 %v4791
    %4844 = vmatpush1.bf16.msra.mxu0 %v4790
    %4845 = vmatprep.subr.bf16.mxu0 %v4789
    %4846 = vmatpush1.bf16.msra.mxu0 %v4788
    %4847 = vmatprep.subr.bf16.mxu0 0
    %4848 = vmatpush2.bf16.msra.mxu0 0
    %4849 = vmatprep.subr.bf16.mxu0 0
    %4850 = vmatpush2.bf16.msra.mxu0 0
    %4851 = vmatprep.subr.bf16.mxu0 0
    %4852 = vmatpush2.bf16.msra.mxu0 0
    %4853 = vmatprep.subr.bf16.mxu0 0
    %4854 = vmatpush2.bf16.msra.mxu0 0
    %4855 = vmatprep.subr.bf16.mxu0 0
    %4856 = vmatpush2.bf16.msra.mxu0 0
    %4857 = vmatprep.subr.bf16.mxu0 0
    %4858 = vmatpush2.bf16.msra.mxu0 0
    %4859 = vmatprep.subr.bf16.mxu0 %v4807
    %4860 = vmatpush2.bf16.msra.mxu0 %v4806
    %4861 = vmatprep.subr.bf16.mxu0 %v4805
    %4862 = vmatpush2.bf16.msra.mxu0 %v4804
    %4863 = vmatprep.mubr.bf16.mxu0 %v4829
    %4864 = vmatmul.mubr.bf16.gmra.mxu0 %v4706
    %v4865 = vpop.f32.mrf.mxu0
    %v4866 = vadd.f32 0.0, %v4865
    %v4867 = vpop.f32.mrf.mxu0
    %v4868 = vadd.f32 0.0, %v4867
    %v4869 = vpop.f32.mrf.mxu0
    %v4870 = vpop.f32.mrf.mxu0
    %4871 = vdwg.mxu0
    %v4872 = vsel %vm638, %v4866, 0.0
    %v4873 = vsel %vm3928, %v4868, 0.0
    %v4874 = vadd.f32 %v4872, %v4873
    %4875 = vadd.xlane.f32.xlu0 %v4874
    %v4876 = vpop.xlane.xlu0 %4875
    %v4877 = vmul.f32 %v4876, %v3933
    %v4878 = vmul.f32 %v4866, %v4866
    %v4879 = vmul.f32 %v4868, %v4868
    %v4880 = vsel %vm638, %v4878, 0.0
    %v4881 = vsel %vm3928, %v4879, 0.0
    %v4882 = vadd.f32 %v4880, %v4881
    %4883 = vadd.xlane.f32.xlu0 %v4882
    %v4884 = vpop.xlane.xlu0 %4883
    %v4885 = vmul.f32 %v4884, %v3933
    %v4886 = vmul.f32 %v4877, %v4877
    %v4887 = vsub.f32 %v4885, %v4886
    %v4888 = vmax.f32 %v4887, 0.0
    %v4889 = vsub.f32 %v4866, %v4877
    %v4890 = vsub.f32 %v4868, %v4877
    %v4891 = vadd.f32 %v4888, 1e-05
    %v4892 = vrsqrt.pop %v4891
    %v4893 = vmul.f32 %v4889, %v4892
    %v4894 = vmul.f32 %v4890, %v4892
    %v4895 = vld [vmem:[%s53] sm:$0x3]
    %v4897 = vlaneseq
    %v4898 = vshrl.u32 %v4897, 7
    %v4899 = vsub.s32 0, %v4898
    %v4900 = vrot.slane %v4895, %v4899
    %v4901 = vlaneseq
    %v4902 = vshrl.u32 %v4901, 7
    %v4903 = vsub.s32 1, %v4902
    %v4904 = vrot.slane %v4895, %v4903
    %v4907 = vmul.f32 %v4893, %v4900
    %v4908 = vmul.f32 %v4894, %v4904
    %v4909 = vld [vmem:[#allocation32] sm:$0x3]
    %v4911 = vlaneseq
    %v4912 = vshrl.u32 %v4911, 7
    %v4913 = vsub.s32 0, %v4912
    %v4914 = vrot.slane %v4909, %v4913
    %v4915 = vlaneseq
    %v4916 = vshrl.u32 %v4915, 7
    %v4917 = vsub.s32 1, %v4916
    %v4918 = vrot.slane %v4909, %v4917
    %v4921 = vadd.f32 %v4907, %v4914
    %v4922 = vadd.f32 %v4908, %v4918
    %v4923 = vpack.c.bf16 %v4921, %v4921
    %v4924 = vpack.c.bf16 %v4922, %v4922
    %v4925 = vld [vmem:[%s57] sm:$0xf]
    %v4926 = vld [vmem:[%s57 + $0x4] sm:$0xf]
    %v4927 = vld [vmem:[%s57 + $0x8] sm:$0xf]
    %v4928 = vld [vmem:[%s57 + $0xc] sm:$0xf]
    %v4929 = vld [vmem:[%s57 + $0x10] sm:$0xf]
    %v4930 = vld [vmem:[%s57 + $0x14] sm:$0xf]
    %v4931 = vld [vmem:[%s57 + $0x18] sm:$0xf]
    %v4932 = vld [vmem:[%s57 + $0x1c] sm:$0xf]
    %v4933 = vld [vmem:[%s57 + $0x20] sm:$0xf]
    %v4934 = vld [vmem:[%s57 + $0x24] sm:$0xf]
    %v4935 = vld [vmem:[%s57 + $0x28] sm:$0xf]
    %v4936 = vld [vmem:[%s57 + $0x2c] sm:$0xf]
    %v4937 = vld [vmem:[%s57 + $0x30] sm:$0xf]
    %v4938 = vld [vmem:[%s57 + $0x34] sm:$0xf]
    %v4939 = vld [vmem:[%s57 + $0x38] sm:$0xf]
    %v4940 = vld [vmem:[%s57 + $0x3c] sm:$0xf]
    %v4941 = vld [vmem:[%s57 + $0x40] sm:$0xf]
    %v4942 = vld [vmem:[%s57 + $0x44] sm:$0xf]
    %v4943 = vld [vmem:[%s57 + $0x48] sm:$0xf]
    %v4944 = vld [vmem:[%s57 + $0x4c] sm:$0xf]
    %v4945 = vld [vmem:[#allocation34] sm:$0x1]
    %v4947 = vlaneseq
    %v4948 = vshrl.u32 %v4947, 7
    %v4949 = vsub.s32 0, %v4948
    %v4950 = vrot.slane %v4945, %v4949
    %v4972 = vunpack.c.l.b16 %v4925
    %v4973 = vunpack.c.l.b16 %v4926
    %v4974 = vunpack.c.l.b16 %v4927
    %v4975 = vunpack.c.l.b16 %v4928
    %v4976 = vunpack.c.l.b16 %v4929
    %v4977 = vunpack.c.l.b16 %v4930
    %v4978 = vunpack.c.l.b16 %v4931
    %v4979 = vunpack.c.l.b16 %v4932
    %v4980 = vunpack.c.l.b16 %v4933
    %v4981 = vunpack.c.l.b16 %v4934
    %v4982 = vunpack.c.l.b16 %v4935
    %v4983 = vunpack.c.l.b16 %v4936
    %v4984 = vunpack.c.l.b16 %v4937
    %v4985 = vunpack.c.l.b16 %v4938
    %v4986 = vunpack.c.l.b16 %v4939
    %v4987 = vunpack.c.l.b16 %v4940
    %v4988 = vunpack.c.l.b16 %v4941
    %v4989 = vunpack.c.l.b16 %v4942
    %v4990 = vunpack.c.l.b16 %v4943
    %v4991 = vunpack.c.l.b16 %v4944
    %v4992 = vpack.c.b16 %v4973, %v4972
    %v4993 = vpack.c.b16 %v4975, %v4974
    %v4994 = vpack.c.b16 %v4977, %v4976
    %v4995 = vpack.c.b16 %v4979, %v4978
    %v4996 = vpack.c.b16 %v4981, %v4980
    %v4997 = vpack.c.b16 %v4983, %v4982
    %v4998 = vpack.c.b16 %v4985, %v4984
    %v4999 = vpack.c.b16 %v4987, %v4986
    %v5000 = vpack.c.b16 %v4989, %v4988
    %v5001 = vpack.c.b16 %v4991, %v4990
    %v5013 = vsel %vm4120, %v4924, 0
    %5015 = vmatprep.subr.bf16.mxu0 0
    %5016 = vmatpush1.bf16.msra.mxu0 %v4999
    %5017 = vmatprep.subr.bf16.mxu0 0
    %5018 = vmatpush1.bf16.msra.mxu0 %v4998
    %5019 = vmatprep.subr.bf16.mxu0 0
    %5020 = vmatpush1.bf16.msra.mxu0 %v4997
    %5021 = vmatprep.subr.bf16.mxu0 0
    %5022 = vmatpush1.bf16.msra.mxu0 %v4996
    %5023 = vmatprep.subr.bf16.mxu0 0
    %5024 = vmatpush1.bf16.msra.mxu0 %v4995
    %5025 = vmatprep.subr.bf16.mxu0 0
    %5026 = vmatpush1.bf16.msra.mxu0 %v4994
    %5027 = vmatprep.subr.bf16.mxu0 0
    %5028 = vmatpush1.bf16.msra.mxu0 %v4993
    %5029 = vmatprep.subr.bf16.mxu0 0
    %5030 = vmatpush1.bf16.msra.mxu0 %v4992
    %5031 = vmatprep.subr.bf16.mxu0 0
    %5032 = vmatpush2.bf16.msra.mxu0 0
    %5033 = vmatprep.subr.bf16.mxu0 0
    %5034 = vmatpush2.bf16.msra.mxu0 0
    %5035 = vmatprep.subr.bf16.mxu0 0
    %5036 = vmatpush2.bf16.msra.mxu0 0
    %5037 = vmatprep.subr.bf16.mxu0 0
    %5038 = vmatpush2.bf16.msra.mxu0 0
    %5039 = vmatprep.subr.bf16.mxu0 0
    %5040 = vmatpush2.bf16.msra.mxu0 0
    %5041 = vmatprep.subr.bf16.mxu0 0
    %5042 = vmatpush2.bf16.msra.mxu0 0
    %5043 = vmatprep.subr.bf16.mxu0 0
    %5044 = vmatpush2.bf16.msra.mxu0 %v5001
    %5045 = vmatprep.subr.bf16.mxu0 0
    %5046 = vmatpush2.bf16.msra.mxu0 %v5000
    %5047 = vmatprep.mubr.bf16.mxu0 %v5013
    %5048 = vmatmul.mubr.bf16.gmra.mxu0 %v4923
    %v5049 = vpop.f32.mrf.mxu0
    %v5050 = vadd.f32 %v4950, %v5049
    %v5051 = vpop.f32.mrf.mxu0
    %v5052 = vpop.f32.mrf.mxu0
    %v5053 = vpop.f32.mrf.mxu0
    %5054 = vdwg.mxu0
    %5056 = vrot.lane.b32.xlu0 %v5050, 112
    %v5057 = vpop.permute.xlu0 %5056
    %v5059 = vmax.f32 %v5050, %v5057
    %5060 = vrot.lane.b32.xlu0 %v5050, 96
    %v5061 = vpop.permute.xlu0 %5060
    %v5063 = vmax.f32 %v5059, %v5061
    %5064 = vrot.lane.b32.xlu0 %v5050, 80
    %v5065 = vpop.permute.xlu0 %5064
    %v5067 = vmax.f32 %v5063, %v5065
    %5068 = vrot.lane.b32.xlu0 %v5050, 64
    %v5069 = vpop.permute.xlu0 %5068
    %v5071 = vmax.f32 %v5067, %v5069
    %v5072 = vpack.c.bf16 %v5071, %v5071
    %v5073 = vld [vmem:[#allocation35] sm:$0xf]
    %v5074 = vld [vmem:[#allocation35 + $0x4] sm:$0xf]
    %v5075 = vld [vmem:[#allocation37] sm:$0x1]
    %v5077 = vlaneseq
    %v5078 = vshrl.u32 %v5077, 7
    %v5079 = vsub.s32 0, %v5078
    %v5080 = vrot.slane %v5075, %v5079
    %v5084 = vunpack.c.l.b16 %v5073
    %v5085 = vunpack.c.l.b16 %v5074
    %v5086 = vpack.c.b16 %v5085, %v5084
    %v5089 = vsel %vm1370, %v5072, 0
    %5091 = vmatprep.subr.bf16.mxu0 0
    %5092 = vmatpush1.bf16.msra.mxu0 0
    %5093 = vmatprep.subr.bf16.mxu0 0
    %5094 = vmatpush1.bf16.msra.mxu0 0
    %5095 = vmatprep.subr.bf16.mxu0 0
    %5096 = vmatpush1.bf16.msra.mxu0 0
    %5097 = vmatprep.subr.bf16.mxu0 0
    %5098 = vmatpush1.bf16.msra.mxu0 0
    %5099 = vmatprep.subr.bf16.mxu0 0
    %5100 = vmatpush1.bf16.msra.mxu0 0
    %5101 = vmatprep.subr.bf16.mxu0 0
    %5102 = vmatpush1.bf16.msra.mxu0 0
    %5103 = vmatprep.subr.bf16.mxu0 0
    %5104 = vmatpush1.bf16.msra.mxu0 0
    %5105 = vmatprep.subr.bf16.mxu0 0
    %5106 = vmatpush1.bf16.msra.mxu0 %v5086
    %5107 = vmatprep.subr.bf16.mxu0 0
    %5108 = vmatpush2.bf16.msra.mxu0 0
    %5109 = vmatprep.subr.bf16.mxu0 0
    %5110 = vmatpush2.bf16.msra.mxu0 0
    %5111 = vmatprep.subr.bf16.mxu0 0
    %5112 = vmatpush2.bf16.msra.mxu0 0
    %5113 = vmatprep.subr.bf16.mxu0 0
    %5114 = vmatpush2.bf16.msra.mxu0 0
    %5115 = vmatprep.subr.bf16.mxu0 0
    %5116 = vmatpush2.bf16.msra.mxu0 0
    %5117 = vmatprep.subr.bf16.mxu0 0
    %5118 = vmatpush2.bf16.msra.mxu0 0
    %5119 = vmatprep.subr.bf16.mxu0 0
    %5120 = vmatpush2.bf16.msra.mxu0 0
    %5121 = vmatprep.subr.bf16.mxu0 0
    %5122 = vmatpush2.bf16.msra.mxu0 0
    %5123 = vmatprep.mubr.bf16.mxu0 0
    %5124 = vmatmul.mubr.bf16.gmra.mxu0 %v5089
    %v5125 = vpop.f32.mrf.mxu0
    %v5126 = vadd.f32 %v5080, %v5125
    %v5127 = vpop.f32.mrf.mxu0
    %v5128 = vpop.f32.mrf.mxu0
    %v5129 = vpop.f32.mrf.mxu0
    %5130 = vdwg.mxu0
    %v5131 = vsel %vm3928, %v5126, 0.0
    %5132 = vadd.xlane.f32.xlu0 %v5131
    %v5133 = vpop.xlane.xlu0 %5132
    %v5134 = vrcp.pop 32.0
    %v5135 = vmul.f32 %v5133, %v5134
    %v5136 = vmul.f32 %v5126, %v5126
    %v5137 = vsel %vm3928, %v5136, 0.0
    %5138 = vadd.xlane.f32.xlu0 %v5137
    %v5139 = vpop.xlane.xlu0 %5138
    %v5140 = vmul.f32 %v5139, %v5134
    %v5141 = vmul.f32 %v5135, %v5135
    %v5142 = vsub.f32 %v5140, %v5141
    %v5143 = vmax.f32 %v5142, 0.0
    %v5144 = vsub.f32 %v5126, %v5135
    %v5145 = vadd.f32 %v5143, 1e-05
    %v5146 = vrsqrt.pop %v5145
    %v5147 = vmul.f32 %v5144, %v5146
    %v5148 = vld [vmem:[#allocation38] sm:$0x1]
    %v5150 = vlaneseq
    %v5151 = vshrl.u32 %v5150, 7
    %v5152 = vsub.s32 0, %v5151
    %v5153 = vrot.slane %v5148, %v5152
    %v5155 = vmul.f32 %v5147, %v5153
    %v5156 = vld [vmem:[#allocation40] sm:$0x1]
    %v5158 = vlaneseq
    %v5159 = vshrl.u32 %v5158, 7
    %v5160 = vsub.s32 0, %v5159
    %v5161 = vrot.slane %v5156, %v5160
    %v5163 = vadd.f32 %v5155, %v5161
    %v5164 = vmul.f32 %v5163, 0.5
    %v5165 = vmul.f32 %v5163, 0.044715
    %v5166 = vmul.f32 %v5165, %v5163
    %v5167 = vmul.f32 %v5166, %v5163
    %v5168 = vadd.f32 %v5163, %v5167
    %v5169 = vmul.f32 %v5168, 0.7978846
    %v5170 = vtanh.pop %v5169
    %v5171 = vadd.f32 %v5170, 1.0
    %v5172 = vmul.f32 %v5164, %v5171
    %v5173 = vpack.c.bf16 %v5172, %v5172
    %v5174 = vld [vmem:[%s69] sm:$0xf]
    %v5175 = vld [vmem:[%s69 + $0x4] sm:$0xf]
    %v5176 = vld [vmem:[%s69 + $0x8] sm:$0xf]
    %v5177 = vld [vmem:[%s69 + $0xc] sm:$0xf]
    %v5178 = vld [vmem:[%s71] sm:$0x1]
    %v5180 = vlaneseq
    %v5181 = vshrl.u32 %v5180, 7
    %v5182 = vsub.s32 0, %v5181
    %v5183 = vrot.slane %v5178, %v5182
    %v5189 = vunpack.c.l.b16 %v5174
    %v5190 = vunpack.c.l.b16 %v5175
    %v5191 = vunpack.c.l.b16 %v5176
    %v5192 = vunpack.c.l.b16 %v5177
    %v5193 = vpack.c.b16 %v5190, %v5189
    %v5194 = vpack.c.b16 %v5192, %v5191
    %v5198 = vsel %vm4120, %v5173, 0
    %5200 = vmatprep.subr.bf16.mxu0 0
    %5201 = vmatpush1.bf16.msra.mxu0 0
    %5202 = vmatprep.subr.bf16.mxu0 0
    %5203 = vmatpush1.bf16.msra.mxu0 0
    %5204 = vmatprep.subr.bf16.mxu0 0
    %5205 = vmatpush1.bf16.msra.mxu0 0
    %5206 = vmatprep.subr.bf16.mxu0 0
    %5207 = vmatpush1.bf16.msra.mxu0 0
    %5208 = vmatprep.subr.bf16.mxu0 0
    %5209 = vmatpush1.bf16.msra.mxu0 0
    %5210 = vmatprep.subr.bf16.mxu0 0
    %5211 = vmatpush1.bf16.msra.mxu0 0
    %5212 = vmatprep.subr.bf16.mxu0 0
    %5213 = vmatpush1.bf16.msra.mxu0 %v5194
    %5214 = vmatprep.subr.bf16.mxu0 0
    %5215 = vmatpush1.bf16.msra.mxu0 %v5193
    %5216 = vmatprep.subr.bf16.mxu0 0
    %5217 = vmatpush2.bf16.msra.mxu0 0
    %5218 = vmatprep.subr.bf16.mxu0 0
    %5219 = vmatpush2.bf16.msra.mxu0 0
    %5220 = vmatprep.subr.bf16.mxu0 0
    %5221 = vmatpush2.bf16.msra.mxu0 0
    %5222 = vmatprep.subr.bf16.mxu0 0
    %5223 = vmatpush2.bf16.msra.mxu0 0
    %5224 = vmatprep.subr.bf16.mxu0 0
    %5225 = vmatpush2.bf16.msra.mxu0 0
    %5226 = vmatprep.subr.bf16.mxu0 0
    %5227 = vmatpush2.bf16.msra.mxu0 0
    %5228 = vmatprep.subr.bf16.mxu0 0
    %5229 = vmatpush2.bf16.msra.mxu0 0
    %5230 = vmatprep.subr.bf16.mxu0 0
    %5231 = vmatpush2.bf16.msra.mxu0 0
    %5232 = vmatprep.mubr.bf16.mxu0 0
    %5233 = vmatmul.mubr.bf16.gmra.mxu0 %v5198
    %v5234 = vpop.f32.mrf.mxu0
    %v5235 = vadd.f32 %v5183, %v5234
    %v5236 = vpop.f32.mrf.mxu0
    %v5237 = vpop.f32.mrf.mxu0
    %v5238 = vpop.f32.mrf.mxu0
    %5239 = vdwg.mxu0
    %v5240 = vsel %vm3928, %v5235, 0.0
    %5241 = vadd.xlane.f32.xlu0 %v5240
    %v5242 = vpop.xlane.xlu0 %5241
    %v5243 = vmul.f32 %v5242, %v5134
    %v5244 = vmul.f32 %v5235, %v5235
    %v5245 = vsel %vm3928, %v5244, 0.0
    %5246 = vadd.xlane.f32.xlu0 %v5245
    %v5247 = vpop.xlane.xlu0 %5246
    %v5248 = vmul.f32 %v5247, %v5134
    %v5249 = vmul.f32 %v5243, %v5243
    %v5250 = vsub.f32 %v5248, %v5249
    %v5251 = vmax.f32 %v5250, 0.0
    %v5252 = vsub.f32 %v5235, %v5243
    %v5253 = vadd.f32 %v5251, 1e-05
    %v5254 = vrsqrt.pop %v5253
    %v5255 = vmul.f32 %v5252, %v5254
    %v5256 = vld [vmem:[%s73] sm:$0x1]
    %v5258 = vlaneseq
    %v5259 = vshrl.u32 %v5258, 7
    %v5260 = vsub.s32 0, %v5259
    %v5261 = vrot.slane %v5256, %v5260
    %v5263 = vmul.f32 %v5255, %v5261
    %v5264 = vld [vmem:[%s75] sm:$0x1]
    %v5266 = vlaneseq
    %v5267 = vshrl.u32 %v5266, 7
    %v5268 = vsub.s32 0, %v5267
    %v5269 = vrot.slane %v5264, %v5268
    %v5271 = vadd.f32 %v5263, %v5269
    %v5272 = vmul.f32 %v5271, 0.5
    %v5273 = vmul.f32 %v5271, 0.044715
    %v5274 = vmul.f32 %v5273, %v5271
    %v5275 = vmul.f32 %v5274, %v5271
    %v5276 = vadd.f32 %v5271, %v5275
    %v5277 = vmul.f32 %v5276, 0.7978846
    %v5278 = vtanh.pop %v5277
    %v5279 = vadd.f32 %v5278, 1.0
    %v5280 = vmul.f32 %v5272, %v5279
    %v5281 = vpack.c.bf16 %v5280, %v5280
    %v5282 = vld [vmem:[%s77] sm:$0xf]
    %v5283 = vld [vmem:[%s77 + $0x4] sm:$0xf]
    %v5284 = vld [vmem:[%s77 + $0x8] sm:$0xf]
    %v5285 = vld [vmem:[%s77 + $0xc] sm:$0xf]
    %v5286 = vld [vmem:[%s79] sm:$0x1]
    %v5288 = vlaneseq
    %v5289 = vshrl.u32 %v5288, 7
    %v5290 = vsub.s32 0, %v5289
    %v5291 = vrot.slane %v5286, %v5290
    %v5297 = vunpack.c.l.b16 %v5282
    %v5298 = vunpack.c.l.b16 %v5283
    %v5299 = vunpack.c.l.b16 %v5284
    %v5300 = vunpack.c.l.b16 %v5285
    %v5301 = vpack.c.b16 %v5298, %v5297
    %v5302 = vpack.c.b16 %v5300, %v5299
    %v5306 = vsel %vm4120, %v5281, 0
    %5308 = vmatprep.subr.bf16.mxu0 0
    %5309 = vmatpush1.bf16.msra.mxu0 0
    %5310 = vmatprep.subr.bf16.mxu0 0
    %5311 = vmatpush1.bf16.msra.mxu0 0
    %5312 = vmatprep.subr.bf16.mxu0 0
    %5313 = vmatpush1.bf16.msra.mxu0 0
    %5314 = vmatprep.subr.bf16.mxu0 0
    %5315 = vmatpush1.bf16.msra.mxu0 0
    %5316 = vmatprep.subr.bf16.mxu0 0
    %5317 = vmatpush1.bf16.msra.mxu0 0
    %5318 = vmatprep.subr.bf16.mxu0 0
    %5319 = vmatpush1.bf16.msra.mxu0 0
    %5320 = vmatprep.subr.bf16.mxu0 0
    %5321 = vmatpush1.bf16.msra.mxu0 %v5302
    %5322 = vmatprep.subr.bf16.mxu0 0
    %5323 = vmatpush1.bf16.msra.mxu0 %v5301
    %5324 = vmatprep.subr.bf16.mxu0 0
    %5325 = vmatpush2.bf16.msra.mxu0 0
    %5326 = vmatprep.subr.bf16.mxu0 0
    %5327 = vmatpush2.bf16.msra.mxu0 0
    %5328 = vmatprep.subr.bf16.mxu0 0
    %5329 = vmatpush2.bf16.msra.mxu0 0
    %5330 = vmatprep.subr.bf16.mxu0 0
    %5331 = vmatpush2.bf16.msra.mxu0 0
    %5332 = vmatprep.subr.bf16.mxu0 0
    %5333 = vmatpush2.bf16.msra.mxu0 0
    %5334 = vmatprep.subr.bf16.mxu0 0
    %5335 = vmatpush2.bf16.msra.mxu0 0
    %5336 = vmatprep.subr.bf16.mxu0 0
    %5337 = vmatpush2.bf16.msra.mxu0 0
    %5338 = vmatprep.subr.bf16.mxu0 0
    %5339 = vmatpush2.bf16.msra.mxu0 0
    %5340 = vmatprep.mubr.bf16.mxu0 0
    %5341 = vmatmul.mubr.bf16.gmra.mxu0 %v5306
    %v5342 = vpop.f32.mrf.mxu0
    %v5343 = vadd.f32 %v5291, %v5342
    %v5344 = vpop.f32.mrf.mxu0
    %v5345 = vpop.f32.mrf.mxu0
    %v5346 = vpop.f32.mrf.mxu0
    %5347 = vdwg.mxu0
    %v5348 = vsel %vm3928, %v5343, 0.0
    %5349 = vadd.xlane.f32.xlu0 %v5348
    %v5350 = vpop.xlane.xlu0 %5349
    %v5351 = vmul.f32 %v5350, %v5134
    %v5352 = vmul.f32 %v5343, %v5343
    %v5353 = vsel %vm3928, %v5352, 0.0
    %5354 = vadd.xlane.f32.xlu0 %v5353
    %v5355 = vpop.xlane.xlu0 %5354
    %v5356 = vmul.f32 %v5355, %v5134
    %v5357 = vmul.f32 %v5351, %v5351
    %v5358 = vsub.f32 %v5356, %v5357
    %v5359 = vmax.f32 %v5358, 0.0
    %v5360 = vsub.f32 %v5343, %v5351
    %v5361 = vadd.f32 %v5359, 1e-05
    %v5362 = vrsqrt.pop %v5361
    %v5363 = vmul.f32 %v5360, %v5362
    %v5364 = vld [vmem:[%s81] sm:$0x1]
    %v5366 = vlaneseq
    %v5367 = vshrl.u32 %v5366, 7
    %v5368 = vsub.s32 0, %v5367
    %v5369 = vrot.slane %v5364, %v5368
    %v5371 = vmul.f32 %v5363, %v5369
    %v5372 = vld [vmem:[%s83] sm:$0x1]
    %v5374 = vlaneseq
    %v5375 = vshrl.u32 %v5374, 7
    %v5376 = vsub.s32 0, %v5375
    %v5377 = vrot.slane %v5372, %v5376
    %v5379 = vadd.f32 %v5371, %v5377
    %v5380 = vmul.f32 %v5379, 0.5
    %v5381 = vmul.f32 %v5379, 0.044715
    %v5382 = vmul.f32 %v5381, %v5379
    %v5383 = vmul.f32 %v5382, %v5379
    %v5384 = vadd.f32 %v5379, %v5383
    %v5385 = vmul.f32 %v5384, 0.7978846
    %v5386 = vtanh.pop %v5385
    %v5387 = vadd.f32 %v5386, 1.0
    %v5388 = vmul.f32 %v5380, %v5387
    %v5389 = vpack.c.bf16 %v5388, %v5388
    %v5390 = vld [vmem:[%s85] sm:$0xf]
    %v5391 = vld [vmem:[%s85 + $0x4] sm:$0xf]
    %v5392 = vld [vmem:[%s85 + $0x8] sm:$0xf]
    %v5393 = vld [vmem:[%s85 + $0xc] sm:$0xf]
    %v5394 = vld [vmem:[%s87] sm:$0x1]
    %v5396 = vlaneseq
    %v5397 = vshrl.u32 %v5396, 7
    %v5398 = vsub.s32 0, %v5397
    %v5399 = vrot.slane %v5394, %v5398
    %v5405 = vunpack.c.l.b16 %v5390
    %v5406 = vunpack.c.l.b16 %v5391
    %v5407 = vunpack.c.l.b16 %v5392
    %v5408 = vunpack.c.l.b16 %v5393
    %v5409 = vpack.c.b16 %v5406, %v5405
    %v5410 = vpack.c.b16 %v5408, %v5407
    %v5414 = vsel %vm4120, %v5389, 0
    %5416 = vmatprep.subr.bf16.mxu0 0
    %5417 = vmatpush1.bf16.msra.mxu0 0
    %5418 = vmatprep.subr.bf16.mxu0 0
    %5419 = vmatpush1.bf16.msra.mxu0 0
    %5420 = vmatprep.subr.bf16.mxu0 0
    %5421 = vmatpush1.bf16.msra.mxu0 0
    %5422 = vmatprep.subr.bf16.mxu0 0
    %5423 = vmatpush1.bf16.msra.mxu0 0
    %5424 = vmatprep.subr.bf16.mxu0 0
    %5425 = vmatpush1.bf16.msra.mxu0 0
    %5426 = vmatprep.subr.bf16.mxu0 0
    %5427 = vmatpush1.bf16.msra.mxu0 0
    %5428 = vmatprep.subr.bf16.mxu0 0
    %5429 = vmatpush1.bf16.msra.mxu0 %v5410
    %5430 = vmatprep.subr.bf16.mxu0 0
    %5431 = vmatpush1.bf16.msra.mxu0 %v5409
    %5432 = vmatprep.subr.bf16.mxu0 0
    %5433 = vmatpush2.bf16.msra.mxu0 0
    %5434 = vmatprep.subr.bf16.mxu0 0
    %5435 = vmatpush2.bf16.msra.mxu0 0
    %5436 = vmatprep.subr.bf16.mxu0 0
    %5437 = vmatpush2.bf16.msra.mxu0 0
    %5438 = vmatprep.subr.bf16.mxu0 0
    %5439 = vmatpush2.bf16.msra.mxu0 0
    %5440 = vmatprep.subr.bf16.mxu0 0
    %5441 = vmatpush2.bf16.msra.mxu0 0
    %5442 = vmatprep.subr.bf16.mxu0 0
    %5443 = vmatpush2.bf16.msra.mxu0 0
    %5444 = vmatprep.subr.bf16.mxu0 0
    %5445 = vmatpush2.bf16.msra.mxu0 0
    %5446 = vmatprep.subr.bf16.mxu0 0
    %5447 = vmatpush2.bf16.msra.mxu0 0
    %5448 = vmatprep.mubr.bf16.mxu0 0
    %5449 = vmatmul.mubr.bf16.gmra.mxu0 %v5414
    %v5450 = vpop.f32.mrf.mxu0
    %v5451 = vadd.f32 %v5399, %v5450
    %v5452 = vpop.f32.mrf.mxu0
    %v5453 = vpop.f32.mrf.mxu0
    %v5454 = vpop.f32.mrf.mxu0
    %5455 = vdwg.mxu0
    %5457 = vrot.lane.b32.xlu0 %v5451, 25
    %v5458 = vpop.permute.xlu0 %5457
    %5461 = vrot.lane.b32.xlu0 %v5071, 50
    %v5462 = vpop.permute.xlu0 %5461
    %v5464 = vsel %vm536, %v490, %v5458
    %v5465 = vsel %vm1674, %v5464, %v5462
    %vm5466 = vcmask 533504
    %5467 = vst.msk [vmem:[#allocation41] sm:$0x3] %vm5466, %v5465
    // Predicated region
    $region278: #{tpu_custom_call.1} parent=1 // pred_check
      _
    $region279: #{tpu_custom_call.1} parent=1 // pred_check_branch
      %5469 = sbr.rel (0) target = $region281
    $region280: #{tpu_custom_call.1} parent=1 // pred_region
      %s5471 = ssub.s32 32, 32
      %5472 = vsyncadd [#allocation4], %s5471
      %s5474 = sshll.u32 [#allocation41], 4
      %s5475 = int_to_ptr.vmem [resolvable:$true] %s5474
      %5477 = dma.vmem_to_hbm [thread:$0]  %s5475, 32, %s89, [#allocation4]
    $region281: #{tpu_custom_call.1} parent=1 // pred_fallthru
      _
    // Predicated region
    $region282: #{tpu_custom_call.1} parent=1 // pred_check
      _
    $region283: #{tpu_custom_call.1} parent=1 // pred_check_branch
      %5479 = sbr.rel (0) target = $region285
    $region284: #{tpu_custom_call.1} parent=1 // pred_region
      %5480 = dma.done [#allocation4], 32
    $region285: #{tpu_custom_call.1} parent=1 // pred_fallthru
      _
    %5481 = vsyncpa [#allocation3], 1
    %5482 = vsyncpa [#allocation6], 1
    %5483 = vsyncpa [#allocation9], 1
    %5484 = vsyncpa [#allocation12], 1
    %5485 = vsyncpa [#allocation15], 1
    %5486 = vsyncpa [#allocation18], 1
    %5487 = vsyncpa [#allocation21], 1
    %5488 = vsyncpa [#allocation24], 1
    %5489 = vsyncpa [#allocation27], 1
    %5490 = vsyncpa [#allocation30], 1
    %5491 = vsyncpa [#allocation33], 1
    %5492 = vsyncpa [#allocation36], 1
    %5493 = vsyncpa [#allocation39], 1
    %5494 = vsyncpa [#allocation4], 1

</llo_original>
